<compile_context>
chip_gen: v5e
topology: v5e:2x2
jax: 0.10.0
libtpu: 0.0.40
codegen_flags: <defaults>
</compile_context>

<pallas_src>
import jax
import jax.numpy as jnp
from jax.experimental import pallas as pl
from jax.experimental.pallas import tpu as pltpu

# ----------------------------- model config ---------------------------------
VOCAB_SIZE = 128      # stands in for bert vocab_size (word_simplification out dim)
HIDDEN = 32           # bert hidden_size
NUM_LAYERS = 2
NUM_HEADS = 4
HEAD_DIM = HIDDEN // NUM_HEADS
INTERMEDIATE = 64
MAX_POS = 16
TYPE_VOCAB = 2
NUM_LABELS = 3
LN_EPS = 1e-12

BATCH = 2
SEQ = 8
BS = BATCH * SEQ

# Packed-slab lane offsets (all sub-blocks start on a 128-lane boundary).
_QKV_OFF, _WO_OFF, _W1_OFF = 0, 128, 256        # inside layer_w  (L, H, 384)
_WS_OFF, _POOL_OFF, _CLS_OFF = 0, 128, 256      # inside head_w   (H, 384)


# ------------------------------ kernel helpers -------------------------------
def _layernorm(x, gamma, beta):
    mean = jnp.mean(x, axis=-1, keepdims=True)
    xc = x - mean
    var = jnp.mean(xc * xc, axis=-1, keepdims=True)
    return xc * jax.lax.rsqrt(var + LN_EPS) * gamma + beta


def _gelu_tanh(y):
    # TODO(synk): exact erf GELU not used; tanh approximation (small drift vs HF).
    return 0.5 * y * (1.0 + jnp.tanh(0.7978845608028654 * (y + 0.044715 * y * y * y)))


def _bf16(v):
    return v.astype(jnp.bfloat16)


# ------------------------------ fused kernel ---------------------------------
def _fused_forward_kernel(emb_ref, mask_ref, lw_ref, lw2_ref, lb_ref,
                          hw_ref, hb_ref, word_out_ref, head_out_ref, ctx_ref):
    H, D, I = HIDDEN, HEAD_DIM, INTERMEDIATE

    # Embedding LayerNorm over the flattened (B*S, H) slab (dropout = identity).
    x = _layernorm(emb_ref[...], hb_ref[1:2, 0:H], hb_ref[2:3, 0:H])     # (BS, H) f32

    for l in range(NUM_LAYERS):
        # ---- fused QKV projection: one (BS,H)@(H,3H) bf16 MXU matmul.
        #      1/sqrt(head_dim) is pre-folded into the Q slice of the slab.
        qkv = jnp.dot(_bf16(x), lw_ref[l, :, _QKV_OFF:_QKV_OFF + 3 * H],
                      preferred_element_type=jnp.float32) + lb_ref[l, 0:1, 0:3 * H]

        # ---- per-(batch, head) attention on tiny (S,S) blocks, f32.
        for b in range(BATCH):
            bias = mask_ref[b:b + 1, :]                                  # (1, S)
            r0 = b * SEQ
            for h in range(NUM_HEADS):
                c0 = h * D
                q = qkv[r0:r0 + SEQ, c0:c0 + D]                          # (S, D)
                k = qkv[r0:r0 + SEQ, H + c0:H + c0 + D]                  # (S, D)
                v = qkv[r0:r0 + SEQ, 2 * H + c0:2 * H + c0 + D]          # (S, D)
                # contract on both dim-1 -> q @ k^T without an explicit transpose op
                s = jax.lax.dot_general(q, k, (((1,), (1,)), ((), ())),
                                        preferred_element_type=jnp.float32) + bias
                m = jnp.max(s, axis=-1, keepdims=True)
                p = jnp.exp(s - m)
                p = p / jnp.sum(p, axis=-1, keepdims=True)               # exact divide
                ctx_ref[r0:r0 + SEQ, c0:c0 + D] = jnp.dot(
                    p, v, preferred_element_type=jnp.float32)

        # ---- merged output projection: single (BS,H)@(H,H) matmul + residual + LN.
        attn = jnp.dot(_bf16(ctx_ref[...]), lw_ref[l, :, _WO_OFF:_WO_OFF + H],
                       preferred_element_type=jnp.float32) + lb_ref[l, 1:2, 0:H]
        x = _layernorm(attn + x, lb_ref[l, 4:5, 0:H], lb_ref[l, 5:6, 0:H])

        # ---- feed-forward (GELU) + residual + LN.
        inter = _gelu_tanh(
            jnp.dot(_bf16(x), lw_ref[l, :, _W1_OFF:_W1_OFF + I],
                    preferred_element_type=jnp.float32) + lb_ref[l, 2:3, 0:I])
        ffn = jnp.dot(_bf16(inter), lw2_ref[l],
                      preferred_element_type=jnp.float32) + lb_ref[l, 3:4, 0:H]
        x = _layernorm(ffn + x, lb_ref[l, 6:7, 0:H], lb_ref[l, 7:8, 0:H])

    # ---- word simplification head on every token: (BS,H)@(H,VOCAB), lane-dense.
    word_out_ref[...] = (
        jnp.dot(_bf16(x), hw_ref[:, _WS_OFF:_WS_OFF + VOCAB_SIZE],
                preferred_element_type=jnp.float32) + hb_ref[0:1, 0:VOCAB_SIZE])

    # ---- pooler (tanh over each example's [CLS]) + fused sentence/adaptation heads.
    cls = jnp.concatenate([x[b * SEQ:b * SEQ + 1, :] for b in range(BATCH)], axis=0)
    pooled = jnp.tanh(
        jnp.dot(_bf16(cls), hw_ref[:, _POOL_OFF:_POOL_OFF + H],
                preferred_element_type=jnp.float32) + hb_ref[3:4, 0:H])
    # 128-wide lane-dense store; only the first NUM_LABELS+1 columns are real.
    head_out_ref[...] = (
        jnp.dot(_bf16(pooled), hw_ref[:, _CLS_OFF:_CLS_OFF + 128],
                preferred_element_type=jnp.float32) + hb_ref[4:5, :])


# --------------------------- parameter construction --------------------------
def init_params(key):
    """Conventional (BERT-like) parameter shapes, fp32."""
    def nrm(k, shape):
        return jax.random.normal(k, shape, dtype=jnp.float32) * 0.02

    keys = iter(jax.random.split(key, 24))
    L, H, I = NUM_LAYERS, HIDDEN, INTERMEDIATE
    return {
        "word_emb": nrm(next(keys), (VOCAB_SIZE, H)),
        "pos_emb": nrm(next(keys), (MAX_POS, H)),
        "type_emb": nrm(next(keys), (TYPE_VOCAB, H)),
        "emb_ln_g": jnp.ones((H,), jnp.float32),
        "emb_ln_b": jnp.zeros((H,), jnp.float32),
        "wq": nrm(next(keys), (L, H, H)), "bq": jnp.zeros((L, H), jnp.float32),
        "wk": nrm(next(keys), (L, H, H)), "bk": jnp.zeros((L, H), jnp.float32),
        "wv": nrm(next(keys), (L, H, H)), "bv": jnp.zeros((L, H), jnp.float32),
        "wo": nrm(next(keys), (L, H, H)), "bo": jnp.zeros((L, H), jnp.float32),
        "ln1_g": jnp.ones((L, H), jnp.float32), "ln1_b": jnp.zeros((L, H), jnp.float32),
        "w1": nrm(next(keys), (L, H, I)), "b1": jnp.zeros((L, I), jnp.float32),
        "w2": nrm(next(keys), (L, I, H)), "b2": jnp.zeros((L, H), jnp.float32),
        "ln2_g": jnp.ones((L, H), jnp.float32), "ln2_b": jnp.zeros((L, H), jnp.float32),
        "pooler_w": nrm(next(keys), (H, H)), "pooler_b": jnp.zeros((H,), jnp.float32),
        "ws_w": nrm(next(keys), (H, VOCAB_SIZE)),
        "ws_b": jnp.zeros((VOCAB_SIZE,), jnp.float32),
        "sent_w": nrm(next(keys), (H, NUM_LABELS)),
        "sent_b": jnp.zeros((NUM_LABELS,), jnp.float32),
        "adapt_w": nrm(next(keys), (H, 1)),
        "adapt_b": jnp.zeros((1,), jnp.float32),
    }


def pack_params(p):
    """Pack conventional params into 5 lane-aligned slabs (weights as bf16)."""
    L, H, I = NUM_LAYERS, HIDDEN, INTERMEDIATE
    scale = 1.0 / (HEAD_DIM ** 0.5)

    # NOTE: 1/sqrt(head_dim) is folded into BOTH Wq and bq.  When porting real
    # pretrained BERT weights, the pretrained query bias must be scaled too.
    wqkv = jnp.concatenate([p["wq"] * scale, p["wk"], p["wv"]], axis=-1)   # (L,H,3H)
    bqkv = jnp.concatenate([p["bq"] * scale, p["bk"], p["bv"]], axis=-1)   # (L,3H)

    layer_w = jnp.zeros((L, H, 384), jnp.float32)
    layer_w = layer_w.at[:, :, _QKV_OFF:_QKV_OFF + 3 * H].set(wqkv)
    layer_w = layer_w.at[:, :, _WO_OFF:_WO_OFF + H].set(p["wo"])
    layer_w = layer_w.at[:, :, _W1_OFF:_W1_OFF + I].set(p["w1"])

    layer_b = jnp.zeros((L, 8, 128), jnp.float32)
    layer_b = layer_b.at[:, 0, 0:3 * H].set(bqkv)
    layer_b = layer_b.at[:, 1, 0:H].set(p["bo"])
    layer_b = layer_b.at[:, 2, 0:I].set(p["b1"])
    layer_b = layer_b.at[:, 3, 0:H].set(p["b2"])
    layer_b = layer_b.at[:, 4, 0:H].set(p["ln1_g"])
    layer_b = layer_b.at[:, 5, 0:H].set(p["ln1_b"])
    layer_b = layer_b.at[:, 6, 0:H].set(p["ln2_g"])
    layer_b = layer_b.at[:, 7, 0:H].set(p["ln2_b"])

    head_w = jnp.zeros((H, 384), jnp.float32)
    head_w = head_w.at[:, _WS_OFF:_WS_OFF + VOCAB_SIZE].set(p["ws_w"])
    head_w = head_w.at[:, _POOL_OFF:_POOL_OFF + H].set(p["pooler_w"])
    head_w = head_w.at[:, _CLS_OFF:_CLS_OFF + NUM_LABELS].set(p["sent_w"])
    head_w = head_w.at[:, _CLS_OFF + NUM_LABELS:_CLS_OFF + NUM_LABELS + 1].set(p["adapt_w"])

    head_b = jnp.zeros((8, 128), jnp.float32)
    head_b = head_b.at[0, 0:VOCAB_SIZE].set(p["ws_b"])
    head_b = head_b.at[1, 0:H].set(p["emb_ln_g"])
    head_b = head_b.at[2, 0:H].set(p["emb_ln_b"])
    head_b = head_b.at[3, 0:H].set(p["pooler_b"])
    head_b = head_b.at[4, 0:NUM_LABELS].set(p["sent_b"])
    head_b = head_b.at[4, NUM_LABELS:NUM_LABELS + 1].set(p["adapt_b"])

    return {
        "word_emb": p["word_emb"], "pos_emb": p["pos_emb"], "type_emb": p["type_emb"],
        "layer_w": layer_w.astype(jnp.bfloat16),
        "layer_w2": p["w2"].astype(jnp.bfloat16),           # (L, I, H)
        "layer_b": layer_b,                                  # f32 bias/LN slab
        "head_w": head_w.astype(jnp.bfloat16),
        "head_b": head_b,                                    # f32 bias/LN slab
    }


# ------------------------------ forward pass ---------------------------------
def dyslexia_text_adapter_forward(packed, input_ids, attention_mask=None,
                                  token_type_ids=None):
    b, s = input_ids.shape
    assert (b, s) == (BATCH, SEQ), "kernel is shape-specialized to (BATCH, SEQ)"
    if attention_mask is None:
        attention_mask = jnp.ones((b, s), jnp.int32)
    if token_type_ids is None:
        token_type_ids = jnp.zeros((b, s), jnp.int32)

    # Embedding lookups (gathers) stay in XLA; everything else is one fused kernel.
    pos_ids = jnp.arange(s)
    emb = (packed["word_emb"][input_ids]
           + packed["pos_emb"][pos_ids][None, :, :]
           + packed["type_emb"][token_type_ids]).astype(jnp.float32)       # (B,S,H)
    emb2d = emb.reshape(b * s, HIDDEN)
    mask_bias = (1.0 - attention_mask.astype(jnp.float32)) * -10000.0      # (B, S)

    word_flat, head_out = pl.pallas_call(
        _fused_forward_kernel,
        out_shape=(jax.ShapeDtypeStruct((b * s, VOCAB_SIZE), jnp.float32),
                   jax.ShapeDtypeStruct((b, 128), jnp.float32)),
        scratch_shapes=[pltpu.VMEM((b * s, HIDDEN), jnp.float32)],
    )(emb2d, mask_bias,
      packed["layer_w"], packed["layer_w2"], packed["layer_b"],
      packed["head_w"], packed["head_b"])

    # dropout(p=0.1) is identity in eval mode.
    return {
        "word_logits": word_flat.reshape(b, s, VOCAB_SIZE),   # (B, S, VOCAB)
        "sentence_logits": head_out[:, :NUM_LABELS],          # (B, NUM_LABELS)
        "adaptation_score": head_out[:, NUM_LABELS],          # (B,)
    }


# ----------------------------------- main ------------------------------------
if __name__ == "__main__":
    key = jax.random.PRNGKey(0)
    k_params, k_ids = jax.random.split(key)

    params = init_params(k_params)
    packed = pack_params(params)

    input_ids = jax.random.randint(k_ids, (BATCH, SEQ), 0, VOCAB_SIZE, dtype=jnp.int32)
    attention_mask = jnp.ones((BATCH, SEQ), jnp.int32)
    token_type_ids = jnp.zeros((BATCH, SEQ), jnp.int32)

    fwd = jax.jit(dyslexia_text_adapter_forward)
    out = fwd(packed, input_ids, attention_mask, token_type_ids)
    out = jax.block_until_ready(out)

    assert out["word_logits"].shape == (BATCH, SEQ, VOCAB_SIZE)
    assert out["sentence_logits"].shape == (BATCH, NUM_LABELS)
    assert out["adaptation_score"].shape == (BATCH,)
    assert all(bool(jnp.all(jnp.isfinite(v))) for v in out.values())

    print("KERNEL_OK")
</pallas_src>

<mosaic_0001>
module attributes {stable_mosaic.version = 11 : i64} {
  func.func @_fused_forward_kernel(%arg0: memref<16x32xf32, #tpu.memory_space<vmem>>, %arg1: memref<2x8xf32, #tpu.memory_space<vmem>>, %arg2: memref<2x32x384xbf16, #tpu.memory_space<vmem>>, %arg3: memref<2x64x32xbf16, #tpu.memory_space<vmem>>, %arg4: memref<2x8x128xf32, #tpu.memory_space<vmem>>, %arg5: memref<32x384xbf16, #tpu.memory_space<vmem>>, %arg6: memref<8x128xf32, #tpu.memory_space<vmem>>, %arg7: memref<16x128xf32, #tpu.memory_space<vmem>>, %arg8: memref<2x128xf32, #tpu.memory_space<vmem>>, %arg9: memref<16x32xf32, #tpu.memory_space<vmem>>) attributes {dimension_semantics = [], scalar_prefetch = 0 : i64, scratch_operands = 1 : i64, tpu.core_type = #tpu.core_type<tc>} {
    %c0 = arith.constant 0 : index
    %c0_0 = arith.constant 0 : index
    %0 = vector.load %arg0[%c0, %c0_0] : memref<16x32xf32, #tpu.memory_space<vmem>>, vector<16x32xf32>
    %c1 = arith.constant 1 : index
    %c0_1 = arith.constant 0 : index
    %1 = vector.load %arg6[%c1, %c0_1] : memref<8x128xf32, #tpu.memory_space<vmem>>, vector<1x32xf32>
    %c2 = arith.constant 2 : index
    %c0_2 = arith.constant 0 : index
    %2 = vector.load %arg6[%c2, %c0_2] : memref<8x128xf32, #tpu.memory_space<vmem>>, vector<1x32xf32>
    %cst = arith.constant dense<0.000000e+00> : vector<16xf32>
    %3 = vector.multi_reduction <add>, %0, %cst [1] : vector<16x32xf32> to vector<16xf32>
    %4 = vector.shape_cast %3 : vector<16xf32> to vector<16x1xf32>
    %cst_3 = arith.constant 3.200000e+01 : f32
    %5 = vector.broadcast %cst_3 : f32 to vector<16x1xf32>
    %6 = arith.divf %4, %5 : vector<16x1xf32>
    %7 = vector.broadcast %6 : vector<16x1xf32> to vector<16x32xf32>
    %8 = arith.subf %0, %7 : vector<16x32xf32>
    %9 = arith.mulf %8, %8 : vector<16x32xf32>
    %cst_4 = arith.constant dense<0.000000e+00> : vector<16xf32>
    %10 = vector.multi_reduction <add>, %9, %cst_4 [1] : vector<16x32xf32> to vector<16xf32>
    %11 = vector.shape_cast %10 : vector<16xf32> to vector<16x1xf32>
    %cst_5 = arith.constant 3.200000e+01 : f32
    %12 = vector.broadcast %cst_5 : f32 to vector<16x1xf32>
    %13 = arith.divf %11, %12 : vector<16x1xf32>
    %cst_6 = arith.constant 9.99999996E-13 : f32
    %14 = vector.broadcast %cst_6 : f32 to vector<16x1xf32>
    %15 = arith.addf %13, %14 : vector<16x1xf32>
    %16 = math.rsqrt %15 : vector<16x1xf32>
    %17 = vector.broadcast %16 : vector<16x1xf32> to vector<16x32xf32>
    %18 = arith.mulf %8, %17 : vector<16x32xf32>
    %19 = vector.broadcast %1 : vector<1x32xf32> to vector<16x32xf32>
    %20 = arith.mulf %18, %19 : vector<16x32xf32>
    %21 = vector.broadcast %2 : vector<1x32xf32> to vector<16x32xf32>
    %22 = arith.addf %20, %21 : vector<16x32xf32>
    %23 = arith.truncf %22 : vector<16x32xf32> to vector<16x32xbf16>
    %c0_7 = arith.constant 0 : index
    %c0_8 = arith.constant 0 : index
    %c0_9 = arith.constant 0 : index
    %24 = vector.load %arg2[%c0_7, %c0_8, %c0_9] : memref<2x32x384xbf16, #tpu.memory_space<vmem>>, vector<1x32x96xbf16>
    %25 = vector.shape_cast %24 : vector<1x32x96xbf16> to vector<32x96xbf16>
    %cst_10 = arith.constant dense<0.000000e+00> : vector<16x96xf32>
    %26 = tpu.matmul %23, %25, %cst_10 {dimension_numbers = #tpu.dot_dimension_numbers<[1], [0], [0], [1], [0, 0, 1, 1], [], []>} : vector<16x32xbf16>, vector<32x96xbf16>, vector<16x96xf32> -> vector<16x96xf32>
    %c0_11 = arith.constant 0 : index
    %c0_12 = arith.constant 0 : index
    %c0_13 = arith.constant 0 : index
    %27 = vector.load %arg4[%c0_11, %c0_12, %c0_13] : memref<2x8x128xf32, #tpu.memory_space<vmem>>, vector<1x1x96xf32>
    %28 = vector.shape_cast %27 : vector<1x1x96xf32> to vector<1x96xf32>
    %29 = vector.broadcast %28 : vector<1x96xf32> to vector<16x96xf32>
    %30 = arith.addf %26, %29 : vector<16x96xf32>
    %c0_14 = arith.constant 0 : index
    %c0_15 = arith.constant 0 : index
    %31 = vector.load %arg1[%c0_14, %c0_15] : memref<2x8xf32, #tpu.memory_space<vmem>>, vector<1x8xf32>
    %32 = vector.extract_strided_slice %30 {offsets = [0, 0], sizes = [8, 8], strides = [1, 1]} : vector<16x96xf32> to vector<8x8xf32>
    %33 = vector.extract_strided_slice %30 {offsets = [0, 32], sizes = [8, 8], strides = [1, 1]} : vector<16x96xf32> to vector<8x8xf32>
    %34 = vector.extract_strided_slice %30 {offsets = [0, 64], sizes = [8, 8], strides = [1, 1]} : vector<16x96xf32> to vector<8x8xf32>
    %cst_16 = arith.constant dense<0.000000e+00> : vector<8x8xf32>
    %35 = tpu.matmul %32, %33, %cst_16 {dimension_numbers = #tpu.dot_dimension_numbers<[1], [1], [0], [0], [0, 0, 1, 0], [], []>} : vector<8x8xf32>, vector<8x8xf32>, vector<8x8xf32> -> vector<8x8xf32>
    %36 = vector.broadcast %31 : vector<1x8xf32> to vector<8x8xf32>
    %37 = arith.addf %35, %36 : vector<8x8xf32>
    %cst_17 = arith.constant dense<0xFF800000> : vector<8xf32>
    %38 = vector.multi_reduction <maximumf>, %37, %cst_17 [1] : vector<8x8xf32> to vector<8xf32>
    %39 = vector.shape_cast %38 : vector<8xf32> to vector<8x1xf32>
    %40 = vector.broadcast %39 : vector<8x1xf32> to vector<8x8xf32>
    %41 = arith.subf %37, %40 : vector<8x8xf32>
    %42 = math.exp %41 : vector<8x8xf32>
    %cst_18 = arith.constant dense<0.000000e+00> : vector<8xf32>
    %43 = vector.multi_reduction <add>, %42, %cst_18 [1] : vector<8x8xf32> to vector<8xf32>
    %44 = vector.shape_cast %43 : vector<8xf32> to vector<8x1xf32>
    %45 = vector.broadcast %44 : vector<8x1xf32> to vector<8x8xf32>
    %46 = arith.divf %42, %45 : vector<8x8xf32>
    %cst_19 = arith.constant dense<0.000000e+00> : vector<8x8xf32>
    %47 = tpu.matmul %46, %34, %cst_19 {dimension_numbers = #tpu.dot_dimension_numbers<[1], [0], [0], [1], [0, 0, 1, 1], [], []>} : vector<8x8xf32>, vector<8x8xf32>, vector<8x8xf32> -> vector<8x8xf32>
    %c0_20 = arith.constant 0 : index
    %c0_21 = arith.constant 0 : index
    %48 = vector.load %arg9[%c0_20, %c0_21] : memref<16x32xf32, #tpu.memory_space<vmem>>, vector<8x8xf32>
    tpu.vector_store %arg9[%c0_20, %c0_21], %47 {strides = array<i32>} : memref<16x32xf32, #tpu.memory_space<vmem>>, vector<8x8xf32>,
    %49 = vector.extract_strided_slice %30 {offsets = [0, 8], sizes = [8, 8], strides = [1, 1]} : vector<16x96xf32> to vector<8x8xf32>
    %50 = vector.extract_strided_slice %30 {offsets = [0, 40], sizes = [8, 8], strides = [1, 1]} : vector<16x96xf32> to vector<8x8xf32>
    %51 = vector.extract_strided_slice %30 {offsets = [0, 72], sizes = [8, 8], strides = [1, 1]} : vector<16x96xf32> to vector<8x8xf32>
    %cst_22 = arith.constant dense<0.000000e+00> : vector<8x8xf32>
    %52 = tpu.matmul %49, %50, %cst_22 {dimension_numbers = #tpu.dot_dimension_numbers<[1], [1], [0], [0], [0, 0, 1, 0], [], []>} : vector<8x8xf32>, vector<8x8xf32>, vector<8x8xf32> -> vector<8x8xf32>
    %53 = vector.broadcast %31 : vector<1x8xf32> to vector<8x8xf32>
    %54 = arith.addf %52, %53 : vector<8x8xf32>
    %cst_23 = arith.constant dense<0xFF800000> : vector<8xf32>
    %55 = vector.multi_reduction <maximumf>, %54, %cst_23 [1] : vector<8x8xf32> to vector<8xf32>
    %56 = vector.shape_cast %55 : vector<8xf32> to vector<8x1xf32>
    %57 = vector.broadcast %56 : vector<8x1xf32> to vector<8x8xf32>
    %58 = arith.subf %54, %57 : vector<8x8xf32>
    %59 = math.exp %58 : vector<8x8xf32>
    %cst_24 = arith.constant dense<0.000000e+00> : vector<8xf32>
    %60 = vector.multi_reduction <add>, %59, %cst_24 [1] : vector<8x8xf32> to vector<8xf32>
    %61 = vector.shape_cast %60 : vector<8xf32> to vector<8x1xf32>
    %62 = vector.broadcast %61 : vector<8x1xf32> to vector<8x8xf32>
    %63 = arith.divf %59, %62 : vector<8x8xf32>
    %cst_25 = arith.constant dense<0.000000e+00> : vector<8x8xf32>
    %64 = tpu.matmul %63, %51, %cst_25 {dimension_numbers = #tpu.dot_dimension_numbers<[1], [0], [0], [1], [0, 0, 1, 1], [], []>} : vector<8x8xf32>, vector<8x8xf32>, vector<8x8xf32> -> vector<8x8xf32>
    %c0_26 = arith.constant 0 : index
    %c8 = arith.constant 8 : index
    %65 = vector.load %arg9[%c0_26, %c8] : memref<16x32xf32, #tpu.memory_space<vmem>>, vector<8x8xf32>
    tpu.vector_store %arg9[%c0_26, %c8], %64 {strides = array<i32>} : memref<16x32xf32, #tpu.memory_space<vmem>>, vector<8x8xf32>,
    %66 = vector.extract_strided_slice %30 {offsets = [0, 16], sizes = [8, 8], strides = [1, 1]} : vector<16x96xf32> to vector<8x8xf32>
    %67 = vector.extract_strided_slice %30 {offsets = [0, 48], sizes = [8, 8], strides = [1, 1]} : vector<16x96xf32> to vector<8x8xf32>
    %68 = vector.extract_strided_slice %30 {offsets = [0, 80], sizes = [8, 8], strides = [1, 1]} : vector<16x96xf32> to vector<8x8xf32>
    %cst_27 = arith.constant dense<0.000000e+00> : vector<8x8xf32>
    %69 = tpu.matmul %66, %67, %cst_27 {dimension_numbers = #tpu.dot_dimension_numbers<[1], [1], [0], [0], [0, 0, 1, 0], [], []>} : vector<8x8xf32>, vector<8x8xf32>, vector<8x8xf32> -> vector<8x8xf32>
    %70 = vector.broadcast %31 : vector<1x8xf32> to vector<8x8xf32>
    %71 = arith.addf %69, %70 : vector<8x8xf32>
    %cst_28 = arith.constant dense<0xFF800000> : vector<8xf32>
    %72 = vector.multi_reduction <maximumf>, %71, %cst_28 [1] : vector<8x8xf32> to vector<8xf32>
    %73 = vector.shape_cast %72 : vector<8xf32> to vector<8x1xf32>
    %74 = vector.broadcast %73 : vector<8x1xf32> to vector<8x8xf32>
    %75 = arith.subf %71, %74 : vector<8x8xf32>
    %76 = math.exp %75 : vector<8x8xf32>
    %cst_29 = arith.constant dense<0.000000e+00> : vector<8xf32>
    %77 = vector.multi_reduction <add>, %76, %cst_29 [1] : vector<8x8xf32> to vector<8xf32>
    %78 = vector.shape_cast %77 : vector<8xf32> to vector<8x1xf32>
    %79 = vector.broadcast %78 : vector<8x1xf32> to vector<8x8xf32>
    %80 = arith.divf %76, %79 : vector<8x8xf32>
    %cst_30 = arith.constant dense<0.000000e+00> : vector<8x8xf32>
    %81 = tpu.matmul %80, %68, %cst_30 {dimension_numbers = #tpu.dot_dimension_numbers<[1], [0], [0], [1], [0, 0, 1, 1], [], []>} : vector<8x8xf32>, vector<8x8xf32>, vector<8x8xf32> -> vector<8x8xf32>
    %c0_31 = arith.constant 0 : index
    %c16 = arith.constant 16 : index
    %82 = vector.load %arg9[%c0_31, %c16] : memref<16x32xf32, #tpu.memory_space<vmem>>, vector<8x8xf32>
    tpu.vector_store %arg9[%c0_31, %c16], %81 {strides = array<i32>} : memref<16x32xf32, #tpu.memory_space<vmem>>, vector<8x8xf32>,
    %83 = vector.extract_strided_slice %30 {offsets = [0, 24], sizes = [8, 8], strides = [1, 1]} : vector<16x96xf32> to vector<8x8xf32>
    %84 = vector.extract_strided_slice %30 {offsets = [0, 56], sizes = [8, 8], strides = [1, 1]} : vector<16x96xf32> to vector<8x8xf32>
    %85 = vector.extract_strided_slice %30 {offsets = [0, 88], sizes = [8, 8], strides = [1, 1]} : vector<16x96xf32> to vector<8x8xf32>
    %cst_32 = arith.constant dense<0.000000e+00> : vector<8x8xf32>
    %86 = tpu.matmul %83, %84, %cst_32 {dimension_numbers = #tpu.dot_dimension_numbers<[1], [1], [0], [0], [0, 0, 1, 0], [], []>} : vector<8x8xf32>, vector<8x8xf32>, vector<8x8xf32> -> vector<8x8xf32>
    %87 = vector.broadcast %31 : vector<1x8xf32> to vector<8x8xf32>
    %88 = arith.addf %86, %87 : vector<8x8xf32>
    %cst_33 = arith.constant dense<0xFF800000> : vector<8xf32>
    %89 = vector.multi_reduction <maximumf>, %88, %cst_33 [1] : vector<8x8xf32> to vector<8xf32>
    %90 = vector.shape_cast %89 : vector<8xf32> to vector<8x1xf32>
    %91 = vector.broadcast %90 : vector<8x1xf32> to vector<8x8xf32>
    %92 = arith.subf %88, %91 : vector<8x8xf32>
    %93 = math.exp %92 : vector<8x8xf32>
    %cst_34 = arith.constant dense<0.000000e+00> : vector<8xf32>
    %94 = vector.multi_reduction <add>, %93, %cst_34 [1] : vector<8x8xf32> to vector<8xf32>
    %95 = vector.shape_cast %94 : vector<8xf32> to vector<8x1xf32>
    %96 = vector.broadcast %95 : vector<8x1xf32> to vector<8x8xf32>
    %97 = arith.divf %93, %96 : vector<8x8xf32>
    %cst_35 = arith.constant dense<0.000000e+00> : vector<8x8xf32>
    %98 = tpu.matmul %97, %85, %cst_35 {dimension_numbers = #tpu.dot_dimension_numbers<[1], [0], [0], [1], [0, 0, 1, 1], [], []>} : vector<8x8xf32>, vector<8x8xf32>, vector<8x8xf32> -> vector<8x8xf32>
    %c0_36 = arith.constant 0 : index
    %c24 = arith.constant 24 : index
    %99 = vector.load %arg9[%c0_36, %c24] : memref<16x32xf32, #tpu.memory_space<vmem>>, vector<8x8xf32>
    tpu.vector_store %arg9[%c0_36, %c24], %98 {strides = array<i32>} : memref<16x32xf32, #tpu.memory_space<vmem>>, vector<8x8xf32>,
    %c1_37 = arith.constant 1 : index
    %c0_38 = arith.constant 0 : index
    %100 = vector.load %arg1[%c1_37, %c0_38] : memref<2x8xf32, #tpu.memory_space<vmem>>, vector<1x8xf32>
    %101 = vector.extract_strided_slice %30 {offsets = [8, 0], sizes = [8, 8], strides = [1, 1]} : vector<16x96xf32> to vector<8x8xf32>
    %102 = vector.extract_strided_slice %30 {offsets = [8, 32], sizes = [8, 8], strides = [1, 1]} : vector<16x96xf32> to vector<8x8xf32>
    %103 = vector.extract_strided_slice %30 {offsets = [8, 64], sizes = [8, 8], strides = [1, 1]} : vector<16x96xf32> to vector<8x8xf32>
    %cst_39 = arith.constant dense<0.000000e+00> : vector<8x8xf32>
    %104 = tpu.matmul %101, %102, %cst_39 {dimension_numbers = #tpu.dot_dimension_numbers<[1], [1], [0], [0], [0, 0, 1, 0], [], []>} : vector<8x8xf32>, vector<8x8xf32>, vector<8x8xf32> -> vector<8x8xf32>
    %105 = vector.broadcast %100 : vector<1x8xf32> to vector<8x8xf32>
    %106 = arith.addf %104, %105 : vector<8x8xf32>
    %cst_40 = arith.constant dense<0xFF800000> : vector<8xf32>
    %107 = vector.multi_reduction <maximumf>, %106, %cst_40 [1] : vector<8x8xf32> to vector<8xf32>
    %108 = vector.shape_cast %107 : vector<8xf32> to vector<8x1xf32>
    %109 = vector.broadcast %108 : vector<8x1xf32> to vector<8x8xf32>
    %110 = arith.subf %106, %109 : vector<8x8xf32>
    %111 = math.exp %110 : vector<8x8xf32>
    %cst_41 = arith.constant dense<0.000000e+00> : vector<8xf32>
    %112 = vector.multi_reduction <add>, %111, %cst_41 [1] : vector<8x8xf32> to vector<8xf32>
    %113 = vector.shape_cast %112 : vector<8xf32> to vector<8x1xf32>
    %114 = vector.broadcast %113 : vector<8x1xf32> to vector<8x8xf32>
    %115 = arith.divf %111, %114 : vector<8x8xf32>
    %cst_42 = arith.constant dense<0.000000e+00> : vector<8x8xf32>
    %116 = tpu.matmul %115, %103, %cst_42 {dimension_numbers = #tpu.dot_dimension_numbers<[1], [0], [0], [1], [0, 0, 1, 1], [], []>} : vector<8x8xf32>, vector<8x8xf32>, vector<8x8xf32> -> vector<8x8xf32>
    %c8_43 = arith.constant 8 : index
    %c0_44 = arith.constant 0 : index
    %117 = vector.load %arg9[%c8_43, %c0_44] : memref<16x32xf32, #tpu.memory_space<vmem>>, vector<8x8xf32>
    tpu.vector_store %arg9[%c8_43, %c0_44], %116 {strides = array<i32>} : memref<16x32xf32, #tpu.memory_space<vmem>>, vector<8x8xf32>,
    %118 = vector.extract_strided_slice %30 {offsets = [8, 8], sizes = [8, 8], strides = [1, 1]} : vector<16x96xf32> to vector<8x8xf32>
    %119 = vector.extract_strided_slice %30 {offsets = [8, 40], sizes = [8, 8], strides = [1, 1]} : vector<16x96xf32> to vector<8x8xf32>
    %120 = vector.extract_strided_slice %30 {offsets = [8, 72], sizes = [8, 8], strides = [1, 1]} : vector<16x96xf32> to vector<8x8xf32>
    %cst_45 = arith.constant dense<0.000000e+00> : vector<8x8xf32>
    %121 = tpu.matmul %118, %119, %cst_45 {dimension_numbers = #tpu.dot_dimension_numbers<[1], [1], [0], [0], [0, 0, 1, 0], [], []>} : vector<8x8xf32>, vector<8x8xf32>, vector<8x8xf32> -> vector<8x8xf32>
    %122 = vector.broadcast %100 : vector<1x8xf32> to vector<8x8xf32>
    %123 = arith.addf %121, %122 : vector<8x8xf32>
    %cst_46 = arith.constant dense<0xFF800000> : vector<8xf32>
    %124 = vector.multi_reduction <maximumf>, %123, %cst_46 [1] : vector<8x8xf32> to vector<8xf32>
    %125 = vector.shape_cast %124 : vector<8xf32> to vector<8x1xf32>
    %126 = vector.broadcast %125 : vector<8x1xf32> to vector<8x8xf32>
    %127 = arith.subf %123, %126 : vector<8x8xf32>
    %128 = math.exp %127 : vector<8x8xf32>
    %cst_47 = arith.constant dense<0.000000e+00> : vector<8xf32>
    %129 = vector.multi_reduction <add>, %128, %cst_47 [1] : vector<8x8xf32> to vector<8xf32>
    %130 = vector.shape_cast %129 : vector<8xf32> to vector<8x1xf32>
    %131 = vector.broadcast %130 : vector<8x1xf32> to vector<8x8xf32>
    %132 = arith.divf %128, %131 : vector<8x8xf32>
    %cst_48 = arith.constant dense<0.000000e+00> : vector<8x8xf32>
    %133 = tpu.matmul %132, %120, %cst_48 {dimension_numbers = #tpu.dot_dimension_numbers<[1], [0], [0], [1], [0, 0, 1, 1], [], []>} : vector<8x8xf32>, vector<8x8xf32>, vector<8x8xf32> -> vector<8x8xf32>
    %c8_49 = arith.constant 8 : index
    %c8_50 = arith.constant 8 : index
    %134 = vector.load %arg9[%c8_49, %c8_50] : memref<16x32xf32, #tpu.memory_space<vmem>>, vector<8x8xf32>
    tpu.vector_store %arg9[%c8_49, %c8_50], %133 {strides = array<i32>} : memref<16x32xf32, #tpu.memory_space<vmem>>, vector<8x8xf32>,
    %135 = vector.extract_strided_slice %30 {offsets = [8, 16], sizes = [8, 8], strides = [1, 1]} : vector<16x96xf32> to vector<8x8xf32>
    %136 = vector.extract_strided_slice %30 {offsets = [8, 48], sizes = [8, 8], strides = [1, 1]} : vector<16x96xf32> to vector<8x8xf32>
    %137 = vector.extract_strided_slice %30 {offsets = [8, 80], sizes = [8, 8], strides = [1, 1]} : vector<16x96xf32> to vector<8x8xf32>
    %cst_51 = arith.constant dense<0.000000e+00> : vector<8x8xf32>
    %138 = tpu.matmul %135, %136, %cst_51 {dimension_numbers = #tpu.dot_dimension_numbers<[1], [1], [0], [0], [0, 0, 1, 0], [], []>} : vector<8x8xf32>, vector<8x8xf32>, vector<8x8xf32> -> vector<8x8xf32>
    %139 = vector.broadcast %100 : vector<1x8xf32> to vector<8x8xf32>
    %140 = arith.addf %138, %139 : vector<8x8xf32>
    %cst_52 = arith.constant dense<0xFF800000> : vector<8xf32>
    %141 = vector.multi_reduction <maximumf>, %140, %cst_52 [1] : vector<8x8xf32> to vector<8xf32>
    %142 = vector.shape_cast %141 : vector<8xf32> to vector<8x1xf32>
    %143 = vector.broadcast %142 : vector<8x1xf32> to vector<8x8xf32>
    %144 = arith.subf %140, %143 : vector<8x8xf32>
    %145 = math.exp %144 : vector<8x8xf32>
    %cst_53 = arith.constant dense<0.000000e+00> : vector<8xf32>
    %146 = vector.multi_reduction <add>, %145, %cst_53 [1] : vector<8x8xf32> to vector<8xf32>
    %147 = vector.shape_cast %146 : vector<8xf32> to vector<8x1xf32>
    %148 = vector.broadcast %147 : vector<8x1xf32> to vector<8x8xf32>
    %149 = arith.divf %145, %148 : vector<8x8xf32>
    %cst_54 = arith.constant dense<0.000000e+00> : vector<8x8xf32>
    %150 = tpu.matmul %149, %137, %cst_54 {dimension_numbers = #tpu.dot_dimension_numbers<[1], [0], [0], [1], [0, 0, 1, 1], [], []>} : vector<8x8xf32>, vector<8x8xf32>, vector<8x8xf32> -> vector<8x8xf32>
    %c8_55 = arith.constant 8 : index
    %c16_56 = arith.constant 16 : index
    %151 = vector.load %arg9[%c8_55, %c16_56] : memref<16x32xf32, #tpu.memory_space<vmem>>, vector<8x8xf32>
    tpu.vector_store %arg9[%c8_55, %c16_56], %150 {strides = array<i32>} : memref<16x32xf32, #tpu.memory_space<vmem>>, vector<8x8xf32>,
    %152 = vector.extract_strided_slice %30 {offsets = [8, 24], sizes = [8, 8], strides = [1, 1]} : vector<16x96xf32> to vector<8x8xf32>
    %153 = vector.extract_strided_slice %30 {offsets = [8, 56], sizes = [8, 8], strides = [1, 1]} : vector<16x96xf32> to vector<8x8xf32>
    %154 = vector.extract_strided_slice %30 {offsets = [8, 88], sizes = [8, 8], strides = [1, 1]} : vector<16x96xf32> to vector<8x8xf32>
    %cst_57 = arith.constant dense<0.000000e+00> : vector<8x8xf32>
    %155 = tpu.matmul %152, %153, %cst_57 {dimension_numbers = #tpu.dot_dimension_numbers<[1], [1], [0], [0], [0, 0, 1, 0], [], []>} : vector<8x8xf32>, vector<8x8xf32>, vector<8x8xf32> -> vector<8x8xf32>
    %156 = vector.broadcast %100 : vector<1x8xf32> to vector<8x8xf32>
    %157 = arith.addf %155, %156 : vector<8x8xf32>
    %cst_58 = arith.constant dense<0xFF800000> : vector<8xf32>
    %158 = vector.multi_reduction <maximumf>, %157, %cst_58 [1] : vector<8x8xf32> to vector<8xf32>
    %159 = vector.shape_cast %158 : vector<8xf32> to vector<8x1xf32>
    %160 = vector.broadcast %159 : vector<8x1xf32> to vector<8x8xf32>
    %161 = arith.subf %157, %160 : vector<8x8xf32>
    %162 = math.exp %161 : vector<8x8xf32>
    %cst_59 = arith.constant dense<0.000000e+00> : vector<8xf32>
    %163 = vector.multi_reduction <add>, %162, %cst_59 [1] : vector<8x8xf32> to vector<8xf32>
    %164 = vector.shape_cast %163 : vector<8xf32> to vector<8x1xf32>
    %165 = vector.broadcast %164 : vector<8x1xf32> to vector<8x8xf32>
    %166 = arith.divf %162, %165 : vector<8x8xf32>
    %cst_60 = arith.constant dense<0.000000e+00> : vector<8x8xf32>
    %167 = tpu.matmul %166, %154, %cst_60 {dimension_numbers = #tpu.dot_dimension_numbers<[1], [0], [0], [1], [0, 0, 1, 1], [], []>} : vector<8x8xf32>, vector<8x8xf32>, vector<8x8xf32> -> vector<8x8xf32>
    %c8_61 = arith.constant 8 : index
    %c24_62 = arith.constant 24 : index
    %168 = vector.load %arg9[%c8_61, %c24_62] : memref<16x32xf32, #tpu.memory_space<vmem>>, vector<8x8xf32>
    tpu.vector_store %arg9[%c8_61, %c24_62], %167 {strides = array<i32>} : memref<16x32xf32, #tpu.memory_space<vmem>>, vector<8x8xf32>,
    %c0_63 = arith.constant 0 : index
    %c0_64 = arith.constant 0 : index
    %169 = vector.load %arg9[%c0_63, %c0_64] : memref<16x32xf32, #tpu.memory_space<vmem>>, vector<16x32xf32>
    %170 = arith.truncf %169 : vector<16x32xf32> to vector<16x32xbf16>
    %c0_65 = arith.constant 0 : index
    %c0_66 = arith.constant 0 : index
    %c128 = arith.constant 128 : index
    %171 = vector.load %arg2[%c0_65, %c0_66, %c128] : memref<2x32x384xbf16, #tpu.memory_space<vmem>>, vector<1x32x32xbf16>
    %172 = vector.shape_cast %171 : vector<1x32x32xbf16> to vector<32x32xbf16>
    %cst_67 = arith.constant dense<0.000000e+00> : vector<16x32xf32>
    %173 = tpu.matmul %170, %172, %cst_67 {dimension_numbers = #tpu.dot_dimension_numbers<[1], [0], [0], [1], [0, 0, 1, 1], [], []>} : vector<16x32xbf16>, vector<32x32xbf16>, vector<16x32xf32> -> vector<16x32xf32>
    %c0_68 = arith.constant 0 : index
    %c1_69 = arith.constant 1 : index
    %c0_70 = arith.constant 0 : index
    %174 = vector.load %arg4[%c0_68, %c1_69, %c0_70] : memref<2x8x128xf32, #tpu.memory_space<vmem>>, vector<1x1x32xf32>
    %175 = vector.shape_cast %174 : vector<1x1x32xf32> to vector<1x32xf32>
    %176 = vector.broadcast %175 : vector<1x32xf32> to vector<16x32xf32>
    %177 = arith.addf %173, %176 : vector<16x32xf32>
    %178 = arith.addf %177, %22 : vector<16x32xf32>
    %c0_71 = arith.constant 0 : index
    %c4 = arith.constant 4 : index
    %c0_72 = arith.constant 0 : index
    %179 = vector.load %arg4[%c0_71, %c4, %c0_72] : memref<2x8x128xf32, #tpu.memory_space<vmem>>, vector<1x1x32xf32>
    %180 = vector.shape_cast %179 : vector<1x1x32xf32> to vector<1x32xf32>
    %c0_73 = arith.constant 0 : index
    %c5 = arith.constant 5 : index
    %c0_74 = arith.constant 0 : index
    %181 = vector.load %arg4[%c0_73, %c5, %c0_74] : memref<2x8x128xf32, #tpu.memory_space<vmem>>, vector<1x1x32xf32>
    %182 = vector.shape_cast %181 : vector<1x1x32xf32> to vector<1x32xf32>
    %cst_75 = arith.constant dense<0.000000e+00> : vector<16xf32>
    %183 = vector.multi_reduction <add>, %178, %cst_75 [1] : vector<16x32xf32> to vector<16xf32>
    %184 = vector.shape_cast %183 : vector<16xf32> to vector<16x1xf32>
    %cst_76 = arith.constant 3.200000e+01 : f32
    %185 = vector.broadcast %cst_76 : f32 to vector<16x1xf32>
    %186 = arith.divf %184, %185 : vector<16x1xf32>
    %187 = vector.broadcast %186 : vector<16x1xf32> to vector<16x32xf32>
    %188 = arith.subf %178, %187 : vector<16x32xf32>
    %189 = arith.mulf %188, %188 : vector<16x32xf32>
    %cst_77 = arith.constant dense<0.000000e+00> : vector<16xf32>
    %190 = vector.multi_reduction <add>, %189, %cst_77 [1] : vector<16x32xf32> to vector<16xf32>
    %191 = vector.shape_cast %190 : vector<16xf32> to vector<16x1xf32>
    %cst_78 = arith.constant 3.200000e+01 : f32
    %192 = vector.broadcast %cst_78 : f32 to vector<16x1xf32>
    %193 = arith.divf %191, %192 : vector<16x1xf32>
    %cst_79 = arith.constant 9.99999996E-13 : f32
    %194 = vector.broadcast %cst_79 : f32 to vector<16x1xf32>
    %195 = arith.addf %193, %194 : vector<16x1xf32>
    %196 = math.rsqrt %195 : vector<16x1xf32>
    %197 = vector.broadcast %196 : vector<16x1xf32> to vector<16x32xf32>
    %198 = arith.mulf %188, %197 : vector<16x32xf32>
    %199 = vector.broadcast %180 : vector<1x32xf32> to vector<16x32xf32>
    %200 = arith.mulf %198, %199 : vector<16x32xf32>
    %201 = vector.broadcast %182 : vector<1x32xf32> to vector<16x32xf32>
    %202 = arith.addf %200, %201 : vector<16x32xf32>
    %203 = arith.truncf %202 : vector<16x32xf32> to vector<16x32xbf16>
    %c0_80 = arith.constant 0 : index
    %c0_81 = arith.constant 0 : index
    %c256 = arith.constant 256 : index
    %204 = vector.load %arg2[%c0_80, %c0_81, %c256] : memref<2x32x384xbf16, #tpu.memory_space<vmem>>, vector<1x32x64xbf16>
    %205 = vector.shape_cast %204 : vector<1x32x64xbf16> to vector<32x64xbf16>
    %cst_82 = arith.constant dense<0.000000e+00> : vector<16x64xf32>
    %206 = tpu.matmul %203, %205, %cst_82 {dimension_numbers = #tpu.dot_dimension_numbers<[1], [0], [0], [1], [0, 0, 1, 1], [], []>} : vector<16x32xbf16>, vector<32x64xbf16>, vector<16x64xf32> -> vector<16x64xf32>
    %c0_83 = arith.constant 0 : index
    %c2_84 = arith.constant 2 : index
    %c0_85 = arith.constant 0 : index
    %207 = vector.load %arg4[%c0_83, %c2_84, %c0_85] : memref<2x8x128xf32, #tpu.memory_space<vmem>>, vector<1x1x64xf32>
    %208 = vector.shape_cast %207 : vector<1x1x64xf32> to vector<1x64xf32>
    %209 = vector.broadcast %208 : vector<1x64xf32> to vector<16x64xf32>
    %210 = arith.addf %206, %209 : vector<16x64xf32>
    %cst_86 = arith.constant 5.000000e-01 : f32
    %211 = vector.broadcast %cst_86 : f32 to vector<16x64xf32>
    %212 = arith.mulf %211, %210 : vector<16x64xf32>
    %cst_87 = arith.constant 4.471500e-02 : f32
    %213 = vector.broadcast %cst_87 : f32 to vector<16x64xf32>
    %214 = arith.mulf %213, %210 : vector<16x64xf32>
    %215 = arith.mulf %214, %210 : vector<16x64xf32>
    %216 = arith.mulf %215, %210 : vector<16x64xf32>
    %217 = arith.addf %210, %216 : vector<16x64xf32>
    %cst_88 = arith.constant 0.797884583 : f32
    %218 = vector.broadcast %cst_88 : f32 to vector<16x64xf32>
    %219 = arith.mulf %218, %217 : vector<16x64xf32>
    %220 = math.tanh %219 : vector<16x64xf32>
    %cst_89 = arith.constant 1.000000e+00 : f32
    %221 = vector.broadcast %cst_89 : f32 to vector<16x64xf32>
    %222 = arith.addf %221, %220 : vector<16x64xf32>
    %223 = arith.mulf %212, %222 : vector<16x64xf32>
    %224 = arith.truncf %223 : vector<16x64xf32> to vector<16x64xbf16>
    %c0_90 = arith.constant 0 : index
    %c0_91 = arith.constant 0 : index
    %c0_92 = arith.constant 0 : index
    %225 = vector.load %arg3[%c0_90, %c0_91, %c0_92] : memref<2x64x32xbf16, #tpu.memory_space<vmem>>, vector<1x64x32xbf16>
    %226 = vector.shape_cast %225 : vector<1x64x32xbf16> to vector<64x32xbf16>
    %cst_93 = arith.constant dense<0.000000e+00> : vector<16x32xf32>
    %227 = tpu.matmul %224, %226, %cst_93 {dimension_numbers = #tpu.dot_dimension_numbers<[1], [0], [0], [1], [0, 0, 1, 1], [], []>} : vector<16x64xbf16>, vector<64x32xbf16>, vector<16x32xf32> -> vector<16x32xf32>
    %c0_94 = arith.constant 0 : index
    %c3 = arith.constant 3 : index
    %c0_95 = arith.constant 0 : index
    %228 = vector.load %arg4[%c0_94, %c3, %c0_95] : memref<2x8x128xf32, #tpu.memory_space<vmem>>, vector<1x1x32xf32>
    %229 = vector.shape_cast %228 : vector<1x1x32xf32> to vector<1x32xf32>
    %230 = vector.broadcast %229 : vector<1x32xf32> to vector<16x32xf32>
    %231 = arith.addf %227, %230 : vector<16x32xf32>
    %232 = arith.addf %231, %202 : vector<16x32xf32>
    %c0_96 = arith.constant 0 : index
    %c6 = arith.constant 6 : index
    %c0_97 = arith.constant 0 : index
    %233 = vector.load %arg4[%c0_96, %c6, %c0_97] : memref<2x8x128xf32, #tpu.memory_space<vmem>>, vector<1x1x32xf32>
    %234 = vector.shape_cast %233 : vector<1x1x32xf32> to vector<1x32xf32>
    %c0_98 = arith.constant 0 : index
    %c7 = arith.constant 7 : index
    %c0_99 = arith.constant 0 : index
    %235 = vector.load %arg4[%c0_98, %c7, %c0_99] : memref<2x8x128xf32, #tpu.memory_space<vmem>>, vector<1x1x32xf32>
    %236 = vector.shape_cast %235 : vector<1x1x32xf32> to vector<1x32xf32>
    %cst_100 = arith.constant dense<0.000000e+00> : vector<16xf32>
    %237 = vector.multi_reduction <add>, %232, %cst_100 [1] : vector<16x32xf32> to vector<16xf32>
    %238 = vector.shape_cast %237 : vector<16xf32> to vector<16x1xf32>
    %cst_101 = arith.constant 3.200000e+01 : f32
    %239 = vector.broadcast %cst_101 : f32 to vector<16x1xf32>
    %240 = arith.divf %238, %239 : vector<16x1xf32>
    %241 = vector.broadcast %240 : vector<16x1xf32> to vector<16x32xf32>
    %242 = arith.subf %232, %241 : vector<16x32xf32>
    %243 = arith.mulf %242, %242 : vector<16x32xf32>
    %cst_102 = arith.constant dense<0.000000e+00> : vector<16xf32>
    %244 = vector.multi_reduction <add>, %243, %cst_102 [1] : vector<16x32xf32> to vector<16xf32>
    %245 = vector.shape_cast %244 : vector<16xf32> to vector<16x1xf32>
    %cst_103 = arith.constant 3.200000e+01 : f32
    %246 = vector.broadcast %cst_103 : f32 to vector<16x1xf32>
    %247 = arith.divf %245, %246 : vector<16x1xf32>
    %cst_104 = arith.constant 9.99999996E-13 : f32
    %248 = vector.broadcast %cst_104 : f32 to vector<16x1xf32>
    %249 = arith.addf %247, %248 : vector<16x1xf32>
    %250 = math.rsqrt %249 : vector<16x1xf32>
    %251 = vector.broadcast %250 : vector<16x1xf32> to vector<16x32xf32>
    %252 = arith.mulf %242, %251 : vector<16x32xf32>
    %253 = vector.broadcast %234 : vector<1x32xf32> to vector<16x32xf32>
    %254 = arith.mulf %252, %253 : vector<16x32xf32>
    %255 = vector.broadcast %236 : vector<1x32xf32> to vector<16x32xf32>
    %256 = arith.addf %254, %255 : vector<16x32xf32>
    %257 = arith.truncf %256 : vector<16x32xf32> to vector<16x32xbf16>
    %c1_105 = arith.constant 1 : index
    %c0_106 = arith.constant 0 : index
    %c0_107 = arith.constant 0 : index
    %258 = vector.load %arg2[%c1_105, %c0_106, %c0_107] : memref<2x32x384xbf16, #tpu.memory_space<vmem>>, vector<1x32x96xbf16>
    %259 = vector.shape_cast %258 : vector<1x32x96xbf16> to vector<32x96xbf16>
    %cst_108 = arith.constant dense<0.000000e+00> : vector<16x96xf32>
    %260 = tpu.matmul %257, %259, %cst_108 {dimension_numbers = #tpu.dot_dimension_numbers<[1], [0], [0], [1], [0, 0, 1, 1], [], []>} : vector<16x32xbf16>, vector<32x96xbf16>, vector<16x96xf32> -> vector<16x96xf32>
    %c1_109 = arith.constant 1 : index
    %c0_110 = arith.constant 0 : index
    %c0_111 = arith.constant 0 : index
    %261 = vector.load %arg4[%c1_109, %c0_110, %c0_111] : memref<2x8x128xf32, #tpu.memory_space<vmem>>, vector<1x1x96xf32>
    %262 = vector.shape_cast %261 : vector<1x1x96xf32> to vector<1x96xf32>
    %263 = vector.broadcast %262 : vector<1x96xf32> to vector<16x96xf32>
    %264 = arith.addf %260, %263 : vector<16x96xf32>
    %c0_112 = arith.constant 0 : index
    %c0_113 = arith.constant 0 : index
    %265 = vector.load %arg1[%c0_112, %c0_113] : memref<2x8xf32, #tpu.memory_space<vmem>>, vector<1x8xf32>
    %266 = vector.extract_strided_slice %264 {offsets = [0, 0], sizes = [8, 8], strides = [1, 1]} : vector<16x96xf32> to vector<8x8xf32>
    %267 = vector.extract_strided_slice %264 {offsets = [0, 32], sizes = [8, 8], strides = [1, 1]} : vector<16x96xf32> to vector<8x8xf32>
    %268 = vector.extract_strided_slice %264 {offsets = [0, 64], sizes = [8, 8], strides = [1, 1]} : vector<16x96xf32> to vector<8x8xf32>
    %cst_114 = arith.constant dense<0.000000e+00> : vector<8x8xf32>
    %269 = tpu.matmul %266, %267, %cst_114 {dimension_numbers = #tpu.dot_dimension_numbers<[1], [1], [0], [0], [0, 0, 1, 0], [], []>} : vector<8x8xf32>, vector<8x8xf32>, vector<8x8xf32> -> vector<8x8xf32>
    %270 = vector.broadcast %265 : vector<1x8xf32> to vector<8x8xf32>
    %271 = arith.addf %269, %270 : vector<8x8xf32>
    %cst_115 = arith.constant dense<0xFF800000> : vector<8xf32>
    %272 = vector.multi_reduction <maximumf>, %271, %cst_115 [1] : vector<8x8xf32> to vector<8xf32>
    %273 = vector.shape_cast %272 : vector<8xf32> to vector<8x1xf32>
    %274 = vector.broadcast %273 : vector<8x1xf32> to vector<8x8xf32>
    %275 = arith.subf %271, %274 : vector<8x8xf32>
    %276 = math.exp %275 : vector<8x8xf32>
    %cst_116 = arith.constant dense<0.000000e+00> : vector<8xf32>
    %277 = vector.multi_reduction <add>, %276, %cst_116 [1] : vector<8x8xf32> to vector<8xf32>
    %278 = vector.shape_cast %277 : vector<8xf32> to vector<8x1xf32>
    %279 = vector.broadcast %278 : vector<8x1xf32> to vector<8x8xf32>
    %280 = arith.divf %276, %279 : vector<8x8xf32>
    %cst_117 = arith.constant dense<0.000000e+00> : vector<8x8xf32>
    %281 = tpu.matmul %280, %268, %cst_117 {dimension_numbers = #tpu.dot_dimension_numbers<[1], [0], [0], [1], [0, 0, 1, 1], [], []>} : vector<8x8xf32>, vector<8x8xf32>, vector<8x8xf32> -> vector<8x8xf32>
    %c0_118 = arith.constant 0 : index
    %c0_119 = arith.constant 0 : index
    %282 = vector.load %arg9[%c0_118, %c0_119] : memref<16x32xf32, #tpu.memory_space<vmem>>, vector<8x8xf32>
    tpu.vector_store %arg9[%c0_118, %c0_119], %281 {strides = array<i32>} : memref<16x32xf32, #tpu.memory_space<vmem>>, vector<8x8xf32>,
    %283 = vector.extract_strided_slice %264 {offsets = [0, 8], sizes = [8, 8], strides = [1, 1]} : vector<16x96xf32> to vector<8x8xf32>
    %284 = vector.extract_strided_slice %264 {offsets = [0, 40], sizes = [8, 8], strides = [1, 1]} : vector<16x96xf32> to vector<8x8xf32>
    %285 = vector.extract_strided_slice %264 {offsets = [0, 72], sizes = [8, 8], strides = [1, 1]} : vector<16x96xf32> to vector<8x8xf32>
    %cst_120 = arith.constant dense<0.000000e+00> : vector<8x8xf32>
    %286 = tpu.matmul %283, %284, %cst_120 {dimension_numbers = #tpu.dot_dimension_numbers<[1], [1], [0], [0], [0, 0, 1, 0], [], []>} : vector<8x8xf32>, vector<8x8xf32>, vector<8x8xf32> -> vector<8x8xf32>
    %287 = vector.broadcast %265 : vector<1x8xf32> to vector<8x8xf32>
    %288 = arith.addf %286, %287 : vector<8x8xf32>
    %cst_121 = arith.constant dense<0xFF800000> : vector<8xf32>
    %289 = vector.multi_reduction <maximumf>, %288, %cst_121 [1] : vector<8x8xf32> to vector<8xf32>
    %290 = vector.shape_cast %289 : vector<8xf32> to vector<8x1xf32>
    %291 = vector.broadcast %290 : vector<8x1xf32> to vector<8x8xf32>
    %292 = arith.subf %288, %291 : vector<8x8xf32>
    %293 = math.exp %292 : vector<8x8xf32>
    %cst_122 = arith.constant dense<0.000000e+00> : vector<8xf32>
    %294 = vector.multi_reduction <add>, %293, %cst_122 [1] : vector<8x8xf32> to vector<8xf32>
    %295 = vector.shape_cast %294 : vector<8xf32> to vector<8x1xf32>
    %296 = vector.broadcast %295 : vector<8x1xf32> to vector<8x8xf32>
    %297 = arith.divf %293, %296 : vector<8x8xf32>
    %cst_123 = arith.constant dense<0.000000e+00> : vector<8x8xf32>
    %298 = tpu.matmul %297, %285, %cst_123 {dimension_numbers = #tpu.dot_dimension_numbers<[1], [0], [0], [1], [0, 0, 1, 1], [], []>} : vector<8x8xf32>, vector<8x8xf32>, vector<8x8xf32> -> vector<8x8xf32>
    %c0_124 = arith.constant 0 : index
    %c8_125 = arith.constant 8 : index
    %299 = vector.load %arg9[%c0_124, %c8_125] : memref<16x32xf32, #tpu.memory_space<vmem>>, vector<8x8xf32>
    tpu.vector_store %arg9[%c0_124, %c8_125], %298 {strides = array<i32>} : memref<16x32xf32, #tpu.memory_space<vmem>>, vector<8x8xf32>,
    %300 = vector.extract_strided_slice %264 {offsets = [0, 16], sizes = [8, 8], strides = [1, 1]} : vector<16x96xf32> to vector<8x8xf32>
    %301 = vector.extract_strided_slice %264 {offsets = [0, 48], sizes = [8, 8], strides = [1, 1]} : vector<16x96xf32> to vector<8x8xf32>
    %302 = vector.extract_strided_slice %264 {offsets = [0, 80], sizes = [8, 8], strides = [1, 1]} : vector<16x96xf32> to vector<8x8xf32>
    %cst_126 = arith.constant dense<0.000000e+00> : vector<8x8xf32>
    %303 = tpu.matmul %300, %301, %cst_126 {dimension_numbers = #tpu.dot_dimension_numbers<[1], [1], [0], [0], [0, 0, 1, 0], [], []>} : vector<8x8xf32>, vector<8x8xf32>, vector<8x8xf32> -> vector<8x8xf32>
    %304 = vector.broadcast %265 : vector<1x8xf32> to vector<8x8xf32>
    %305 = arith.addf %303, %304 : vector<8x8xf32>
    %cst_127 = arith.constant dense<0xFF800000> : vector<8xf32>
    %306 = vector.multi_reduction <maximumf>, %305, %cst_127 [1] : vector<8x8xf32> to vector<8xf32>
    %307 = vector.shape_cast %306 : vector<8xf32> to vector<8x1xf32>
    %308 = vector.broadcast %307 : vector<8x1xf32> to vector<8x8xf32>
    %309 = arith.subf %305, %308 : vector<8x8xf32>
    %310 = math.exp %309 : vector<8x8xf32>
    %cst_128 = arith.constant dense<0.000000e+00> : vector<8xf32>
    %311 = vector.multi_reduction <add>, %310, %cst_128 [1] : vector<8x8xf32> to vector<8xf32>
    %312 = vector.shape_cast %311 : vector<8xf32> to vector<8x1xf32>
    %313 = vector.broadcast %312 : vector<8x1xf32> to vector<8x8xf32>
    %314 = arith.divf %310, %313 : vector<8x8xf32>
    %cst_129 = arith.constant dense<0.000000e+00> : vector<8x8xf32>
    %315 = tpu.matmul %314, %302, %cst_129 {dimension_numbers = #tpu.dot_dimension_numbers<[1], [0], [0], [1], [0, 0, 1, 1], [], []>} : vector<8x8xf32>, vector<8x8xf32>, vector<8x8xf32> -> vector<8x8xf32>
    %c0_130 = arith.constant 0 : index
    %c16_131 = arith.constant 16 : index
    %316 = vector.load %arg9[%c0_130, %c16_131] : memref<16x32xf32, #tpu.memory_space<vmem>>, vector<8x8xf32>
    tpu.vector_store %arg9[%c0_130, %c16_131], %315 {strides = array<i32>} : memref<16x32xf32, #tpu.memory_space<vmem>>, vector<8x8xf32>,
    %317 = vector.extract_strided_slice %264 {offsets = [0, 24], sizes = [8, 8], strides = [1, 1]} : vector<16x96xf32> to vector<8x8xf32>
    %318 = vector.extract_strided_slice %264 {offsets = [0, 56], sizes = [8, 8], strides = [1, 1]} : vector<16x96xf32> to vector<8x8xf32>
    %319 = vector.extract_strided_slice %264 {offsets = [0, 88], sizes = [8, 8], strides = [1, 1]} : vector<16x96xf32> to vector<8x8xf32>
    %cst_132 = arith.constant dense<0.000000e+00> : vector<8x8xf32>
    %320 = tpu.matmul %317, %318, %cst_132 {dimension_numbers = #tpu.dot_dimension_numbers<[1], [1], [0], [0], [0, 0, 1, 0], [], []>} : vector<8x8xf32>, vector<8x8xf32>, vector<8x8xf32> -> vector<8x8xf32>
    %321 = vector.broadcast %265 : vector<1x8xf32> to vector<8x8xf32>
    %322 = arith.addf %320, %321 : vector<8x8xf32>
    %cst_133 = arith.constant dense<0xFF800000> : vector<8xf32>
    %323 = vector.multi_reduction <maximumf>, %322, %cst_133 [1] : vector<8x8xf32> to vector<8xf32>
    %324 = vector.shape_cast %323 : vector<8xf32> to vector<8x1xf32>
    %325 = vector.broadcast %324 : vector<8x1xf32> to vector<8x8xf32>
    %326 = arith.subf %322, %325 : vector<8x8xf32>
    %327 = math.exp %326 : vector<8x8xf32>
    %cst_134 = arith.constant dense<0.000000e+00> : vector<8xf32>
    %328 = vector.multi_reduction <add>, %327, %cst_134 [1] : vector<8x8xf32> to vector<8xf32>
    %329 = vector.shape_cast %328 : vector<8xf32> to vector<8x1xf32>
    %330 = vector.broadcast %329 : vector<8x1xf32> to vector<8x8xf32>
    %331 = arith.divf %327, %330 : vector<8x8xf32>
    %cst_135 = arith.constant dense<0.000000e+00> : vector<8x8xf32>
    %332 = tpu.matmul %331, %319, %cst_135 {dimension_numbers = #tpu.dot_dimension_numbers<[1], [0], [0], [1], [0, 0, 1, 1], [], []>} : vector<8x8xf32>, vector<8x8xf32>, vector<8x8xf32> -> vector<8x8xf32>
    %c0_136 = arith.constant 0 : index
    %c24_137 = arith.constant 24 : index
    %333 = vector.load %arg9[%c0_136, %c24_137] : memref<16x32xf32, #tpu.memory_space<vmem>>, vector<8x8xf32>
    tpu.vector_store %arg9[%c0_136, %c24_137], %332 {strides = array<i32>} : memref<16x32xf32, #tpu.memory_space<vmem>>, vector<8x8xf32>,
    %c1_138 = arith.constant 1 : index
    %c0_139 = arith.constant 0 : index
    %334 = vector.load %arg1[%c1_138, %c0_139] : memref<2x8xf32, #tpu.memory_space<vmem>>, vector<1x8xf32>
    %335 = vector.extract_strided_slice %264 {offsets = [8, 0], sizes = [8, 8], strides = [1, 1]} : vector<16x96xf32> to vector<8x8xf32>
    %336 = vector.extract_strided_slice %264 {offsets = [8, 32], sizes = [8, 8], strides = [1, 1]} : vector<16x96xf32> to vector<8x8xf32>
    %337 = vector.extract_strided_slice %264 {offsets = [8, 64], sizes = [8, 8], strides = [1, 1]} : vector<16x96xf32> to vector<8x8xf32>
    %cst_140 = arith.constant dense<0.000000e+00> : vector<8x8xf32>
    %338 = tpu.matmul %335, %336, %cst_140 {dimension_numbers = #tpu.dot_dimension_numbers<[1], [1], [0], [0], [0, 0, 1, 0], [], []>} : vector<8x8xf32>, vector<8x8xf32>, vector<8x8xf32> -> vector<8x8xf32>
    %339 = vector.broadcast %334 : vector<1x8xf32> to vector<8x8xf32>
    %340 = arith.addf %338, %339 : vector<8x8xf32>
    %cst_141 = arith.constant dense<0xFF800000> : vector<8xf32>
    %341 = vector.multi_reduction <maximumf>, %340, %cst_141 [1] : vector<8x8xf32> to vector<8xf32>
    %342 = vector.shape_cast %341 : vector<8xf32> to vector<8x1xf32>
    %343 = vector.broadcast %342 : vector<8x1xf32> to vector<8x8xf32>
    %344 = arith.subf %340, %343 : vector<8x8xf32>
    %345 = math.exp %344 : vector<8x8xf32>
    %cst_142 = arith.constant dense<0.000000e+00> : vector<8xf32>
    %346 = vector.multi_reduction <add>, %345, %cst_142 [1] : vector<8x8xf32> to vector<8xf32>
    %347 = vector.shape_cast %346 : vector<8xf32> to vector<8x1xf32>
    %348 = vector.broadcast %347 : vector<8x1xf32> to vector<8x8xf32>
    %349 = arith.divf %345, %348 : vector<8x8xf32>
    %cst_143 = arith.constant dense<0.000000e+00> : vector<8x8xf32>
    %350 = tpu.matmul %349, %337, %cst_143 {dimension_numbers = #tpu.dot_dimension_numbers<[1], [0], [0], [1], [0, 0, 1, 1], [], []>} : vector<8x8xf32>, vector<8x8xf32>, vector<8x8xf32> -> vector<8x8xf32>
    %c8_144 = arith.constant 8 : index
    %c0_145 = arith.constant 0 : index
    %351 = vector.load %arg9[%c8_144, %c0_145] : memref<16x32xf32, #tpu.memory_space<vmem>>, vector<8x8xf32>
    tpu.vector_store %arg9[%c8_144, %c0_145], %350 {strides = array<i32>} : memref<16x32xf32, #tpu.memory_space<vmem>>, vector<8x8xf32>,
    %352 = vector.extract_strided_slice %264 {offsets = [8, 8], sizes = [8, 8], strides = [1, 1]} : vector<16x96xf32> to vector<8x8xf32>
    %353 = vector.extract_strided_slice %264 {offsets = [8, 40], sizes = [8, 8], strides = [1, 1]} : vector<16x96xf32> to vector<8x8xf32>
    %354 = vector.extract_strided_slice %264 {offsets = [8, 72], sizes = [8, 8], strides = [1, 1]} : vector<16x96xf32> to vector<8x8xf32>
    %cst_146 = arith.constant dense<0.000000e+00> : vector<8x8xf32>
    %355 = tpu.matmul %352, %353, %cst_146 {dimension_numbers = #tpu.dot_dimension_numbers<[1], [1], [0], [0], [0, 0, 1, 0], [], []>} : vector<8x8xf32>, vector<8x8xf32>, vector<8x8xf32> -> vector<8x8xf32>
    %356 = vector.broadcast %334 : vector<1x8xf32> to vector<8x8xf32>
    %357 = arith.addf %355, %356 : vector<8x8xf32>
    %cst_147 = arith.constant dense<0xFF800000> : vector<8xf32>
    %358 = vector.multi_reduction <maximumf>, %357, %cst_147 [1] : vector<8x8xf32> to vector<8xf32>
    %359 = vector.shape_cast %358 : vector<8xf32> to vector<8x1xf32>
    %360 = vector.broadcast %359 : vector<8x1xf32> to vector<8x8xf32>
    %361 = arith.subf %357, %360 : vector<8x8xf32>
    %362 = math.exp %361 : vector<8x8xf32>
    %cst_148 = arith.constant dense<0.000000e+00> : vector<8xf32>
    %363 = vector.multi_reduction <add>, %362, %cst_148 [1] : vector<8x8xf32> to vector<8xf32>
    %364 = vector.shape_cast %363 : vector<8xf32> to vector<8x1xf32>
    %365 = vector.broadcast %364 : vector<8x1xf32> to vector<8x8xf32>
    %366 = arith.divf %362, %365 : vector<8x8xf32>
    %cst_149 = arith.constant dense<0.000000e+00> : vector<8x8xf32>
    %367 = tpu.matmul %366, %354, %cst_149 {dimension_numbers = #tpu.dot_dimension_numbers<[1], [0], [0], [1], [0, 0, 1, 1], [], []>} : vector<8x8xf32>, vector<8x8xf32>, vector<8x8xf32> -> vector<8x8xf32>
    %c8_150 = arith.constant 8 : index
    %c8_151 = arith.constant 8 : index
    %368 = vector.load %arg9[%c8_150, %c8_151] : memref<16x32xf32, #tpu.memory_space<vmem>>, vector<8x8xf32>
    tpu.vector_store %arg9[%c8_150, %c8_151], %367 {strides = array<i32>} : memref<16x32xf32, #tpu.memory_space<vmem>>, vector<8x8xf32>,
    %369 = vector.extract_strided_slice %264 {offsets = [8, 16], sizes = [8, 8], strides = [1, 1]} : vector<16x96xf32> to vector<8x8xf32>
    %370 = vector.extract_strided_slice %264 {offsets = [8, 48], sizes = [8, 8], strides = [1, 1]} : vector<16x96xf32> to vector<8x8xf32>
    %371 = vector.extract_strided_slice %264 {offsets = [8, 80], sizes = [8, 8], strides = [1, 1]} : vector<16x96xf32> to vector<8x8xf32>
    %cst_152 = arith.constant dense<0.000000e+00> : vector<8x8xf32>
    %372 = tpu.matmul %369, %370, %cst_152 {dimension_numbers = #tpu.dot_dimension_numbers<[1], [1], [0], [0], [0, 0, 1, 0], [], []>} : vector<8x8xf32>, vector<8x8xf32>, vector<8x8xf32> -> vector<8x8xf32>
    %373 = vector.broadcast %334 : vector<1x8xf32> to vector<8x8xf32>
    %374 = arith.addf %372, %373 : vector<8x8xf32>
    %cst_153 = arith.constant dense<0xFF800000> : vector<8xf32>
    %375 = vector.multi_reduction <maximumf>, %374, %cst_153 [1] : vector<8x8xf32> to vector<8xf32>
    %376 = vector.shape_cast %375 : vector<8xf32> to vector<8x1xf32>
    %377 = vector.broadcast %376 : vector<8x1xf32> to vector<8x8xf32>
    %378 = arith.subf %374, %377 : vector<8x8xf32>
    %379 = math.exp %378 : vector<8x8xf32>
    %cst_154 = arith.constant dense<0.000000e+00> : vector<8xf32>
    %380 = vector.multi_reduction <add>, %379, %cst_154 [1] : vector<8x8xf32> to vector<8xf32>
    %381 = vector.shape_cast %380 : vector<8xf32> to vector<8x1xf32>
    %382 = vector.broadcast %381 : vector<8x1xf32> to vector<8x8xf32>
    %383 = arith.divf %379, %382 : vector<8x8xf32>
    %cst_155 = arith.constant dense<0.000000e+00> : vector<8x8xf32>
    %384 = tpu.matmul %383, %371, %cst_155 {dimension_numbers = #tpu.dot_dimension_numbers<[1], [0], [0], [1], [0, 0, 1, 1], [], []>} : vector<8x8xf32>, vector<8x8xf32>, vector<8x8xf32> -> vector<8x8xf32>
    %c8_156 = arith.constant 8 : index
    %c16_157 = arith.constant 16 : index
    %385 = vector.load %arg9[%c8_156, %c16_157] : memref<16x32xf32, #tpu.memory_space<vmem>>, vector<8x8xf32>
    tpu.vector_store %arg9[%c8_156, %c16_157], %384 {strides = array<i32>} : memref<16x32xf32, #tpu.memory_space<vmem>>, vector<8x8xf32>,
    %386 = vector.extract_strided_slice %264 {offsets = [8, 24], sizes = [8, 8], strides = [1, 1]} : vector<16x96xf32> to vector<8x8xf32>
    %387 = vector.extract_strided_slice %264 {offsets = [8, 56], sizes = [8, 8], strides = [1, 1]} : vector<16x96xf32> to vector<8x8xf32>
    %388 = vector.extract_strided_slice %264 {offsets = [8, 88], sizes = [8, 8], strides = [1, 1]} : vector<16x96xf32> to vector<8x8xf32>
    %cst_158 = arith.constant dense<0.000000e+00> : vector<8x8xf32>
    %389 = tpu.matmul %386, %387, %cst_158 {dimension_numbers = #tpu.dot_dimension_numbers<[1], [1], [0], [0], [0, 0, 1, 0], [], []>} : vector<8x8xf32>, vector<8x8xf32>, vector<8x8xf32> -> vector<8x8xf32>
    %390 = vector.broadcast %334 : vector<1x8xf32> to vector<8x8xf32>
    %391 = arith.addf %389, %390 : vector<8x8xf32>
    %cst_159 = arith.constant dense<0xFF800000> : vector<8xf32>
    %392 = vector.multi_reduction <maximumf>, %391, %cst_159 [1] : vector<8x8xf32> to vector<8xf32>
    %393 = vector.shape_cast %392 : vector<8xf32> to vector<8x1xf32>
    %394 = vector.broadcast %393 : vector<8x1xf32> to vector<8x8xf32>
    %395 = arith.subf %391, %394 : vector<8x8xf32>
    %396 = math.exp %395 : vector<8x8xf32>
    %cst_160 = arith.constant dense<0.000000e+00> : vector<8xf32>
    %397 = vector.multi_reduction <add>, %396, %cst_160 [1] : vector<8x8xf32> to vector<8xf32>
    %398 = vector.shape_cast %397 : vector<8xf32> to vector<8x1xf32>
    %399 = vector.broadcast %398 : vector<8x1xf32> to vector<8x8xf32>
    %400 = arith.divf %396, %399 : vector<8x8xf32>
    %cst_161 = arith.constant dense<0.000000e+00> : vector<8x8xf32>
    %401 = tpu.matmul %400, %388, %cst_161 {dimension_numbers = #tpu.dot_dimension_numbers<[1], [0], [0], [1], [0, 0, 1, 1], [], []>} : vector<8x8xf32>, vector<8x8xf32>, vector<8x8xf32> -> vector<8x8xf32>
    %c8_162 = arith.constant 8 : index
    %c24_163 = arith.constant 24 : index
    %402 = vector.load %arg9[%c8_162, %c24_163] : memref<16x32xf32, #tpu.memory_space<vmem>>, vector<8x8xf32>
    tpu.vector_store %arg9[%c8_162, %c24_163], %401 {strides = array<i32>} : memref<16x32xf32, #tpu.memory_space<vmem>>, vector<8x8xf32>,
    %c0_164 = arith.constant 0 : index
    %c0_165 = arith.constant 0 : index
    %403 = vector.load %arg9[%c0_164, %c0_165] : memref<16x32xf32, #tpu.memory_space<vmem>>, vector<16x32xf32>
    %404 = arith.truncf %403 : vector<16x32xf32> to vector<16x32xbf16>
    %c1_166 = arith.constant 1 : index
    %c0_167 = arith.constant 0 : index
    %c128_168 = arith.constant 128 : index
    %405 = vector.load %arg2[%c1_166, %c0_167, %c128_168] : memref<2x32x384xbf16, #tpu.memory_space<vmem>>, vector<1x32x32xbf16>
    %406 = vector.shape_cast %405 : vector<1x32x32xbf16> to vector<32x32xbf16>
    %cst_169 = arith.constant dense<0.000000e+00> : vector<16x32xf32>
    %407 = tpu.matmul %404, %406, %cst_169 {dimension_numbers = #tpu.dot_dimension_numbers<[1], [0], [0], [1], [0, 0, 1, 1], [], []>} : vector<16x32xbf16>, vector<32x32xbf16>, vector<16x32xf32> -> vector<16x32xf32>
    %c1_170 = arith.constant 1 : index
    %c1_171 = arith.constant 1 : index
    %c0_172 = arith.constant 0 : index
    %408 = vector.load %arg4[%c1_170, %c1_171, %c0_172] : memref<2x8x128xf32, #tpu.memory_space<vmem>>, vector<1x1x32xf32>
    %409 = vector.shape_cast %408 : vector<1x1x32xf32> to vector<1x32xf32>
    %410 = vector.broadcast %409 : vector<1x32xf32> to vector<16x32xf32>
    %411 = arith.addf %407, %410 : vector<16x32xf32>
    %412 = arith.addf %411, %256 : vector<16x32xf32>
    %c1_173 = arith.constant 1 : index
    %c4_174 = arith.constant 4 : index
    %c0_175 = arith.constant 0 : index
    %413 = vector.load %arg4[%c1_173, %c4_174, %c0_175] : memref<2x8x128xf32, #tpu.memory_space<vmem>>, vector<1x1x32xf32>
    %414 = vector.shape_cast %413 : vector<1x1x32xf32> to vector<1x32xf32>
    %c1_176 = arith.constant 1 : index
    %c5_177 = arith.constant 5 : index
    %c0_178 = arith.constant 0 : index
    %415 = vector.load %arg4[%c1_176, %c5_177, %c0_178] : memref<2x8x128xf32, #tpu.memory_space<vmem>>, vector<1x1x32xf32>
    %416 = vector.shape_cast %415 : vector<1x1x32xf32> to vector<1x32xf32>
    %cst_179 = arith.constant dense<0.000000e+00> : vector<16xf32>
    %417 = vector.multi_reduction <add>, %412, %cst_179 [1] : vector<16x32xf32> to vector<16xf32>
    %418 = vector.shape_cast %417 : vector<16xf32> to vector<16x1xf32>
    %cst_180 = arith.constant 3.200000e+01 : f32
    %419 = vector.broadcast %cst_180 : f32 to vector<16x1xf32>
    %420 = arith.divf %418, %419 : vector<16x1xf32>
    %421 = vector.broadcast %420 : vector<16x1xf32> to vector<16x32xf32>
    %422 = arith.subf %412, %421 : vector<16x32xf32>
    %423 = arith.mulf %422, %422 : vector<16x32xf32>
    %cst_181 = arith.constant dense<0.000000e+00> : vector<16xf32>
    %424 = vector.multi_reduction <add>, %423, %cst_181 [1] : vector<16x32xf32> to vector<16xf32>
    %425 = vector.shape_cast %424 : vector<16xf32> to vector<16x1xf32>
    %cst_182 = arith.constant 3.200000e+01 : f32
    %426 = vector.broadcast %cst_182 : f32 to vector<16x1xf32>
    %427 = arith.divf %425, %426 : vector<16x1xf32>
    %cst_183 = arith.constant 9.99999996E-13 : f32
    %428 = vector.broadcast %cst_183 : f32 to vector<16x1xf32>
    %429 = arith.addf %427, %428 : vector<16x1xf32>
    %430 = math.rsqrt %429 : vector<16x1xf32>
    %431 = vector.broadcast %430 : vector<16x1xf32> to vector<16x32xf32>
    %432 = arith.mulf %422, %431 : vector<16x32xf32>
    %433 = vector.broadcast %414 : vector<1x32xf32> to vector<16x32xf32>
    %434 = arith.mulf %432, %433 : vector<16x32xf32>
    %435 = vector.broadcast %416 : vector<1x32xf32> to vector<16x32xf32>
    %436 = arith.addf %434, %435 : vector<16x32xf32>
    %437 = arith.truncf %436 : vector<16x32xf32> to vector<16x32xbf16>
    %c1_184 = arith.constant 1 : index
    %c0_185 = arith.constant 0 : index
    %c256_186 = arith.constant 256 : index
    %438 = vector.load %arg2[%c1_184, %c0_185, %c256_186] : memref<2x32x384xbf16, #tpu.memory_space<vmem>>, vector<1x32x64xbf16>
    %439 = vector.shape_cast %438 : vector<1x32x64xbf16> to vector<32x64xbf16>
    %cst_187 = arith.constant dense<0.000000e+00> : vector<16x64xf32>
    %440 = tpu.matmul %437, %439, %cst_187 {dimension_numbers = #tpu.dot_dimension_numbers<[1], [0], [0], [1], [0, 0, 1, 1], [], []>} : vector<16x32xbf16>, vector<32x64xbf16>, vector<16x64xf32> -> vector<16x64xf32>
    %c1_188 = arith.constant 1 : index
    %c2_189 = arith.constant 2 : index
    %c0_190 = arith.constant 0 : index
    %441 = vector.load %arg4[%c1_188, %c2_189, %c0_190] : memref<2x8x128xf32, #tpu.memory_space<vmem>>, vector<1x1x64xf32>
    %442 = vector.shape_cast %441 : vector<1x1x64xf32> to vector<1x64xf32>
    %443 = vector.broadcast %442 : vector<1x64xf32> to vector<16x64xf32>
    %444 = arith.addf %440, %443 : vector<16x64xf32>
    %cst_191 = arith.constant 5.000000e-01 : f32
    %445 = vector.broadcast %cst_191 : f32 to vector<16x64xf32>
    %446 = arith.mulf %445, %444 : vector<16x64xf32>
    %cst_192 = arith.constant 4.471500e-02 : f32
    %447 = vector.broadcast %cst_192 : f32 to vector<16x64xf32>
    %448 = arith.mulf %447, %444 : vector<16x64xf32>
    %449 = arith.mulf %448, %444 : vector<16x64xf32>
    %450 = arith.mulf %449, %444 : vector<16x64xf32>
    %451 = arith.addf %444, %450 : vector<16x64xf32>
    %cst_193 = arith.constant 0.797884583 : f32
    %452 = vector.broadcast %cst_193 : f32 to vector<16x64xf32>
    %453 = arith.mulf %452, %451 : vector<16x64xf32>
    %454 = math.tanh %453 : vector<16x64xf32>
    %cst_194 = arith.constant 1.000000e+00 : f32
    %455 = vector.broadcast %cst_194 : f32 to vector<16x64xf32>
    %456 = arith.addf %455, %454 : vector<16x64xf32>
    %457 = arith.mulf %446, %456 : vector<16x64xf32>
    %458 = arith.truncf %457 : vector<16x64xf32> to vector<16x64xbf16>
    %c1_195 = arith.constant 1 : index
    %c0_196 = arith.constant 0 : index
    %c0_197 = arith.constant 0 : index
    %459 = vector.load %arg3[%c1_195, %c0_196, %c0_197] : memref<2x64x32xbf16, #tpu.memory_space<vmem>>, vector<1x64x32xbf16>
    %460 = vector.shape_cast %459 : vector<1x64x32xbf16> to vector<64x32xbf16>
    %cst_198 = arith.constant dense<0.000000e+00> : vector<16x32xf32>
    %461 = tpu.matmul %458, %460, %cst_198 {dimension_numbers = #tpu.dot_dimension_numbers<[1], [0], [0], [1], [0, 0, 1, 1], [], []>} : vector<16x64xbf16>, vector<64x32xbf16>, vector<16x32xf32> -> vector<16x32xf32>
    %c1_199 = arith.constant 1 : index
    %c3_200 = arith.constant 3 : index
    %c0_201 = arith.constant 0 : index
    %462 = vector.load %arg4[%c1_199, %c3_200, %c0_201] : memref<2x8x128xf32, #tpu.memory_space<vmem>>, vector<1x1x32xf32>
    %463 = vector.shape_cast %462 : vector<1x1x32xf32> to vector<1x32xf32>
    %464 = vector.broadcast %463 : vector<1x32xf32> to vector<16x32xf32>
    %465 = arith.addf %461, %464 : vector<16x32xf32>
    %466 = arith.addf %465, %436 : vector<16x32xf32>
    %c1_202 = arith.constant 1 : index
    %c6_203 = arith.constant 6 : index
    %c0_204 = arith.constant 0 : index
    %467 = vector.load %arg4[%c1_202, %c6_203, %c0_204] : memref<2x8x128xf32, #tpu.memory_space<vmem>>, vector<1x1x32xf32>
    %468 = vector.shape_cast %467 : vector<1x1x32xf32> to vector<1x32xf32>
    %c1_205 = arith.constant 1 : index
    %c7_206 = arith.constant 7 : index
    %c0_207 = arith.constant 0 : index
    %469 = vector.load %arg4[%c1_205, %c7_206, %c0_207] : memref<2x8x128xf32, #tpu.memory_space<vmem>>, vector<1x1x32xf32>
    %470 = vector.shape_cast %469 : vector<1x1x32xf32> to vector<1x32xf32>
    %cst_208 = arith.constant dense<0.000000e+00> : vector<16xf32>
    %471 = vector.multi_reduction <add>, %466, %cst_208 [1] : vector<16x32xf32> to vector<16xf32>
    %472 = vector.shape_cast %471 : vector<16xf32> to vector<16x1xf32>
    %cst_209 = arith.constant 3.200000e+01 : f32
    %473 = vector.broadcast %cst_209 : f32 to vector<16x1xf32>
    %474 = arith.divf %472, %473 : vector<16x1xf32>
    %475 = vector.broadcast %474 : vector<16x1xf32> to vector<16x32xf32>
    %476 = arith.subf %466, %475 : vector<16x32xf32>
    %477 = arith.mulf %476, %476 : vector<16x32xf32>
    %cst_210 = arith.constant dense<0.000000e+00> : vector<16xf32>
    %478 = vector.multi_reduction <add>, %477, %cst_210 [1] : vector<16x32xf32> to vector<16xf32>
    %479 = vector.shape_cast %478 : vector<16xf32> to vector<16x1xf32>
    %cst_211 = arith.constant 3.200000e+01 : f32
    %480 = vector.broadcast %cst_211 : f32 to vector<16x1xf32>
    %481 = arith.divf %479, %480 : vector<16x1xf32>
    %cst_212 = arith.constant 9.99999996E-13 : f32
    %482 = vector.broadcast %cst_212 : f32 to vector<16x1xf32>
    %483 = arith.addf %481, %482 : vector<16x1xf32>
    %484 = math.rsqrt %483 : vector<16x1xf32>
    %485 = vector.broadcast %484 : vector<16x1xf32> to vector<16x32xf32>
    %486 = arith.mulf %476, %485 : vector<16x32xf32>
    %487 = vector.broadcast %468 : vector<1x32xf32> to vector<16x32xf32>
    %488 = arith.mulf %486, %487 : vector<16x32xf32>
    %489 = vector.broadcast %470 : vector<1x32xf32> to vector<16x32xf32>
    %490 = arith.addf %488, %489 : vector<16x32xf32>
    %491 = arith.truncf %490 : vector<16x32xf32> to vector<16x32xbf16>
    %c0_213 = arith.constant 0 : index
    %c0_214 = arith.constant 0 : index
    %492 = vector.load %arg5[%c0_213, %c0_214] : memref<32x384xbf16, #tpu.memory_space<vmem>>, vector<32x128xbf16>
    %cst_215 = arith.constant dense<0.000000e+00> : vector<16x128xf32>
    %493 = tpu.matmul %491, %492, %cst_215 {dimension_numbers = #tpu.dot_dimension_numbers<[1], [0], [0], [1], [0, 0, 1, 1], [], []>} : vector<16x32xbf16>, vector<32x128xbf16>, vector<16x128xf32> -> vector<16x128xf32>
    %c0_216 = arith.constant 0 : index
    %c0_217 = arith.constant 0 : index
    %494 = vector.load %arg6[%c0_216, %c0_217] : memref<8x128xf32, #tpu.memory_space<vmem>>, vector<1x128xf32>
    %495 = vector.broadcast %494 : vector<1x128xf32> to vector<16x128xf32>
    %496 = arith.addf %493, %495 : vector<16x128xf32>
    %c0_218 = arith.constant 0 : index
    %c0_219 = arith.constant 0 : index
    %497 = vector.load %arg7[%c0_218, %c0_219] : memref<16x128xf32, #tpu.memory_space<vmem>>, vector<16x128xf32>
    tpu.vector_store %arg7[%c0_218, %c0_219], %496 {strides = array<i32>} : memref<16x128xf32, #tpu.memory_space<vmem>>, vector<16x128xf32>,
    %498 = vector.extract_strided_slice %490 {offsets = [0, 0], sizes = [1, 32], strides = [1, 1]} : vector<16x32xf32> to vector<1x32xf32>
    %499 = vector.extract_strided_slice %490 {offsets = [8, 0], sizes = [1, 32], strides = [1, 1]} : vector<16x32xf32> to vector<1x32xf32>
    %500 = tpu.concatenate %498, %499 in 0 : vector<1x32xf32>, vector<1x32xf32> -> vector<2x32xf32>
    %501 = arith.truncf %500 : vector<2x32xf32> to vector<2x32xbf16>
    %c0_220 = arith.constant 0 : index
    %c128_221 = arith.constant 128 : index
    %502 = vector.load %arg5[%c0_220, %c128_221] : memref<32x384xbf16, #tpu.memory_space<vmem>>, vector<32x32xbf16>
    %cst_222 = arith.constant dense<0.000000e+00> : vector<2x32xf32>
    %503 = tpu.matmul %501, %502, %cst_222 {dimension_numbers = #tpu.dot_dimension_numbers<[1], [0], [0], [1], [0, 0, 1, 1], [], []>} : vector<2x32xbf16>, vector<32x32xbf16>, vector<2x32xf32> -> vector<2x32xf32>
    %c3_223 = arith.constant 3 : index
    %c0_224 = arith.constant 0 : index
    %504 = vector.load %arg6[%c3_223, %c0_224] : memref<8x128xf32, #tpu.memory_space<vmem>>, vector<1x32xf32>
    %505 = vector.broadcast %504 : vector<1x32xf32> to vector<2x32xf32>
    %506 = arith.addf %503, %505 : vector<2x32xf32>
    %507 = math.tanh %506 : vector<2x32xf32>
    %508 = arith.truncf %507 : vector<2x32xf32> to vector<2x32xbf16>
    %c0_225 = arith.constant 0 : index
    %c256_226 = arith.constant 256 : index
    %509 = vector.load %arg5[%c0_225, %c256_226] : memref<32x384xbf16, #tpu.memory_space<vmem>>, vector<32x128xbf16>
    %cst_227 = arith.constant dense<0.000000e+00> : vector<2x128xf32>
    %510 = tpu.matmul %508, %509, %cst_227 {dimension_numbers = #tpu.dot_dimension_numbers<[1], [0], [0], [1], [0, 0, 1, 1], [], []>} : vector<2x32xbf16>, vector<32x128xbf16>, vector<2x128xf32> -> vector<2x128xf32>
    %c4_228 = arith.constant 4 : index
    %c0_229 = arith.constant 0 : index
    %511 = vector.load %arg6[%c4_228, %c0_229] : memref<8x128xf32, #tpu.memory_space<vmem>>, vector<1x128xf32>
    %512 = vector.broadcast %511 : vector<1x128xf32> to vector<2x128xf32>
    %513 = arith.addf %510, %512 : vector<2x128xf32>
    %c0_230 = arith.constant 0 : index
    %c0_231 = arith.constant 0 : index
    %514 = vector.load %arg8[%c0_230, %c0_231] : memref<2x128xf32, #tpu.memory_space<vmem>>, vector<2x128xf32>
    tpu.vector_store %arg8[%c0_230, %c0_231], %513 {strides = array<i32>} : memref<2x128xf32, #tpu.memory_space<vmem>>, vector<2x128xf32>,
    return
  }
}

</mosaic_0001>

<llo_original>
// kernel: dyslexia_text_adapter_forward.1
$region0: #{dyslexia_text_adapter_forward.1}
  #allocation0 [shape = 'u32[]', space=smem, size = 0x4, offset = 0x4, fixed_abs, tag = 'smem constant byte address 0x4 - core index']
  #allocation1 [shape = 'u32[72,128]{1,0:T(1,128)}', space=vmem, size = 0x9000, scoped, tag = 'internal scratch']
  #allocation2 [shape = 'f32[16,32]{1,0:T(8,128)}', space=vmem, size = 0x2000, scoped, tag = 'scratch operand']
  %s0 = inlined_call_operand.vmem [shape: f32[16,32], index: 0, kind: input, shape index: {}]
  %s1 = inlined_call_operand.vmem [shape: f32[2,8], index: 1, kind: input, shape index: {}]
  %s2 = inlined_call_operand.vmem [shape: bf16[2,32,384], index: 2, kind: input, shape index: {}]
  %s3 = inlined_call_operand.vmem [shape: bf16[2,64,32], index: 3, kind: input, shape index: {}]
  %s4 = inlined_call_operand.vmem [shape: f32[2,8,128], index: 4, kind: input, shape index: {}]
  %s5 = inlined_call_operand.vmem [shape: bf16[32,384], index: 5, kind: input, shape index: {}]
  %s6 = inlined_call_operand.vmem [shape: f32[8,128], index: 6, kind: input, shape index: {}]
  %s7 = inlined_call_operand.hbm [shape: f32[16,128], index: 7, kind: output, shape index: {0}]
  %s8 = inlined_call_operand.vmem [shape: f32[2,128], index: 8, kind: output, shape index: {1}]
  %9 = xla_tuple %s7, %s8
  %s10 = sld [smem:[#allocation0]]
  $region46: #{dyslexia_text_adapter_forward.1} parent=0
    _
  %s12 = ssub.s32 1, %s10
  %s13 = scalar_select 0, %s12, %s10
  $region1: #{dyslexia_text_adapter_forward.1} parent=0
    #allocation3 [shape = 'u8[8192]{0}', space=vmem, size = 0x2000, scoped, tag = 'output window, operand 0, single buffered']
    #allocation4 [shape = 's32[1]{0}', space=sflag, size = 0x4, scoped, tag = 'scoped memory for dyslexia_text_adapter_forward.1']
    %14 = vsyncpa [#allocation4], 0
    // Predicated region
    $region2: #{dyslexia_text_adapter_forward.1} parent=1 // pred_check
      _
    $region3: #{dyslexia_text_adapter_forward.1} parent=1 // pred_check_branch
      %16 = sbr.rel (0) target = $region5
    $region4: #{dyslexia_text_adapter_forward.1} parent=1 // pred_region
      _
    $region5: #{dyslexia_text_adapter_forward.1} parent=1 // pred_fallthru
      _
    // Predicated region
    $region6: #{dyslexia_text_adapter_forward.1} parent=1 // pred_check
      _
    $region7: #{dyslexia_text_adapter_forward.1} parent=1 // pred_check_branch
      %18 = sbr.rel (0) target = $region9
    $region8: #{dyslexia_text_adapter_forward.1} parent=1 // pred_region
      _
    $region9: #{dyslexia_text_adapter_forward.1} parent=1 // pred_fallthru
      _
    // Predicated region
    $region10: #{dyslexia_text_adapter_forward.1} parent=1 // pred_check
      _
    $region11: #{dyslexia_text_adapter_forward.1} parent=1 // pred_check_branch
      %20 = sbr.rel (0) target = $region13
    $region12: #{dyslexia_text_adapter_forward.1} parent=1 // pred_region
      _
    $region13: #{dyslexia_text_adapter_forward.1} parent=1 // pred_fallthru
      _
    // Predicated region
    $region14: #{dyslexia_text_adapter_forward.1} parent=1 // pred_check
      _
    $region15: #{dyslexia_text_adapter_forward.1} parent=1 // pred_check_branch
      %22 = sbr.rel (0) target = $region17
    $region16: #{dyslexia_text_adapter_forward.1} parent=1 // pred_region
      _
    $region17: #{dyslexia_text_adapter_forward.1} parent=1 // pred_fallthru
      _
    // Predicated region
    $region18: #{dyslexia_text_adapter_forward.1} parent=1 // pred_check
      _
    $region19: #{dyslexia_text_adapter_forward.1} parent=1 // pred_check_branch
      %24 = sbr.rel (0) target = $region21
    $region20: #{dyslexia_text_adapter_forward.1} parent=1 // pred_region
      _
    $region21: #{dyslexia_text_adapter_forward.1} parent=1 // pred_fallthru
      _
    // Predicated region
    $region22: #{dyslexia_text_adapter_forward.1} parent=1 // pred_check
      _
    $region23: #{dyslexia_text_adapter_forward.1} parent=1 // pred_check_branch
      %26 = sbr.rel (0) target = $region25
    $region24: #{dyslexia_text_adapter_forward.1} parent=1 // pred_region
      _
    $region25: #{dyslexia_text_adapter_forward.1} parent=1 // pred_fallthru
      _
    // Predicated region
    $region26: #{dyslexia_text_adapter_forward.1} parent=1 // pred_check
      _
    $region27: #{dyslexia_text_adapter_forward.1} parent=1 // pred_check_branch
      %28 = sbr.rel (0) target = $region29
    $region28: #{dyslexia_text_adapter_forward.1} parent=1 // pred_region
      _
    $region29: #{dyslexia_text_adapter_forward.1} parent=1 // pred_fallthru
      _
    %v30 = vld [vmem:[%s0] sm:$0xff]
    %v31 = vld [vmem:[%s0 + $0x8] sm:$0xff]
    %v32 = vld [vmem:[%s6 + $0x1] sm:$0x1]
    %v33 = vld [vmem:[%s6 + $0x2] sm:$0x1]
    %vm34 = vcmask 261120
    %v35 = vsel %vm34, %v30, 0.0
    %36 = vadd.xlane.f32.xlu0 %v35
    %v37 = vpop.xlane.xlu0 %36
    %v38 = vsel %vm34, %v31, 0.0
    %39 = vadd.xlane.f32.xlu0 %v38
    %v40 = vpop.xlane.xlu0 %39
    %v41 = vrcp.pop 32.0
    %v42 = vmul.f32 32.0, %v41
    %v43 = vsub.f32 1.0, %v42
    %v44 = vmul.f32 %v41, %v43
    %v45 = vadd.f32 %v41, %v44
    %vm46 = vweird.f32 %v41
    %v47 = vsel %vm46, %v41, %v45
    %v48 = vmul.f32 %v37, %v47
    %v49 = vmul.f32 %v40, %v47
    %v50 = vsub.f32 %v30, %v48
    %v51 = vsub.f32 %v31, %v49
    %v52 = vmul.f32 %v50, %v50
    %v53 = vmul.f32 %v51, %v51
    %v54 = vsel %vm34, %v52, 0.0
    %55 = vadd.xlane.f32.xlu0 %v54
    %v56 = vpop.xlane.xlu0 %55
    %v57 = vsel %vm34, %v53, 0.0
    %58 = vadd.xlane.f32.xlu0 %v57
    %v59 = vpop.xlane.xlu0 %58
    %v60 = vmul.f32 %v56, %v47
    %v61 = vmul.f32 %v59, %v47
    %v62 = vadd.f32 %v60, 1e-12
    %v63 = vadd.f32 %v61, 1e-12
    %v64 = vrsqrt.pop %v62
    %v65 = vmul.f32 %v64, %v62
    %v66 = vmul.f32 %v65, %v64
    %v67 = vmul.f32 0.5, %v66
    %v68 = vsub.f32 1.5, %v67
    %v69 = vmul.f32 %v64, %v68
    %vm70 = vweird.f32 %v62
    %vm71 = vweird.f32 %v64
    %vm72 = vmor %vm70, %vm71
    %v73 = vsel %vm72, %v64, %v69
    %v74 = vrsqrt.pop %v63
    %v75 = vmul.f32 %v74, %v63
    %v76 = vmul.f32 %v75, %v74
    %v77 = vmul.f32 0.5, %v76
    %v78 = vsub.f32 1.5, %v77
    %v79 = vmul.f32 %v74, %v78
    %vm80 = vweird.f32 %v63
    %vm81 = vweird.f32 %v74
    %vm82 = vmor %vm80, %vm81
    %v83 = vsel %vm82, %v74, %v79
    %v84 = vmul.f32 %v50, %v73
    %v85 = vmul.f32 %v51, %v83
    %v86 = vperm.slane %v32, 0
    %v87 = vmul.f32 %v84, %v86
    %v88 = vmul.f32 %v85, %v86
    %v89 = vperm.slane %v33, 0
    %v90 = vadd.f32 %v87, %v89
    %v91 = vadd.f32 %v88, %v89
    %v92 = vpack.c.bf16 %v91, %v90
    %v93 = vld [vmem:[%s2] sm:$0xf]
    %v94 = vld [vmem:[%s2 + $0xc] sm:$0xf]
    %v95 = vld [vmem:[%s2 + $0x18] sm:$0xf]
    %v96 = vld [vmem:[%s2 + $0x24] sm:$0xf]
    %v97 = vld [vmem:[%s4] sm:$0x1]
    %v98 = vperm.slane %v97, 0
    %v103 = vunpack.c.l.b16 %v93
    %v104 = vunpack.c.l.b16 %v94
    %v105 = vunpack.c.l.b16 %v95
    %v106 = vunpack.c.l.b16 %v96
    %v107 = vpack.c.b16 %v104, %v103
    %v108 = vpack.c.b16 %v106, %v105
    %v112 = vsel %vm34, %v92, 0
    %114 = vmatpush.bf16.msra.mxu0 0
    %115 = vmatpush.bf16.msra.mxu0 0
    %116 = vmatpush.bf16.msra.mxu0 0
    %117 = vmatpush.bf16.msra.mxu0 0
    %118 = vmatpush.bf16.msra.mxu0 0
    %119 = vmatpush.bf16.msra.mxu0 0
    %120 = vmatpush.bf16.msra.mxu0 %v108
    %121 = vmatpush.bf16.msra.mxu0 %v107
    %122 = vmatmul.bf16.gmra.mxu0 %v112
    %v123 = vpop.f32.mrf.mxu0
    %v124 = vadd.f32 %v98, %v123
    %v125 = vpop.f32.mrf.mxu0
    %v126 = vadd.f32 %v98, %v125
    %127 = vdwg.mxu0
    %v128 = vld [vmem:[%s1] sm:$0x1]
    %v129 = vperm.slane %v128, 0
    %131 = vrot.lane.b32.xlu0 %v124, 96
    %v132 = vpop.permute.xlu0 %131
    %vm133 = vcmask 64512
    %v134 = vsel %vm133, %v124, 0
    %v136 = vsel %vm133, %v132, 0
    %138 = vmatpush.xpose.msra.mxu0 0.0
    %139 = vmatpush.xpose.msra.mxu0 0.0
    %140 = vmatpush.xpose.msra.mxu0 0.0
    %141 = vmatpush.xpose.msra.mxu0 0.0
    %142 = vmatpush.xpose.msra.mxu0 0.0
    %143 = vmatpush.xpose.msra.mxu0 0.0
    %144 = vmatpush.xpose.msra.mxu0 0.0
    %145 = vmatpush.xpose.msra.mxu0 0.0
    %146 = vmatpush.xpose.msra.mxu0 0.0
    %147 = vmatpush.xpose.msra.mxu0 0.0
    %148 = vmatpush.xpose.msra.mxu0 0.0
    %149 = vmatpush.xpose.msra.mxu0 0.0
    %150 = vmatpush.xpose.msra.mxu0 0.0
    %151 = vmatpush.xpose.msra.mxu0 0.0
    %152 = vmatpush.xpose.msra.mxu0 0.0
    %153 = vmatpush.xpose.msra.mxu0 %v136
    %154 = vmatmul.f32.gmra.mxu0 %v134
    %v155 = vpop.f32.mrf.mxu0
    %v156 = vadd.f32 %v129, %v155
    %157 = vdwg.mxu0
    %v158 = vsel %vm133, %v156, -inf
    %159 = vmax.xlane.f32.xlu0 %v158
    %v160 = vpop.xlane.xlu0 %159
    %v161 = vsub.f32 %v156, %v160
    %v162 = vmul.f32 %v161, 1.442695
    %v163 = vpow.pop %v162
    %v164 = vsel %vm133, %v163, 0.0
    %165 = vadd.xlane.f32.xlu0 %v164
    %v166 = vpop.xlane.xlu0 %165
    %v167 = vrcp.pop %v166
    %v168 = vmul.f32 %v166, %v167
    %v169 = vsub.f32 1.0, %v168
    %v170 = vmul.f32 %v167, %v169
    %v171 = vadd.f32 %v167, %v170
    %vm172 = vweird.f32 %v166
    %vm173 = vweird.f32 %v167
    %vm174 = vmor %vm172, %vm173
    %v175 = vsel %vm174, %v167, %v171
    %v176 = vand.u32 2147483647, %v166
    %vm177 = vcmp.eq.f32.partialorder %v176, 8.507059e+37
    %v178 = vand.u32 %v166, 2147483648
    %v179 = vor.u32 1.1754944e-38, %v178
    %v180 = vsel %vm177, %v179, %v175
    %v181 = vmul.f32 %v163, %v180
    %182 = vrot.lane.b32.xlu0 %v124, 64
    %v183 = vpop.permute.xlu0 %182
    %v186 = vsel %vm133, %v181, 0
    %188 = vmatpush.msra.mxu0 0.0
    %189 = vmatpush.msra.mxu0 0.0
    %190 = vmatpush.msra.mxu0 0.0
    %191 = vmatpush.msra.mxu0 0.0
    %192 = vmatpush.msra.mxu0 0.0
    %193 = vmatpush.msra.mxu0 0.0
    %194 = vmatpush.msra.mxu0 0.0
    %195 = vmatpush.msra.mxu0 0.0
    %196 = vmatpush.msra.mxu0 0.0
    %197 = vmatpush.msra.mxu0 0.0
    %198 = vmatpush.msra.mxu0 0.0
    %199 = vmatpush.msra.mxu0 0.0
    %200 = vmatpush.msra.mxu0 0.0
    %201 = vmatpush.msra.mxu0 0.0
    %202 = vmatpush.msra.mxu0 0.0
    %203 = vmatpush.msra.mxu0 %v183
    %204 = vmatmul.f32.gmra.mxu0 %v186
    %v205 = vpop.f32.mrf.mxu0
    %v206 = vadd.f32 0.0, %v205
    %207 = vdwg.mxu0
    %208 = vst.msk [vmem:[#allocation2] sm:$0xff] %vm133, %v206
    %209 = vrot.lane.b32.xlu0 %v124, 120
    %v210 = vpop.permute.xlu0 %209
    %211 = vrot.lane.b32.xlu0 %v124, 88
    %v212 = vpop.permute.xlu0 %211
    %v213 = vsel %vm133, %v210, 0
    %v215 = vsel %vm133, %v212, 0
    %217 = vmatpush.xpose.msra.mxu0 0.0
    %218 = vmatpush.xpose.msra.mxu0 0.0
    %219 = vmatpush.xpose.msra.mxu0 0.0
    %220 = vmatpush.xpose.msra.mxu0 0.0
    %221 = vmatpush.xpose.msra.mxu0 0.0
    %222 = vmatpush.xpose.msra.mxu0 0.0
    %223 = vmatpush.xpose.msra.mxu0 0.0
    %224 = vmatpush.xpose.msra.mxu0 0.0
    %225 = vmatpush.xpose.msra.mxu0 0.0
    %226 = vmatpush.xpose.msra.mxu0 0.0
    %227 = vmatpush.xpose.msra.mxu0 0.0
    %228 = vmatpush.xpose.msra.mxu0 0.0
    %229 = vmatpush.xpose.msra.mxu0 0.0
    %230 = vmatpush.xpose.msra.mxu0 0.0
    %231 = vmatpush.xpose.msra.mxu0 0.0
    %232 = vmatpush.xpose.msra.mxu0 %v215
    %233 = vmatmul.f32.gmra.mxu0 %v213
    %v234 = vpop.f32.mrf.mxu0
    %v235 = vadd.f32 %v129, %v234
    %236 = vdwg.mxu0
    %v237 = vsel %vm133, %v235, -inf
    %238 = vmax.xlane.f32.xlu0 %v237
    %v239 = vpop.xlane.xlu0 %238
    %v240 = vsub.f32 %v235, %v239
    %v241 = vmul.f32 %v240, 1.442695
    %v242 = vpow.pop %v241
    %v243 = vsel %vm133, %v242, 0.0
    %244 = vadd.xlane.f32.xlu0 %v243
    %v245 = vpop.xlane.xlu0 %244
    %v246 = vrcp.pop %v245
    %v247 = vmul.f32 %v245, %v246
    %v248 = vsub.f32 1.0, %v247
    %v249 = vmul.f32 %v246, %v248
    %v250 = vadd.f32 %v246, %v249
    %vm251 = vweird.f32 %v245
    %vm252 = vweird.f32 %v246
    %vm253 = vmor %vm251, %vm252
    %v254 = vsel %vm253, %v246, %v250
    %v255 = vand.u32 2147483647, %v245
    %vm256 = vcmp.eq.f32.partialorder %v255, 8.507059e+37
    %v257 = vand.u32 %v245, 2147483648
    %v258 = vor.u32 1.1754944e-38, %v257
    %v259 = vsel %vm256, %v258, %v254
    %v260 = vmul.f32 %v242, %v259
    %261 = vrot.lane.b32.xlu0 %v124, 56
    %v262 = vpop.permute.xlu0 %261
    %v265 = vsel %vm133, %v260, 0
    %267 = vmatpush.msra.mxu0 0.0
    %268 = vmatpush.msra.mxu0 0.0
    %269 = vmatpush.msra.mxu0 0.0
    %270 = vmatpush.msra.mxu0 0.0
    %271 = vmatpush.msra.mxu0 0.0
    %272 = vmatpush.msra.mxu0 0.0
    %273 = vmatpush.msra.mxu0 0.0
    %274 = vmatpush.msra.mxu0 0.0
    %275 = vmatpush.msra.mxu0 0.0
    %276 = vmatpush.msra.mxu0 0.0
    %277 = vmatpush.msra.mxu0 0.0
    %278 = vmatpush.msra.mxu0 0.0
    %279 = vmatpush.msra.mxu0 0.0
    %280 = vmatpush.msra.mxu0 0.0
    %281 = vmatpush.msra.mxu0 0.0
    %282 = vmatpush.msra.mxu0 %v262
    %283 = vmatmul.f32.gmra.mxu0 %v265
    %v284 = vpop.f32.mrf.mxu0
    %v285 = vadd.f32 0.0, %v284
    %286 = vdwg.mxu0
    %288 = vrot.lane.b32.xlu0 %v285, 8
    %v289 = vpop.permute.xlu0 %288
    %vm291 = vcmask 130112
    %292 = vst.msk [vmem:[#allocation2] sm:$0xff] %vm291, %v289
    %293 = vrot.lane.b32.xlu0 %v124, 112
    %v294 = vpop.permute.xlu0 %293
    %295 = vrot.lane.b32.xlu0 %v124, 80
    %v296 = vpop.permute.xlu0 %295
    %v297 = vsel %vm133, %v294, 0
    %v299 = vsel %vm133, %v296, 0
    %301 = vmatpush.xpose.msra.mxu0 0.0
    %302 = vmatpush.xpose.msra.mxu0 0.0
    %303 = vmatpush.xpose.msra.mxu0 0.0
    %304 = vmatpush.xpose.msra.mxu0 0.0
    %305 = vmatpush.xpose.msra.mxu0 0.0
    %306 = vmatpush.xpose.msra.mxu0 0.0
    %307 = vmatpush.xpose.msra.mxu0 0.0
    %308 = vmatpush.xpose.msra.mxu0 0.0
    %309 = vmatpush.xpose.msra.mxu0 0.0
    %310 = vmatpush.xpose.msra.mxu0 0.0
    %311 = vmatpush.xpose.msra.mxu0 0.0
    %312 = vmatpush.xpose.msra.mxu0 0.0
    %313 = vmatpush.xpose.msra.mxu0 0.0
    %314 = vmatpush.xpose.msra.mxu0 0.0
    %315 = vmatpush.xpose.msra.mxu0 0.0
    %316 = vmatpush.xpose.msra.mxu0 %v299
    %317 = vmatmul.f32.gmra.mxu0 %v297
    %v318 = vpop.f32.mrf.mxu0
    %v319 = vadd.f32 %v129, %v318
    %320 = vdwg.mxu0
    %v321 = vsel %vm133, %v319, -inf
    %322 = vmax.xlane.f32.xlu0 %v321
    %v323 = vpop.xlane.xlu0 %322
    %v324 = vsub.f32 %v319, %v323
    %v325 = vmul.f32 %v324, 1.442695
    %v326 = vpow.pop %v325
    %v327 = vsel %vm133, %v326, 0.0
    %328 = vadd.xlane.f32.xlu0 %v327
    %v329 = vpop.xlane.xlu0 %328
    %v330 = vrcp.pop %v329
    %v331 = vmul.f32 %v329, %v330
    %v332 = vsub.f32 1.0, %v331
    %v333 = vmul.f32 %v330, %v332
    %v334 = vadd.f32 %v330, %v333
    %vm335 = vweird.f32 %v329
    %vm336 = vweird.f32 %v330
    %vm337 = vmor %vm335, %vm336
    %v338 = vsel %vm337, %v330, %v334
    %v339 = vand.u32 2147483647, %v329
    %vm340 = vcmp.eq.f32.partialorder %v339, 8.507059e+37
    %v341 = vand.u32 %v329, 2147483648
    %v342 = vor.u32 1.1754944e-38, %v341
    %v343 = vsel %vm340, %v342, %v338
    %v344 = vmul.f32 %v326, %v343
    %345 = vrot.lane.b32.xlu0 %v124, 48
    %v346 = vpop.permute.xlu0 %345
    %v349 = vsel %vm133, %v344, 0
    %351 = vmatpush.msra.mxu0 0.0
    %352 = vmatpush.msra.mxu0 0.0
    %353 = vmatpush.msra.mxu0 0.0
    %354 = vmatpush.msra.mxu0 0.0
    %355 = vmatpush.msra.mxu0 0.0
    %356 = vmatpush.msra.mxu0 0.0
    %357 = vmatpush.msra.mxu0 0.0
    %358 = vmatpush.msra.mxu0 0.0
    %359 = vmatpush.msra.mxu0 0.0
    %360 = vmatpush.msra.mxu0 0.0
    %361 = vmatpush.msra.mxu0 0.0
    %362 = vmatpush.msra.mxu0 0.0
    %363 = vmatpush.msra.mxu0 0.0
    %364 = vmatpush.msra.mxu0 0.0
    %365 = vmatpush.msra.mxu0 0.0
    %366 = vmatpush.msra.mxu0 %v346
    %367 = vmatmul.f32.gmra.mxu0 %v349
    %v368 = vpop.f32.mrf.mxu0
    %v369 = vadd.f32 0.0, %v368
    %370 = vdwg.mxu0
    %372 = vrot.lane.b32.xlu0 %v369, 16
    %v373 = vpop.permute.xlu0 %372
    %vm375 = vcmask 195712
    %376 = vst.msk [vmem:[#allocation2] sm:$0xff] %vm375, %v373
    %377 = vrot.lane.b32.xlu0 %v124, 104
    %v378 = vpop.permute.xlu0 %377
    %379 = vrot.lane.b32.xlu0 %v124, 72
    %v380 = vpop.permute.xlu0 %379
    %v381 = vsel %vm133, %v378, 0
    %v383 = vsel %vm133, %v380, 0
    %385 = vmatpush.xpose.msra.mxu0 0.0
    %386 = vmatpush.xpose.msra.mxu0 0.0
    %387 = vmatpush.xpose.msra.mxu0 0.0
    %388 = vmatpush.xpose.msra.mxu0 0.0
    %389 = vmatpush.xpose.msra.mxu0 0.0
    %390 = vmatpush.xpose.msra.mxu0 0.0
    %391 = vmatpush.xpose.msra.mxu0 0.0
    %392 = vmatpush.xpose.msra.mxu0 0.0
    %393 = vmatpush.xpose.msra.mxu0 0.0
    %394 = vmatpush.xpose.msra.mxu0 0.0
    %395 = vmatpush.xpose.msra.mxu0 0.0
    %396 = vmatpush.xpose.msra.mxu0 0.0
    %397 = vmatpush.xpose.msra.mxu0 0.0
    %398 = vmatpush.xpose.msra.mxu0 0.0
    %399 = vmatpush.xpose.msra.mxu0 0.0
    %400 = vmatpush.xpose.msra.mxu0 %v383
    %401 = vmatmul.f32.gmra.mxu0 %v381
    %v402 = vpop.f32.mrf.mxu0
    %v403 = vadd.f32 %v129, %v402
    %404 = vdwg.mxu0
    %v405 = vsel %vm133, %v403, -inf
    %406 = vmax.xlane.f32.xlu0 %v405
    %v407 = vpop.xlane.xlu0 %406
    %v408 = vsub.f32 %v403, %v407
    %v409 = vmul.f32 %v408, 1.442695
    %v410 = vpow.pop %v409
    %v411 = vsel %vm133, %v410, 0.0
    %412 = vadd.xlane.f32.xlu0 %v411
    %v413 = vpop.xlane.xlu0 %412
    %v414 = vrcp.pop %v413
    %v415 = vmul.f32 %v413, %v414
    %v416 = vsub.f32 1.0, %v415
    %v417 = vmul.f32 %v414, %v416
    %v418 = vadd.f32 %v414, %v417
    %vm419 = vweird.f32 %v413
    %vm420 = vweird.f32 %v414
    %vm421 = vmor %vm419, %vm420
    %v422 = vsel %vm421, %v414, %v418
    %v423 = vand.u32 2147483647, %v413
    %vm424 = vcmp.eq.f32.partialorder %v423, 8.507059e+37
    %v425 = vand.u32 %v413, 2147483648
    %v426 = vor.u32 1.1754944e-38, %v425
    %v427 = vsel %vm424, %v426, %v422
    %v428 = vmul.f32 %v410, %v427
    %429 = vrot.lane.b32.xlu0 %v124, 40
    %v430 = vpop.permute.xlu0 %429
    %v433 = vsel %vm133, %v428, 0
    %435 = vmatpush.msra.mxu0 0.0
    %436 = vmatpush.msra.mxu0 0.0
    %437 = vmatpush.msra.mxu0 0.0
    %438 = vmatpush.msra.mxu0 0.0
    %439 = vmatpush.msra.mxu0 0.0
    %440 = vmatpush.msra.mxu0 0.0
    %441 = vmatpush.msra.mxu0 0.0
    %442 = vmatpush.msra.mxu0 0.0
    %443 = vmatpush.msra.mxu0 0.0
    %444 = vmatpush.msra.mxu0 0.0
    %445 = vmatpush.msra.mxu0 0.0
    %446 = vmatpush.msra.mxu0 0.0
    %447 = vmatpush.msra.mxu0 0.0
    %448 = vmatpush.msra.mxu0 0.0
    %449 = vmatpush.msra.mxu0 0.0
    %450 = vmatpush.msra.mxu0 %v430
    %451 = vmatmul.f32.gmra.mxu0 %v433
    %v452 = vpop.f32.mrf.mxu0
    %v453 = vadd.f32 0.0, %v452
    %454 = vdwg.mxu0
    %456 = vrot.lane.b32.xlu0 %v453, 24
    %v457 = vpop.permute.xlu0 %456
    %vm459 = vcmask 261312
    %460 = vst.msk [vmem:[#allocation2] sm:$0xff] %vm459, %v457
    %v461 = vld [vmem:[%s1 + $0x1] sm:$0x1]
    %v462 = vperm.slane %v461, 0
    %464 = vrot.lane.b32.xlu0 %v126, 96
    %v465 = vpop.permute.xlu0 %464
    %v466 = vsel %vm133, %v126, 0
    %v468 = vsel %vm133, %v465, 0
    %470 = vmatpush.xpose.msra.mxu0 0.0
    %471 = vmatpush.xpose.msra.mxu0 0.0
    %472 = vmatpush.xpose.msra.mxu0 0.0
    %473 = vmatpush.xpose.msra.mxu0 0.0
    %474 = vmatpush.xpose.msra.mxu0 0.0
    %475 = vmatpush.xpose.msra.mxu0 0.0
    %476 = vmatpush.xpose.msra.mxu0 0.0
    %477 = vmatpush.xpose.msra.mxu0 0.0
    %478 = vmatpush.xpose.msra.mxu0 0.0
    %479 = vmatpush.xpose.msra.mxu0 0.0
    %480 = vmatpush.xpose.msra.mxu0 0.0
    %481 = vmatpush.xpose.msra.mxu0 0.0
    %482 = vmatpush.xpose.msra.mxu0 0.0
    %483 = vmatpush.xpose.msra.mxu0 0.0
    %484 = vmatpush.xpose.msra.mxu0 0.0
    %485 = vmatpush.xpose.msra.mxu0 %v468
    %486 = vmatmul.f32.gmra.mxu0 %v466
    %v487 = vpop.f32.mrf.mxu0
    %v488 = vadd.f32 %v462, %v487
    %489 = vdwg.mxu0
    %v490 = vsel %vm133, %v488, -inf
    %491 = vmax.xlane.f32.xlu0 %v490
    %v492 = vpop.xlane.xlu0 %491
    %v493 = vsub.f32 %v488, %v492
    %v494 = vmul.f32 %v493, 1.442695
    %v495 = vpow.pop %v494
    %v496 = vsel %vm133, %v495, 0.0
    %497 = vadd.xlane.f32.xlu0 %v496
    %v498 = vpop.xlane.xlu0 %497
    %v499 = vrcp.pop %v498
    %v500 = vmul.f32 %v498, %v499
    %v501 = vsub.f32 1.0, %v500
    %v502 = vmul.f32 %v499, %v501
    %v503 = vadd.f32 %v499, %v502
    %vm504 = vweird.f32 %v498
    %vm505 = vweird.f32 %v499
    %vm506 = vmor %vm504, %vm505
    %v507 = vsel %vm506, %v499, %v503
    %v508 = vand.u32 2147483647, %v498
    %vm509 = vcmp.eq.f32.partialorder %v508, 8.507059e+37
    %v510 = vand.u32 %v498, 2147483648
    %v511 = vor.u32 1.1754944e-38, %v510
    %v512 = vsel %vm509, %v511, %v507
    %v513 = vmul.f32 %v495, %v512
    %514 = vrot.lane.b32.xlu0 %v126, 64
    %v515 = vpop.permute.xlu0 %514
    %v518 = vsel %vm133, %v513, 0
    %520 = vmatpush.msra.mxu0 0.0
    %521 = vmatpush.msra.mxu0 0.0
    %522 = vmatpush.msra.mxu0 0.0
    %523 = vmatpush.msra.mxu0 0.0
    %524 = vmatpush.msra.mxu0 0.0
    %525 = vmatpush.msra.mxu0 0.0
    %526 = vmatpush.msra.mxu0 0.0
    %527 = vmatpush.msra.mxu0 0.0
    %528 = vmatpush.msra.mxu0 0.0
    %529 = vmatpush.msra.mxu0 0.0
    %530 = vmatpush.msra.mxu0 0.0
    %531 = vmatpush.msra.mxu0 0.0
    %532 = vmatpush.msra.mxu0 0.0
    %533 = vmatpush.msra.mxu0 0.0
    %534 = vmatpush.msra.mxu0 0.0
    %535 = vmatpush.msra.mxu0 %v515
    %536 = vmatmul.f32.gmra.mxu0 %v518
    %v537 = vpop.f32.mrf.mxu0
    %v538 = vadd.f32 0.0, %v537
    %539 = vdwg.mxu0
    %540 = vst.msk [vmem:[#allocation2 + $0x8] sm:$0xff] %vm133, %v538
    %541 = vrot.lane.b32.xlu0 %v126, 120
    %v542 = vpop.permute.xlu0 %541
    %543 = vrot.lane.b32.xlu0 %v126, 88
    %v544 = vpop.permute.xlu0 %543
    %v545 = vsel %vm133, %v542, 0
    %v547 = vsel %vm133, %v544, 0
    %549 = vmatpush.xpose.msra.mxu0 0.0
    %550 = vmatpush.xpose.msra.mxu0 0.0
    %551 = vmatpush.xpose.msra.mxu0 0.0
    %552 = vmatpush.xpose.msra.mxu0 0.0
    %553 = vmatpush.xpose.msra.mxu0 0.0
    %554 = vmatpush.xpose.msra.mxu0 0.0
    %555 = vmatpush.xpose.msra.mxu0 0.0
    %556 = vmatpush.xpose.msra.mxu0 0.0
    %557 = vmatpush.xpose.msra.mxu0 0.0
    %558 = vmatpush.xpose.msra.mxu0 0.0
    %559 = vmatpush.xpose.msra.mxu0 0.0
    %560 = vmatpush.xpose.msra.mxu0 0.0
    %561 = vmatpush.xpose.msra.mxu0 0.0
    %562 = vmatpush.xpose.msra.mxu0 0.0
    %563 = vmatpush.xpose.msra.mxu0 0.0
    %564 = vmatpush.xpose.msra.mxu0 %v547
    %565 = vmatmul.f32.gmra.mxu0 %v545
    %v566 = vpop.f32.mrf.mxu0
    %v567 = vadd.f32 %v462, %v566
    %568 = vdwg.mxu0
    %v569 = vsel %vm133, %v567, -inf
    %570 = vmax.xlane.f32.xlu0 %v569
    %v571 = vpop.xlane.xlu0 %570
    %v572 = vsub.f32 %v567, %v571
    %v573 = vmul.f32 %v572, 1.442695
    %v574 = vpow.pop %v573
    %v575 = vsel %vm133, %v574, 0.0
    %576 = vadd.xlane.f32.xlu0 %v575
    %v577 = vpop.xlane.xlu0 %576
    %v578 = vrcp.pop %v577
    %v579 = vmul.f32 %v577, %v578
    %v580 = vsub.f32 1.0, %v579
    %v581 = vmul.f32 %v578, %v580
    %v582 = vadd.f32 %v578, %v581
    %vm583 = vweird.f32 %v577
    %vm584 = vweird.f32 %v578
    %vm585 = vmor %vm583, %vm584
    %v586 = vsel %vm585, %v578, %v582
    %v587 = vand.u32 2147483647, %v577
    %vm588 = vcmp.eq.f32.partialorder %v587, 8.507059e+37
    %v589 = vand.u32 %v577, 2147483648
    %v590 = vor.u32 1.1754944e-38, %v589
    %v591 = vsel %vm588, %v590, %v586
    %v592 = vmul.f32 %v574, %v591
    %593 = vrot.lane.b32.xlu0 %v126, 56
    %v594 = vpop.permute.xlu0 %593
    %v597 = vsel %vm133, %v592, 0
    %599 = vmatpush.msra.mxu0 0.0
    %600 = vmatpush.msra.mxu0 0.0
    %601 = vmatpush.msra.mxu0 0.0
    %602 = vmatpush.msra.mxu0 0.0
    %603 = vmatpush.msra.mxu0 0.0
    %604 = vmatpush.msra.mxu0 0.0
    %605 = vmatpush.msra.mxu0 0.0
    %606 = vmatpush.msra.mxu0 0.0
    %607 = vmatpush.msra.mxu0 0.0
    %608 = vmatpush.msra.mxu0 0.0
    %609 = vmatpush.msra.mxu0 0.0
    %610 = vmatpush.msra.mxu0 0.0
    %611 = vmatpush.msra.mxu0 0.0
    %612 = vmatpush.msra.mxu0 0.0
    %613 = vmatpush.msra.mxu0 0.0
    %614 = vmatpush.msra.mxu0 %v594
    %615 = vmatmul.f32.gmra.mxu0 %v597
    %v616 = vpop.f32.mrf.mxu0
    %v617 = vadd.f32 0.0, %v616
    %618 = vdwg.mxu0
    %620 = vrot.lane.b32.xlu0 %v617, 8
    %v621 = vpop.permute.xlu0 %620
    %623 = vst.msk [vmem:[#allocation2 + $0x8] sm:$0xff] %vm291, %v621
    %624 = vrot.lane.b32.xlu0 %v126, 112
    %v625 = vpop.permute.xlu0 %624
    %626 = vrot.lane.b32.xlu0 %v126, 80
    %v627 = vpop.permute.xlu0 %626
    %v628 = vsel %vm133, %v625, 0
    %v630 = vsel %vm133, %v627, 0
    %632 = vmatpush.xpose.msra.mxu0 0.0
    %633 = vmatpush.xpose.msra.mxu0 0.0
    %634 = vmatpush.xpose.msra.mxu0 0.0
    %635 = vmatpush.xpose.msra.mxu0 0.0
    %636 = vmatpush.xpose.msra.mxu0 0.0
    %637 = vmatpush.xpose.msra.mxu0 0.0
    %638 = vmatpush.xpose.msra.mxu0 0.0
    %639 = vmatpush.xpose.msra.mxu0 0.0
    %640 = vmatpush.xpose.msra.mxu0 0.0
    %641 = vmatpush.xpose.msra.mxu0 0.0
    %642 = vmatpush.xpose.msra.mxu0 0.0
    %643 = vmatpush.xpose.msra.mxu0 0.0
    %644 = vmatpush.xpose.msra.mxu0 0.0
    %645 = vmatpush.xpose.msra.mxu0 0.0
    %646 = vmatpush.xpose.msra.mxu0 0.0
    %647 = vmatpush.xpose.msra.mxu0 %v630
    %648 = vmatmul.f32.gmra.mxu0 %v628
    %v649 = vpop.f32.mrf.mxu0
    %v650 = vadd.f32 %v462, %v649
    %651 = vdwg.mxu0
    %v652 = vsel %vm133, %v650, -inf
    %653 = vmax.xlane.f32.xlu0 %v652
    %v654 = vpop.xlane.xlu0 %653
    %v655 = vsub.f32 %v650, %v654
    %v656 = vmul.f32 %v655, 1.442695
    %v657 = vpow.pop %v656
    %v658 = vsel %vm133, %v657, 0.0
    %659 = vadd.xlane.f32.xlu0 %v658
    %v660 = vpop.xlane.xlu0 %659
    %v661 = vrcp.pop %v660
    %v662 = vmul.f32 %v660, %v661
    %v663 = vsub.f32 1.0, %v662
    %v664 = vmul.f32 %v661, %v663
    %v665 = vadd.f32 %v661, %v664
    %vm666 = vweird.f32 %v660
    %vm667 = vweird.f32 %v661
    %vm668 = vmor %vm666, %vm667
    %v669 = vsel %vm668, %v661, %v665
    %v670 = vand.u32 2147483647, %v660
    %vm671 = vcmp.eq.f32.partialorder %v670, 8.507059e+37
    %v672 = vand.u32 %v660, 2147483648
    %v673 = vor.u32 1.1754944e-38, %v672
    %v674 = vsel %vm671, %v673, %v669
    %v675 = vmul.f32 %v657, %v674
    %676 = vrot.lane.b32.xlu0 %v126, 48
    %v677 = vpop.permute.xlu0 %676
    %v680 = vsel %vm133, %v675, 0
    %682 = vmatpush.msra.mxu0 0.0
    %683 = vmatpush.msra.mxu0 0.0
    %684 = vmatpush.msra.mxu0 0.0
    %685 = vmatpush.msra.mxu0 0.0
    %686 = vmatpush.msra.mxu0 0.0
    %687 = vmatpush.msra.mxu0 0.0
    %688 = vmatpush.msra.mxu0 0.0
    %689 = vmatpush.msra.mxu0 0.0
    %690 = vmatpush.msra.mxu0 0.0
    %691 = vmatpush.msra.mxu0 0.0
    %692 = vmatpush.msra.mxu0 0.0
    %693 = vmatpush.msra.mxu0 0.0
    %694 = vmatpush.msra.mxu0 0.0
    %695 = vmatpush.msra.mxu0 0.0
    %696 = vmatpush.msra.mxu0 0.0
    %697 = vmatpush.msra.mxu0 %v677
    %698 = vmatmul.f32.gmra.mxu0 %v680
    %v699 = vpop.f32.mrf.mxu0
    %v700 = vadd.f32 0.0, %v699
    %701 = vdwg.mxu0
    %703 = vrot.lane.b32.xlu0 %v700, 16
    %v704 = vpop.permute.xlu0 %703
    %706 = vst.msk [vmem:[#allocation2 + $0x8] sm:$0xff] %vm375, %v704
    %707 = vrot.lane.b32.xlu0 %v126, 104
    %v708 = vpop.permute.xlu0 %707
    %709 = vrot.lane.b32.xlu0 %v126, 72
    %v710 = vpop.permute.xlu0 %709
    %v711 = vsel %vm133, %v708, 0
    %v713 = vsel %vm133, %v710, 0
    %715 = vmatpush.xpose.msra.mxu0 0.0
    %716 = vmatpush.xpose.msra.mxu0 0.0
    %717 = vmatpush.xpose.msra.mxu0 0.0
    %718 = vmatpush.xpose.msra.mxu0 0.0
    %719 = vmatpush.xpose.msra.mxu0 0.0
    %720 = vmatpush.xpose.msra.mxu0 0.0
    %721 = vmatpush.xpose.msra.mxu0 0.0
    %722 = vmatpush.xpose.msra.mxu0 0.0
    %723 = vmatpush.xpose.msra.mxu0 0.0
    %724 = vmatpush.xpose.msra.mxu0 0.0
    %725 = vmatpush.xpose.msra.mxu0 0.0
    %726 = vmatpush.xpose.msra.mxu0 0.0
    %727 = vmatpush.xpose.msra.mxu0 0.0
    %728 = vmatpush.xpose.msra.mxu0 0.0
    %729 = vmatpush.xpose.msra.mxu0 0.0
    %730 = vmatpush.xpose.msra.mxu0 %v713
    %731 = vmatmul.f32.gmra.mxu0 %v711
    %v732 = vpop.f32.mrf.mxu0
    %v733 = vadd.f32 %v462, %v732
    %734 = vdwg.mxu0
    %v735 = vsel %vm133, %v733, -inf
    %736 = vmax.xlane.f32.xlu0 %v735
    %v737 = vpop.xlane.xlu0 %736
    %v738 = vsub.f32 %v733, %v737
    %v739 = vmul.f32 %v738, 1.442695
    %v740 = vpow.pop %v739
    %v741 = vsel %vm133, %v740, 0.0
    %742 = vadd.xlane.f32.xlu0 %v741
    %v743 = vpop.xlane.xlu0 %742
    %v744 = vrcp.pop %v743
    %v745 = vmul.f32 %v743, %v744
    %v746 = vsub.f32 1.0, %v745
    %v747 = vmul.f32 %v744, %v746
    %v748 = vadd.f32 %v744, %v747
    %vm749 = vweird.f32 %v743
    %vm750 = vweird.f32 %v744
    %vm751 = vmor %vm749, %vm750
    %v752 = vsel %vm751, %v744, %v748
    %v753 = vand.u32 2147483647, %v743
    %vm754 = vcmp.eq.f32.partialorder %v753, 8.507059e+37
    %v755 = vand.u32 %v743, 2147483648
    %v756 = vor.u32 1.1754944e-38, %v755
    %v757 = vsel %vm754, %v756, %v752
    %v758 = vmul.f32 %v740, %v757
    %759 = vrot.lane.b32.xlu0 %v126, 40
    %v760 = vpop.permute.xlu0 %759
    %v763 = vsel %vm133, %v758, 0
    %765 = vmatpush.msra.mxu0 0.0
    %766 = vmatpush.msra.mxu0 0.0
    %767 = vmatpush.msra.mxu0 0.0
    %768 = vmatpush.msra.mxu0 0.0
    %769 = vmatpush.msra.mxu0 0.0
    %770 = vmatpush.msra.mxu0 0.0
    %771 = vmatpush.msra.mxu0 0.0
    %772 = vmatpush.msra.mxu0 0.0
    %773 = vmatpush.msra.mxu0 0.0
    %774 = vmatpush.msra.mxu0 0.0
    %775 = vmatpush.msra.mxu0 0.0
    %776 = vmatpush.msra.mxu0 0.0
    %777 = vmatpush.msra.mxu0 0.0
    %778 = vmatpush.msra.mxu0 0.0
    %779 = vmatpush.msra.mxu0 0.0
    %780 = vmatpush.msra.mxu0 %v760
    %781 = vmatmul.f32.gmra.mxu0 %v763
    %v782 = vpop.f32.mrf.mxu0
    %v783 = vadd.f32 0.0, %v782
    %784 = vdwg.mxu0
    %786 = vrot.lane.b32.xlu0 %v783, 24
    %v787 = vpop.permute.xlu0 %786
    %789 = vst.msk [vmem:[#allocation2 + $0x8] sm:$0xff] %vm459, %v787
    %v790 = vld [vmem:[#allocation2] sm:$0xff]
    %v791 = vld [vmem:[#allocation2 + $0x8] sm:$0xff]
    %v792 = vpack.c.bf16 %v791, %v790
    %v793 = vld [vmem:[%s2 + $0x4] sm:$0xf]
    %v794 = vld [vmem:[%s2 + $0x10] sm:$0xf]
    %v795 = vld [vmem:[%s2 + $0x1c] sm:$0xf]
    %v796 = vld [vmem:[%s2 + $0x28] sm:$0xf]
    %v797 = vld [vmem:[%s4 + $0x1] sm:$0x1]
    %v798 = vperm.slane %v797, 0
    %v803 = vunpack.c.l.b16 %v793
    %v804 = vunpack.c.l.b16 %v794
    %v805 = vunpack.c.l.b16 %v795
    %v806 = vunpack.c.l.b16 %v796
    %v807 = vpack.c.b16 %v804, %v803
    %v808 = vpack.c.b16 %v806, %v805
    %v812 = vsel %vm34, %v792, 0
    %814 = vmatpush.bf16.msra.mxu0 0
    %815 = vmatpush.bf16.msra.mxu0 0
    %816 = vmatpush.bf16.msra.mxu0 0
    %817 = vmatpush.bf16.msra.mxu0 0
    %818 = vmatpush.bf16.msra.mxu0 0
    %819 = vmatpush.bf16.msra.mxu0 0
    %820 = vmatpush.bf16.msra.mxu0 %v808
    %821 = vmatpush.bf16.msra.mxu0 %v807
    %822 = vmatmul.bf16.gmra.mxu0 %v812
    %v823 = vpop.f32.mrf.mxu0
    %v824 = vadd.f32 %v798, %v823
    %v825 = vpop.f32.mrf.mxu0
    %v826 = vadd.f32 %v798, %v825
    %827 = vdwg.mxu0
    %v828 = vadd.f32 %v824, %v90
    %v829 = vadd.f32 %v826, %v91
    %v830 = vld [vmem:[%s4 + $0x4] sm:$0x1]
    %v831 = vld [vmem:[%s4 + $0x5] sm:$0x1]
    %v832 = vsel %vm34, %v828, 0.0
    %833 = vadd.xlane.f32.xlu0 %v832
    %v834 = vpop.xlane.xlu0 %833
    %v835 = vsel %vm34, %v829, 0.0
    %836 = vadd.xlane.f32.xlu0 %v835
    %v837 = vpop.xlane.xlu0 %836
    %v838 = vmul.f32 %v834, %v47
    %v839 = vmul.f32 %v837, %v47
    %v840 = vsub.f32 %v828, %v838
    %v841 = vsub.f32 %v829, %v839
    %v842 = vmul.f32 %v840, %v840
    %v843 = vmul.f32 %v841, %v841
    %v844 = vsel %vm34, %v842, 0.0
    %845 = vadd.xlane.f32.xlu0 %v844
    %v846 = vpop.xlane.xlu0 %845
    %v847 = vsel %vm34, %v843, 0.0
    %848 = vadd.xlane.f32.xlu0 %v847
    %v849 = vpop.xlane.xlu0 %848
    %v850 = vmul.f32 %v846, %v47
    %v851 = vmul.f32 %v849, %v47
    %v852 = vadd.f32 %v850, 1e-12
    %v853 = vadd.f32 %v851, 1e-12
    %v854 = vrsqrt.pop %v852
    %v855 = vmul.f32 %v854, %v852
    %v856 = vmul.f32 %v855, %v854
    %v857 = vmul.f32 0.5, %v856
    %v858 = vsub.f32 1.5, %v857
    %v859 = vmul.f32 %v854, %v858
    %vm860 = vweird.f32 %v852
    %vm861 = vweird.f32 %v854
    %vm862 = vmor %vm860, %vm861
    %v863 = vsel %vm862, %v854, %v859
    %v864 = vrsqrt.pop %v853
    %v865 = vmul.f32 %v864, %v853
    %v866 = vmul.f32 %v865, %v864
    %v867 = vmul.f32 0.5, %v866
    %v868 = vsub.f32 1.5, %v867
    %v869 = vmul.f32 %v864, %v868
    %vm870 = vweird.f32 %v853
    %vm871 = vweird.f32 %v864
    %vm872 = vmor %vm870, %vm871
    %v873 = vsel %vm872, %v864, %v869
    %v874 = vmul.f32 %v840, %v863
    %v875 = vmul.f32 %v841, %v873
    %v876 = vperm.slane %v830, 0
    %v877 = vmul.f32 %v874, %v876
    %v878 = vmul.f32 %v875, %v876
    %v879 = vperm.slane %v831, 0
    %v880 = vadd.f32 %v877, %v879
    %v881 = vadd.f32 %v878, %v879
    %v882 = vpack.c.bf16 %v881, %v880
    %v883 = vld [vmem:[%s2 + $0x8] sm:$0xf]
    %v884 = vld [vmem:[%s2 + $0x14] sm:$0xf]
    %v885 = vld [vmem:[%s2 + $0x20] sm:$0xf]
    %v886 = vld [vmem:[%s2 + $0x2c] sm:$0xf]
    %v887 = vld [vmem:[%s4 + $0x2] sm:$0x1]
    %v888 = vperm.slane %v887, 0
    %v893 = vunpack.c.l.b16 %v883
    %v894 = vunpack.c.l.b16 %v884
    %v895 = vunpack.c.l.b16 %v885
    %v896 = vunpack.c.l.b16 %v886
    %v897 = vpack.c.b16 %v894, %v893
    %v898 = vpack.c.b16 %v896, %v895
    %v902 = vsel %vm34, %v882, 0
    %904 = vmatpush.bf16.msra.mxu0 0
    %905 = vmatpush.bf16.msra.mxu0 0
    %906 = vmatpush.bf16.msra.mxu0 0
    %907 = vmatpush.bf16.msra.mxu0 0
    %908 = vmatpush.bf16.msra.mxu0 0
    %909 = vmatpush.bf16.msra.mxu0 0
    %910 = vmatpush.bf16.msra.mxu0 %v898
    %911 = vmatpush.bf16.msra.mxu0 %v897
    %912 = vmatmul.bf16.gmra.mxu0 %v902
    %v913 = vpop.f32.mrf.mxu0
    %v914 = vadd.f32 %v888, %v913
    %v915 = vpop.f32.mrf.mxu0
    %v916 = vadd.f32 %v888, %v915
    %917 = vdwg.mxu0
    %v918 = vmul.f32 %v914, 0.5
    %v919 = vmul.f32 %v916, 0.5
    %v920 = vmul.f32 %v914, 0.044715
    %v921 = vmul.f32 %v916, 0.044715
    %v922 = vmul.f32 %v920, %v914
    %v923 = vmul.f32 %v921, %v916
    %v924 = vmul.f32 %v922, %v914
    %v925 = vmul.f32 %v923, %v916
    %v926 = vadd.f32 %v914, %v924
    %v927 = vadd.f32 %v916, %v925
    %v928 = vmul.f32 %v926, 0.7978846
    %v929 = vmul.f32 %v927, 0.7978846
    %v930 = vtanh.pop %v928
    %v931 = vtanh.pop %v929
    %v932 = vadd.f32 %v930, 1.0
    %v933 = vadd.f32 %v931, 1.0
    %v934 = vmul.f32 %v918, %v932
    %v935 = vmul.f32 %v919, %v933
    %v936 = vpack.c.bf16 %v935, %v934
    %v937 = vld [vmem:[%s3] sm:$0xf]
    %v938 = vld [vmem:[%s3 + $0x4] sm:$0xf]
    %v939 = vld [vmem:[%s3 + $0x8] sm:$0xf]
    %v940 = vld [vmem:[%s3 + $0xc] sm:$0xf]
    %v941 = vld [vmem:[%s3 + $0x10] sm:$0xf]
    %v942 = vld [vmem:[%s3 + $0x14] sm:$0xf]
    %v943 = vld [vmem:[%s3 + $0x18] sm:$0xf]
    %v944 = vld [vmem:[%s3 + $0x1c] sm:$0xf]
    %v945 = vld [vmem:[%s4 + $0x3] sm:$0x1]
    %v946 = vperm.slane %v945, 0
    %v955 = vunpack.c.l.b16 %v937
    %v956 = vunpack.c.l.b16 %v938
    %v957 = vunpack.c.l.b16 %v939
    %v958 = vunpack.c.l.b16 %v940
    %v959 = vunpack.c.l.b16 %v941
    %v960 = vunpack.c.l.b16 %v942
    %v961 = vunpack.c.l.b16 %v943
    %v962 = vunpack.c.l.b16 %v944
    %v963 = vpack.c.b16 %v956, %v955
    %v964 = vpack.c.b16 %v958, %v957
    %v965 = vpack.c.b16 %v960, %v959
    %v966 = vpack.c.b16 %v962, %v961
    %vm971 = vcmask 523264
    %v973 = vsel %vm971, %v936, 0
    %975 = vmatpush.bf16.msra.mxu0 0
    %976 = vmatpush.bf16.msra.mxu0 0
    %977 = vmatpush.bf16.msra.mxu0 0
    %978 = vmatpush.bf16.msra.mxu0 0
    %979 = vmatpush.bf16.msra.mxu0 %v966
    %980 = vmatpush.bf16.msra.mxu0 %v965
    %981 = vmatpush.bf16.msra.mxu0 %v964
    %982 = vmatpush.bf16.msra.mxu0 %v963
    %983 = vmatmul.bf16.gmra.mxu0 %v973
    %v984 = vpop.f32.mrf.mxu0
    %v985 = vadd.f32 %v946, %v984
    %v986 = vpop.f32.mrf.mxu0
    %v987 = vadd.f32 %v946, %v986
    %988 = vdwg.mxu0
    %v989 = vadd.f32 %v985, %v880
    %v990 = vadd.f32 %v987, %v881
    %v991 = vld [vmem:[%s4 + $0x6] sm:$0x1]
    %v992 = vld [vmem:[%s4 + $0x7] sm:$0x1]
    %v993 = vsel %vm34, %v989, 0.0
    %994 = vadd.xlane.f32.xlu0 %v993
    %v995 = vpop.xlane.xlu0 %994
    %v996 = vsel %vm34, %v990, 0.0
    %997 = vadd.xlane.f32.xlu0 %v996
    %v998 = vpop.xlane.xlu0 %997
    %v999 = vmul.f32 %v995, %v47
    %v1000 = vmul.f32 %v998, %v47
    %v1001 = vsub.f32 %v989, %v999
    %v1002 = vsub.f32 %v990, %v1000
    %v1003 = vmul.f32 %v1001, %v1001
    %v1004 = vmul.f32 %v1002, %v1002
    %v1005 = vsel %vm34, %v1003, 0.0
    %1006 = vadd.xlane.f32.xlu0 %v1005
    %v1007 = vpop.xlane.xlu0 %1006
    %v1008 = vsel %vm34, %v1004, 0.0
    %1009 = vadd.xlane.f32.xlu0 %v1008
    %v1010 = vpop.xlane.xlu0 %1009
    %v1011 = vmul.f32 %v1007, %v47
    %v1012 = vmul.f32 %v1010, %v47
    %v1013 = vadd.f32 %v1011, 1e-12
    %v1014 = vadd.f32 %v1012, 1e-12
    %v1015 = vrsqrt.pop %v1013
    %v1016 = vmul.f32 %v1015, %v1013
    %v1017 = vmul.f32 %v1016, %v1015
    %v1018 = vmul.f32 0.5, %v1017
    %v1019 = vsub.f32 1.5, %v1018
    %v1020 = vmul.f32 %v1015, %v1019
    %vm1021 = vweird.f32 %v1013
    %vm1022 = vweird.f32 %v1015
    %vm1023 = vmor %vm1021, %vm1022
    %v1024 = vsel %vm1023, %v1015, %v1020
    %v1025 = vrsqrt.pop %v1014
    %v1026 = vmul.f32 %v1025, %v1014
    %v1027 = vmul.f32 %v1026, %v1025
    %v1028 = vmul.f32 0.5, %v1027
    %v1029 = vsub.f32 1.5, %v1028
    %v1030 = vmul.f32 %v1025, %v1029
    %vm1031 = vweird.f32 %v1014
    %vm1032 = vweird.f32 %v1025
    %vm1033 = vmor %vm1031, %vm1032
    %v1034 = vsel %vm1033, %v1025, %v1030
    %v1035 = vmul.f32 %v1001, %v1024
    %v1036 = vmul.f32 %v1002, %v1034
    %v1037 = vperm.slane %v991, 0
    %v1038 = vmul.f32 %v1035, %v1037
    %v1039 = vmul.f32 %v1036, %v1037
    %v1040 = vperm.slane %v992, 0
    %v1041 = vadd.f32 %v1038, %v1040
    %v1042 = vadd.f32 %v1039, %v1040
    %v1043 = vpack.c.bf16 %v1042, %v1041
    %s1044 = scalar_lea.vmem %s2, 48
    %v1045 = vld [vmem:[%s1044] sm:$0xf]
    %v1046 = vld [vmem:[%s1044 + $0xc] sm:$0xf]
    %v1047 = vld [vmem:[%s1044 + $0x18] sm:$0xf]
    %v1048 = vld [vmem:[%s1044 + $0x24] sm:$0xf]
    %s1049 = scalar_lea.vmem %s4, 8
    %v1050 = vld [vmem:[%s1049] sm:$0x1]
    %v1051 = vperm.slane %v1050, 0
    %v1056 = vunpack.c.l.b16 %v1045
    %v1057 = vunpack.c.l.b16 %v1046
    %v1058 = vunpack.c.l.b16 %v1047
    %v1059 = vunpack.c.l.b16 %v1048
    %v1060 = vpack.c.b16 %v1057, %v1056
    %v1061 = vpack.c.b16 %v1059, %v1058
    %v1065 = vsel %vm34, %v1043, 0
    %1067 = vmatpush.bf16.msra.mxu0 0
    %1068 = vmatpush.bf16.msra.mxu0 0
    %1069 = vmatpush.bf16.msra.mxu0 0
    %1070 = vmatpush.bf16.msra.mxu0 0
    %1071 = vmatpush.bf16.msra.mxu0 0
    %1072 = vmatpush.bf16.msra.mxu0 0
    %1073 = vmatpush.bf16.msra.mxu0 %v1061
    %1074 = vmatpush.bf16.msra.mxu0 %v1060
    %1075 = vmatmul.bf16.gmra.mxu0 %v1065
    %v1076 = vpop.f32.mrf.mxu0
    %v1077 = vadd.f32 %v1051, %v1076
    %v1078 = vpop.f32.mrf.mxu0
    %v1079 = vadd.f32 %v1051, %v1078
    %1080 = vdwg.mxu0
    %v1081 = vld [vmem:[%s1] sm:$0x1]
    %v1082 = vperm.slane %v1081, 0
    %1084 = vrot.lane.b32.xlu0 %v1077, 96
    %v1085 = vpop.permute.xlu0 %1084
    %v1086 = vsel %vm133, %v1077, 0
    %v1088 = vsel %vm133, %v1085, 0
    %1090 = vmatpush.xpose.msra.mxu0 0.0
    %1091 = vmatpush.xpose.msra.mxu0 0.0
    %1092 = vmatpush.xpose.msra.mxu0 0.0
    %1093 = vmatpush.xpose.msra.mxu0 0.0
    %1094 = vmatpush.xpose.msra.mxu0 0.0
    %1095 = vmatpush.xpose.msra.mxu0 0.0
    %1096 = vmatpush.xpose.msra.mxu0 0.0
    %1097 = vmatpush.xpose.msra.mxu0 0.0
    %1098 = vmatpush.xpose.msra.mxu0 0.0
    %1099 = vmatpush.xpose.msra.mxu0 0.0
    %1100 = vmatpush.xpose.msra.mxu0 0.0
    %1101 = vmatpush.xpose.msra.mxu0 0.0
    %1102 = vmatpush.xpose.msra.mxu0 0.0
    %1103 = vmatpush.xpose.msra.mxu0 0.0
    %1104 = vmatpush.xpose.msra.mxu0 0.0
    %1105 = vmatpush.xpose.msra.mxu0 %v1088
    %1106 = vmatmul.f32.gmra.mxu0 %v1086
    %v1107 = vpop.f32.mrf.mxu0
    %v1108 = vadd.f32 %v1082, %v1107
    %1109 = vdwg.mxu0
    %v1110 = vsel %vm133, %v1108, -inf
    %1111 = vmax.xlane.f32.xlu0 %v1110
    %v1112 = vpop.xlane.xlu0 %1111
    %v1113 = vsub.f32 %v1108, %v1112
    %v1114 = vmul.f32 %v1113, 1.442695
    %v1115 = vpow.pop %v1114
    %v1116 = vsel %vm133, %v1115, 0.0
    %1117 = vadd.xlane.f32.xlu0 %v1116
    %v1118 = vpop.xlane.xlu0 %1117
    %v1119 = vrcp.pop %v1118
    %v1120 = vmul.f32 %v1118, %v1119
    %v1121 = vsub.f32 1.0, %v1120
    %v1122 = vmul.f32 %v1119, %v1121
    %v1123 = vadd.f32 %v1119, %v1122
    %vm1124 = vweird.f32 %v1118
    %vm1125 = vweird.f32 %v1119
    %vm1126 = vmor %vm1124, %vm1125
    %v1127 = vsel %vm1126, %v1119, %v1123
    %v1128 = vand.u32 2147483647, %v1118
    %vm1129 = vcmp.eq.f32.partialorder %v1128, 8.507059e+37
    %v1130 = vand.u32 %v1118, 2147483648
    %v1131 = vor.u32 1.1754944e-38, %v1130
    %v1132 = vsel %vm1129, %v1131, %v1127
    %v1133 = vmul.f32 %v1115, %v1132
    %1134 = vrot.lane.b32.xlu0 %v1077, 64
    %v1135 = vpop.permute.xlu0 %1134
    %v1138 = vsel %vm133, %v1133, 0
    %1140 = vmatpush.msra.mxu0 0.0
    %1141 = vmatpush.msra.mxu0 0.0
    %1142 = vmatpush.msra.mxu0 0.0
    %1143 = vmatpush.msra.mxu0 0.0
    %1144 = vmatpush.msra.mxu0 0.0
    %1145 = vmatpush.msra.mxu0 0.0
    %1146 = vmatpush.msra.mxu0 0.0
    %1147 = vmatpush.msra.mxu0 0.0
    %1148 = vmatpush.msra.mxu0 0.0
    %1149 = vmatpush.msra.mxu0 0.0
    %1150 = vmatpush.msra.mxu0 0.0
    %1151 = vmatpush.msra.mxu0 0.0
    %1152 = vmatpush.msra.mxu0 0.0
    %1153 = vmatpush.msra.mxu0 0.0
    %1154 = vmatpush.msra.mxu0 0.0
    %1155 = vmatpush.msra.mxu0 %v1135
    %1156 = vmatmul.f32.gmra.mxu0 %v1138
    %v1157 = vpop.f32.mrf.mxu0
    %v1158 = vadd.f32 0.0, %v1157
    %1159 = vdwg.mxu0
    %1160 = vst.msk [vmem:[#allocation2] sm:$0xff] %vm133, %v1158
    %1161 = vrot.lane.b32.xlu0 %v1077, 120
    %v1162 = vpop.permute.xlu0 %1161
    %1163 = vrot.lane.b32.xlu0 %v1077, 88
    %v1164 = vpop.permute.xlu0 %1163
    %v1165 = vsel %vm133, %v1162, 0
    %v1167 = vsel %vm133, %v1164, 0
    %1169 = vmatpush.xpose.msra.mxu0 0.0
    %1170 = vmatpush.xpose.msra.mxu0 0.0
    %1171 = vmatpush.xpose.msra.mxu0 0.0
    %1172 = vmatpush.xpose.msra.mxu0 0.0
    %1173 = vmatpush.xpose.msra.mxu0 0.0
    %1174 = vmatpush.xpose.msra.mxu0 0.0
    %1175 = vmatpush.xpose.msra.mxu0 0.0
    %1176 = vmatpush.xpose.msra.mxu0 0.0
    %1177 = vmatpush.xpose.msra.mxu0 0.0
    %1178 = vmatpush.xpose.msra.mxu0 0.0
    %1179 = vmatpush.xpose.msra.mxu0 0.0
    %1180 = vmatpush.xpose.msra.mxu0 0.0
    %1181 = vmatpush.xpose.msra.mxu0 0.0
    %1182 = vmatpush.xpose.msra.mxu0 0.0
    %1183 = vmatpush.xpose.msra.mxu0 0.0
    %1184 = vmatpush.xpose.msra.mxu0 %v1167
    %1185 = vmatmul.f32.gmra.mxu0 %v1165
    %v1186 = vpop.f32.mrf.mxu0
    %v1187 = vadd.f32 %v1082, %v1186
    %1188 = vdwg.mxu0
    %v1189 = vsel %vm133, %v1187, -inf
    %1190 = vmax.xlane.f32.xlu0 %v1189
    %v1191 = vpop.xlane.xlu0 %1190
    %v1192 = vsub.f32 %v1187, %v1191
    %v1193 = vmul.f32 %v1192, 1.442695
    %v1194 = vpow.pop %v1193
    %v1195 = vsel %vm133, %v1194, 0.0
    %1196 = vadd.xlane.f32.xlu0 %v1195
    %v1197 = vpop.xlane.xlu0 %1196
    %v1198 = vrcp.pop %v1197
    %v1199 = vmul.f32 %v1197, %v1198
    %v1200 = vsub.f32 1.0, %v1199
    %v1201 = vmul.f32 %v1198, %v1200
    %v1202 = vadd.f32 %v1198, %v1201
    %vm1203 = vweird.f32 %v1197
    %vm1204 = vweird.f32 %v1198
    %vm1205 = vmor %vm1203, %vm1204
    %v1206 = vsel %vm1205, %v1198, %v1202
    %v1207 = vand.u32 2147483647, %v1197
    %vm1208 = vcmp.eq.f32.partialorder %v1207, 8.507059e+37
    %v1209 = vand.u32 %v1197, 2147483648
    %v1210 = vor.u32 1.1754944e-38, %v1209
    %v1211 = vsel %vm1208, %v1210, %v1206
    %v1212 = vmul.f32 %v1194, %v1211
    %1213 = vrot.lane.b32.xlu0 %v1077, 56
    %v1214 = vpop.permute.xlu0 %1213
    %v1217 = vsel %vm133, %v1212, 0
    %1219 = vmatpush.msra.mxu0 0.0
    %1220 = vmatpush.msra.mxu0 0.0
    %1221 = vmatpush.msra.mxu0 0.0
    %1222 = vmatpush.msra.mxu0 0.0
    %1223 = vmatpush.msra.mxu0 0.0
    %1224 = vmatpush.msra.mxu0 0.0
    %1225 = vmatpush.msra.mxu0 0.0
    %1226 = vmatpush.msra.mxu0 0.0
    %1227 = vmatpush.msra.mxu0 0.0
    %1228 = vmatpush.msra.mxu0 0.0
    %1229 = vmatpush.msra.mxu0 0.0
    %1230 = vmatpush.msra.mxu0 0.0
    %1231 = vmatpush.msra.mxu0 0.0
    %1232 = vmatpush.msra.mxu0 0.0
    %1233 = vmatpush.msra.mxu0 0.0
    %1234 = vmatpush.msra.mxu0 %v1214
    %1235 = vmatmul.f32.gmra.mxu0 %v1217
    %v1236 = vpop.f32.mrf.mxu0
    %v1237 = vadd.f32 0.0, %v1236
    %1238 = vdwg.mxu0
    %1240 = vrot.lane.b32.xlu0 %v1237, 8
    %v1241 = vpop.permute.xlu0 %1240
    %1243 = vst.msk [vmem:[#allocation2] sm:$0xff] %vm291, %v1241
    %1244 = vrot.lane.b32.xlu0 %v1077, 112
    %v1245 = vpop.permute.xlu0 %1244
    %1246 = vrot.lane.b32.xlu0 %v1077, 80
    %v1247 = vpop.permute.xlu0 %1246
    %v1248 = vsel %vm133, %v1245, 0
    %v1250 = vsel %vm133, %v1247, 0
    %1252 = vmatpush.xpose.msra.mxu0 0.0
    %1253 = vmatpush.xpose.msra.mxu0 0.0
    %1254 = vmatpush.xpose.msra.mxu0 0.0
    %1255 = vmatpush.xpose.msra.mxu0 0.0
    %1256 = vmatpush.xpose.msra.mxu0 0.0
    %1257 = vmatpush.xpose.msra.mxu0 0.0
    %1258 = vmatpush.xpose.msra.mxu0 0.0
    %1259 = vmatpush.xpose.msra.mxu0 0.0
    %1260 = vmatpush.xpose.msra.mxu0 0.0
    %1261 = vmatpush.xpose.msra.mxu0 0.0
    %1262 = vmatpush.xpose.msra.mxu0 0.0
    %1263 = vmatpush.xpose.msra.mxu0 0.0
    %1264 = vmatpush.xpose.msra.mxu0 0.0
    %1265 = vmatpush.xpose.msra.mxu0 0.0
    %1266 = vmatpush.xpose.msra.mxu0 0.0
    %1267 = vmatpush.xpose.msra.mxu0 %v1250
    %1268 = vmatmul.f32.gmra.mxu0 %v1248
    %v1269 = vpop.f32.mrf.mxu0
    %v1270 = vadd.f32 %v1082, %v1269
    %1271 = vdwg.mxu0
    %v1272 = vsel %vm133, %v1270, -inf
    %1273 = vmax.xlane.f32.xlu0 %v1272
    %v1274 = vpop.xlane.xlu0 %1273
    %v1275 = vsub.f32 %v1270, %v1274
    %v1276 = vmul.f32 %v1275, 1.442695
    %v1277 = vpow.pop %v1276
    %v1278 = vsel %vm133, %v1277, 0.0
    %1279 = vadd.xlane.f32.xlu0 %v1278
    %v1280 = vpop.xlane.xlu0 %1279
    %v1281 = vrcp.pop %v1280
    %v1282 = vmul.f32 %v1280, %v1281
    %v1283 = vsub.f32 1.0, %v1282
    %v1284 = vmul.f32 %v1281, %v1283
    %v1285 = vadd.f32 %v1281, %v1284
    %vm1286 = vweird.f32 %v1280
    %vm1287 = vweird.f32 %v1281
    %vm1288 = vmor %vm1286, %vm1287
    %v1289 = vsel %vm1288, %v1281, %v1285
    %v1290 = vand.u32 2147483647, %v1280
    %vm1291 = vcmp.eq.f32.partialorder %v1290, 8.507059e+37
    %v1292 = vand.u32 %v1280, 2147483648
    %v1293 = vor.u32 1.1754944e-38, %v1292
    %v1294 = vsel %vm1291, %v1293, %v1289
    %v1295 = vmul.f32 %v1277, %v1294
    %1296 = vrot.lane.b32.xlu0 %v1077, 48
    %v1297 = vpop.permute.xlu0 %1296
    %v1300 = vsel %vm133, %v1295, 0
    %1302 = vmatpush.msra.mxu0 0.0
    %1303 = vmatpush.msra.mxu0 0.0
    %1304 = vmatpush.msra.mxu0 0.0
    %1305 = vmatpush.msra.mxu0 0.0
    %1306 = vmatpush.msra.mxu0 0.0
    %1307 = vmatpush.msra.mxu0 0.0
    %1308 = vmatpush.msra.mxu0 0.0
    %1309 = vmatpush.msra.mxu0 0.0
    %1310 = vmatpush.msra.mxu0 0.0
    %1311 = vmatpush.msra.mxu0 0.0
    %1312 = vmatpush.msra.mxu0 0.0
    %1313 = vmatpush.msra.mxu0 0.0
    %1314 = vmatpush.msra.mxu0 0.0
    %1315 = vmatpush.msra.mxu0 0.0
    %1316 = vmatpush.msra.mxu0 0.0
    %1317 = vmatpush.msra.mxu0 %v1297
    %1318 = vmatmul.f32.gmra.mxu0 %v1300
    %v1319 = vpop.f32.mrf.mxu0
    %v1320 = vadd.f32 0.0, %v1319
    %1321 = vdwg.mxu0
    %1323 = vrot.lane.b32.xlu0 %v1320, 16
    %v1324 = vpop.permute.xlu0 %1323
    %1326 = vst.msk [vmem:[#allocation2] sm:$0xff] %vm375, %v1324
    %1327 = vrot.lane.b32.xlu0 %v1077, 104
    %v1328 = vpop.permute.xlu0 %1327
    %1329 = vrot.lane.b32.xlu0 %v1077, 72
    %v1330 = vpop.permute.xlu0 %1329
    %v1331 = vsel %vm133, %v1328, 0
    %v1333 = vsel %vm133, %v1330, 0
    %1335 = vmatpush.xpose.msra.mxu0 0.0
    %1336 = vmatpush.xpose.msra.mxu0 0.0
    %1337 = vmatpush.xpose.msra.mxu0 0.0
    %1338 = vmatpush.xpose.msra.mxu0 0.0
    %1339 = vmatpush.xpose.msra.mxu0 0.0
    %1340 = vmatpush.xpose.msra.mxu0 0.0
    %1341 = vmatpush.xpose.msra.mxu0 0.0
    %1342 = vmatpush.xpose.msra.mxu0 0.0
    %1343 = vmatpush.xpose.msra.mxu0 0.0
    %1344 = vmatpush.xpose.msra.mxu0 0.0
    %1345 = vmatpush.xpose.msra.mxu0 0.0
    %1346 = vmatpush.xpose.msra.mxu0 0.0
    %1347 = vmatpush.xpose.msra.mxu0 0.0
    %1348 = vmatpush.xpose.msra.mxu0 0.0
    %1349 = vmatpush.xpose.msra.mxu0 0.0
    %1350 = vmatpush.xpose.msra.mxu0 %v1333
    %1351 = vmatmul.f32.gmra.mxu0 %v1331
    %v1352 = vpop.f32.mrf.mxu0
    %v1353 = vadd.f32 %v1082, %v1352
    %1354 = vdwg.mxu0
    %v1355 = vsel %vm133, %v1353, -inf
    %1356 = vmax.xlane.f32.xlu0 %v1355
    %v1357 = vpop.xlane.xlu0 %1356
    %v1358 = vsub.f32 %v1353, %v1357
    %v1359 = vmul.f32 %v1358, 1.442695
    %v1360 = vpow.pop %v1359
    %v1361 = vsel %vm133, %v1360, 0.0
    %1362 = vadd.xlane.f32.xlu0 %v1361
    %v1363 = vpop.xlane.xlu0 %1362
    %v1364 = vrcp.pop %v1363
    %v1365 = vmul.f32 %v1363, %v1364
    %v1366 = vsub.f32 1.0, %v1365
    %v1367 = vmul.f32 %v1364, %v1366
    %v1368 = vadd.f32 %v1364, %v1367
    %vm1369 = vweird.f32 %v1363
    %vm1370 = vweird.f32 %v1364
    %vm1371 = vmor %vm1369, %vm1370
    %v1372 = vsel %vm1371, %v1364, %v1368
    %v1373 = vand.u32 2147483647, %v1363
    %vm1374 = vcmp.eq.f32.partialorder %v1373, 8.507059e+37
    %v1375 = vand.u32 %v1363, 2147483648
    %v1376 = vor.u32 1.1754944e-38, %v1375
    %v1377 = vsel %vm1374, %v1376, %v1372
    %v1378 = vmul.f32 %v1360, %v1377
    %1379 = vrot.lane.b32.xlu0 %v1077, 40
    %v1380 = vpop.permute.xlu0 %1379
    %v1383 = vsel %vm133, %v1378, 0
    %1385 = vmatpush.msra.mxu0 0.0
    %1386 = vmatpush.msra.mxu0 0.0
    %1387 = vmatpush.msra.mxu0 0.0
    %1388 = vmatpush.msra.mxu0 0.0
    %1389 = vmatpush.msra.mxu0 0.0
    %1390 = vmatpush.msra.mxu0 0.0
    %1391 = vmatpush.msra.mxu0 0.0
    %1392 = vmatpush.msra.mxu0 0.0
    %1393 = vmatpush.msra.mxu0 0.0
    %1394 = vmatpush.msra.mxu0 0.0
    %1395 = vmatpush.msra.mxu0 0.0
    %1396 = vmatpush.msra.mxu0 0.0
    %1397 = vmatpush.msra.mxu0 0.0
    %1398 = vmatpush.msra.mxu0 0.0
    %1399 = vmatpush.msra.mxu0 0.0
    %1400 = vmatpush.msra.mxu0 %v1380
    %1401 = vmatmul.f32.gmra.mxu0 %v1383
    %v1402 = vpop.f32.mrf.mxu0
    %v1403 = vadd.f32 0.0, %v1402
    %1404 = vdwg.mxu0
    %1406 = vrot.lane.b32.xlu0 %v1403, 24
    %v1407 = vpop.permute.xlu0 %1406
    %1409 = vst.msk [vmem:[#allocation2] sm:$0xff] %vm459, %v1407
    %v1410 = vld [vmem:[%s1 + $0x1] sm:$0x1]
    %v1411 = vperm.slane %v1410, 0
    %1413 = vrot.lane.b32.xlu0 %v1079, 96
    %v1414 = vpop.permute.xlu0 %1413
    %v1415 = vsel %vm133, %v1079, 0
    %v1417 = vsel %vm133, %v1414, 0
    %1419 = vmatpush.xpose.msra.mxu0 0.0
    %1420 = vmatpush.xpose.msra.mxu0 0.0
    %1421 = vmatpush.xpose.msra.mxu0 0.0
    %1422 = vmatpush.xpose.msra.mxu0 0.0
    %1423 = vmatpush.xpose.msra.mxu0 0.0
    %1424 = vmatpush.xpose.msra.mxu0 0.0
    %1425 = vmatpush.xpose.msra.mxu0 0.0
    %1426 = vmatpush.xpose.msra.mxu0 0.0
    %1427 = vmatpush.xpose.msra.mxu0 0.0
    %1428 = vmatpush.xpose.msra.mxu0 0.0
    %1429 = vmatpush.xpose.msra.mxu0 0.0
    %1430 = vmatpush.xpose.msra.mxu0 0.0
    %1431 = vmatpush.xpose.msra.mxu0 0.0
    %1432 = vmatpush.xpose.msra.mxu0 0.0
    %1433 = vmatpush.xpose.msra.mxu0 0.0
    %1434 = vmatpush.xpose.msra.mxu0 %v1417
    %1435 = vmatmul.f32.gmra.mxu0 %v1415
    %v1436 = vpop.f32.mrf.mxu0
    %v1437 = vadd.f32 %v1411, %v1436
    %1438 = vdwg.mxu0
    %v1439 = vsel %vm133, %v1437, -inf
    %1440 = vmax.xlane.f32.xlu0 %v1439
    %v1441 = vpop.xlane.xlu0 %1440
    %v1442 = vsub.f32 %v1437, %v1441
    %v1443 = vmul.f32 %v1442, 1.442695
    %v1444 = vpow.pop %v1443
    %v1445 = vsel %vm133, %v1444, 0.0
    %1446 = vadd.xlane.f32.xlu0 %v1445
    %v1447 = vpop.xlane.xlu0 %1446
    %v1448 = vrcp.pop %v1447
    %v1449 = vmul.f32 %v1447, %v1448
    %v1450 = vsub.f32 1.0, %v1449
    %v1451 = vmul.f32 %v1448, %v1450
    %v1452 = vadd.f32 %v1448, %v1451
    %vm1453 = vweird.f32 %v1447
    %vm1454 = vweird.f32 %v1448
    %vm1455 = vmor %vm1453, %vm1454
    %v1456 = vsel %vm1455, %v1448, %v1452
    %v1457 = vand.u32 2147483647, %v1447
    %vm1458 = vcmp.eq.f32.partialorder %v1457, 8.507059e+37
    %v1459 = vand.u32 %v1447, 2147483648
    %v1460 = vor.u32 1.1754944e-38, %v1459
    %v1461 = vsel %vm1458, %v1460, %v1456
    %v1462 = vmul.f32 %v1444, %v1461
    %1463 = vrot.lane.b32.xlu0 %v1079, 64
    %v1464 = vpop.permute.xlu0 %1463
    %v1467 = vsel %vm133, %v1462, 0
    %1469 = vmatpush.msra.mxu0 0.0
    %1470 = vmatpush.msra.mxu0 0.0
    %1471 = vmatpush.msra.mxu0 0.0
    %1472 = vmatpush.msra.mxu0 0.0
    %1473 = vmatpush.msra.mxu0 0.0
    %1474 = vmatpush.msra.mxu0 0.0
    %1475 = vmatpush.msra.mxu0 0.0
    %1476 = vmatpush.msra.mxu0 0.0
    %1477 = vmatpush.msra.mxu0 0.0
    %1478 = vmatpush.msra.mxu0 0.0
    %1479 = vmatpush.msra.mxu0 0.0
    %1480 = vmatpush.msra.mxu0 0.0
    %1481 = vmatpush.msra.mxu0 0.0
    %1482 = vmatpush.msra.mxu0 0.0
    %1483 = vmatpush.msra.mxu0 0.0
    %1484 = vmatpush.msra.mxu0 %v1464
    %1485 = vmatmul.f32.gmra.mxu0 %v1467
    %v1486 = vpop.f32.mrf.mxu0
    %v1487 = vadd.f32 0.0, %v1486
    %1488 = vdwg.mxu0
    %1489 = vst.msk [vmem:[#allocation2 + $0x8] sm:$0xff] %vm133, %v1487
    %1490 = vrot.lane.b32.xlu0 %v1079, 120
    %v1491 = vpop.permute.xlu0 %1490
    %1492 = vrot.lane.b32.xlu0 %v1079, 88
    %v1493 = vpop.permute.xlu0 %1492
    %v1494 = vsel %vm133, %v1491, 0
    %v1496 = vsel %vm133, %v1493, 0
    %1498 = vmatpush.xpose.msra.mxu0 0.0
    %1499 = vmatpush.xpose.msra.mxu0 0.0
    %1500 = vmatpush.xpose.msra.mxu0 0.0
    %1501 = vmatpush.xpose.msra.mxu0 0.0
    %1502 = vmatpush.xpose.msra.mxu0 0.0
    %1503 = vmatpush.xpose.msra.mxu0 0.0
    %1504 = vmatpush.xpose.msra.mxu0 0.0
    %1505 = vmatpush.xpose.msra.mxu0 0.0
    %1506 = vmatpush.xpose.msra.mxu0 0.0
    %1507 = vmatpush.xpose.msra.mxu0 0.0
    %1508 = vmatpush.xpose.msra.mxu0 0.0
    %1509 = vmatpush.xpose.msra.mxu0 0.0
    %1510 = vmatpush.xpose.msra.mxu0 0.0
    %1511 = vmatpush.xpose.msra.mxu0 0.0
    %1512 = vmatpush.xpose.msra.mxu0 0.0
    %1513 = vmatpush.xpose.msra.mxu0 %v1496
    %1514 = vmatmul.f32.gmra.mxu0 %v1494
    %v1515 = vpop.f32.mrf.mxu0
    %v1516 = vadd.f32 %v1411, %v1515
    %1517 = vdwg.mxu0
    %v1518 = vsel %vm133, %v1516, -inf
    %1519 = vmax.xlane.f32.xlu0 %v1518
    %v1520 = vpop.xlane.xlu0 %1519
    %v1521 = vsub.f32 %v1516, %v1520
    %v1522 = vmul.f32 %v1521, 1.442695
    %v1523 = vpow.pop %v1522
    %v1524 = vsel %vm133, %v1523, 0.0
    %1525 = vadd.xlane.f32.xlu0 %v1524
    %v1526 = vpop.xlane.xlu0 %1525
    %v1527 = vrcp.pop %v1526
    %v1528 = vmul.f32 %v1526, %v1527
    %v1529 = vsub.f32 1.0, %v1528
    %v1530 = vmul.f32 %v1527, %v1529
    %v1531 = vadd.f32 %v1527, %v1530
    %vm1532 = vweird.f32 %v1526
    %vm1533 = vweird.f32 %v1527
    %vm1534 = vmor %vm1532, %vm1533
    %v1535 = vsel %vm1534, %v1527, %v1531
    %v1536 = vand.u32 2147483647, %v1526
    %vm1537 = vcmp.eq.f32.partialorder %v1536, 8.507059e+37
    %v1538 = vand.u32 %v1526, 2147483648
    %v1539 = vor.u32 1.1754944e-38, %v1538
    %v1540 = vsel %vm1537, %v1539, %v1535
    %v1541 = vmul.f32 %v1523, %v1540
    %1542 = vrot.lane.b32.xlu0 %v1079, 56
    %v1543 = vpop.permute.xlu0 %1542
    %v1546 = vsel %vm133, %v1541, 0
    %1548 = vmatpush.msra.mxu0 0.0
    %1549 = vmatpush.msra.mxu0 0.0
    %1550 = vmatpush.msra.mxu0 0.0
    %1551 = vmatpush.msra.mxu0 0.0
    %1552 = vmatpush.msra.mxu0 0.0
    %1553 = vmatpush.msra.mxu0 0.0
    %1554 = vmatpush.msra.mxu0 0.0
    %1555 = vmatpush.msra.mxu0 0.0
    %1556 = vmatpush.msra.mxu0 0.0
    %1557 = vmatpush.msra.mxu0 0.0
    %1558 = vmatpush.msra.mxu0 0.0
    %1559 = vmatpush.msra.mxu0 0.0
    %1560 = vmatpush.msra.mxu0 0.0
    %1561 = vmatpush.msra.mxu0 0.0
    %1562 = vmatpush.msra.mxu0 0.0
    %1563 = vmatpush.msra.mxu0 %v1543
    %1564 = vmatmul.f32.gmra.mxu0 %v1546
    %v1565 = vpop.f32.mrf.mxu0
    %v1566 = vadd.f32 0.0, %v1565
    %1567 = vdwg.mxu0
    %1569 = vrot.lane.b32.xlu0 %v1566, 8
    %v1570 = vpop.permute.xlu0 %1569
    %1572 = vst.msk [vmem:[#allocation2 + $0x8] sm:$0xff] %vm291, %v1570
    %1573 = vrot.lane.b32.xlu0 %v1079, 112
    %v1574 = vpop.permute.xlu0 %1573
    %1575 = vrot.lane.b32.xlu0 %v1079, 80
    %v1576 = vpop.permute.xlu0 %1575
    %v1577 = vsel %vm133, %v1574, 0
    %v1579 = vsel %vm133, %v1576, 0
    %1581 = vmatpush.xpose.msra.mxu0 0.0
    %1582 = vmatpush.xpose.msra.mxu0 0.0
    %1583 = vmatpush.xpose.msra.mxu0 0.0
    %1584 = vmatpush.xpose.msra.mxu0 0.0
    %1585 = vmatpush.xpose.msra.mxu0 0.0
    %1586 = vmatpush.xpose.msra.mxu0 0.0
    %1587 = vmatpush.xpose.msra.mxu0 0.0
    %1588 = vmatpush.xpose.msra.mxu0 0.0
    %1589 = vmatpush.xpose.msra.mxu0 0.0
    %1590 = vmatpush.xpose.msra.mxu0 0.0
    %1591 = vmatpush.xpose.msra.mxu0 0.0
    %1592 = vmatpush.xpose.msra.mxu0 0.0
    %1593 = vmatpush.xpose.msra.mxu0 0.0
    %1594 = vmatpush.xpose.msra.mxu0 0.0
    %1595 = vmatpush.xpose.msra.mxu0 0.0
    %1596 = vmatpush.xpose.msra.mxu0 %v1579
    %1597 = vmatmul.f32.gmra.mxu0 %v1577
    %v1598 = vpop.f32.mrf.mxu0
    %v1599 = vadd.f32 %v1411, %v1598
    %1600 = vdwg.mxu0
    %v1601 = vsel %vm133, %v1599, -inf
    %1602 = vmax.xlane.f32.xlu0 %v1601
    %v1603 = vpop.xlane.xlu0 %1602
    %v1604 = vsub.f32 %v1599, %v1603
    %v1605 = vmul.f32 %v1604, 1.442695
    %v1606 = vpow.pop %v1605
    %v1607 = vsel %vm133, %v1606, 0.0
    %1608 = vadd.xlane.f32.xlu0 %v1607
    %v1609 = vpop.xlane.xlu0 %1608
    %v1610 = vrcp.pop %v1609
    %v1611 = vmul.f32 %v1609, %v1610
    %v1612 = vsub.f32 1.0, %v1611
    %v1613 = vmul.f32 %v1610, %v1612
    %v1614 = vadd.f32 %v1610, %v1613
    %vm1615 = vweird.f32 %v1609
    %vm1616 = vweird.f32 %v1610
    %vm1617 = vmor %vm1615, %vm1616
    %v1618 = vsel %vm1617, %v1610, %v1614
    %v1619 = vand.u32 2147483647, %v1609
    %vm1620 = vcmp.eq.f32.partialorder %v1619, 8.507059e+37
    %v1621 = vand.u32 %v1609, 2147483648
    %v1622 = vor.u32 1.1754944e-38, %v1621
    %v1623 = vsel %vm1620, %v1622, %v1618
    %v1624 = vmul.f32 %v1606, %v1623
    %1625 = vrot.lane.b32.xlu0 %v1079, 48
    %v1626 = vpop.permute.xlu0 %1625
    %v1629 = vsel %vm133, %v1624, 0
    %1631 = vmatpush.msra.mxu0 0.0
    %1632 = vmatpush.msra.mxu0 0.0
    %1633 = vmatpush.msra.mxu0 0.0
    %1634 = vmatpush.msra.mxu0 0.0
    %1635 = vmatpush.msra.mxu0 0.0
    %1636 = vmatpush.msra.mxu0 0.0
    %1637 = vmatpush.msra.mxu0 0.0
    %1638 = vmatpush.msra.mxu0 0.0
    %1639 = vmatpush.msra.mxu0 0.0
    %1640 = vmatpush.msra.mxu0 0.0
    %1641 = vmatpush.msra.mxu0 0.0
    %1642 = vmatpush.msra.mxu0 0.0
    %1643 = vmatpush.msra.mxu0 0.0
    %1644 = vmatpush.msra.mxu0 0.0
    %1645 = vmatpush.msra.mxu0 0.0
    %1646 = vmatpush.msra.mxu0 %v1626
    %1647 = vmatmul.f32.gmra.mxu0 %v1629
    %v1648 = vpop.f32.mrf.mxu0
    %v1649 = vadd.f32 0.0, %v1648
    %1650 = vdwg.mxu0
    %1652 = vrot.lane.b32.xlu0 %v1649, 16
    %v1653 = vpop.permute.xlu0 %1652
    %1655 = vst.msk [vmem:[#allocation2 + $0x8] sm:$0xff] %vm375, %v1653
    %1656 = vrot.lane.b32.xlu0 %v1079, 104
    %v1657 = vpop.permute.xlu0 %1656
    %1658 = vrot.lane.b32.xlu0 %v1079, 72
    %v1659 = vpop.permute.xlu0 %1658
    %v1660 = vsel %vm133, %v1657, 0
    %v1662 = vsel %vm133, %v1659, 0
    %1664 = vmatpush.xpose.msra.mxu0 0.0
    %1665 = vmatpush.xpose.msra.mxu0 0.0
    %1666 = vmatpush.xpose.msra.mxu0 0.0
    %1667 = vmatpush.xpose.msra.mxu0 0.0
    %1668 = vmatpush.xpose.msra.mxu0 0.0
    %1669 = vmatpush.xpose.msra.mxu0 0.0
    %1670 = vmatpush.xpose.msra.mxu0 0.0
    %1671 = vmatpush.xpose.msra.mxu0 0.0
    %1672 = vmatpush.xpose.msra.mxu0 0.0
    %1673 = vmatpush.xpose.msra.mxu0 0.0
    %1674 = vmatpush.xpose.msra.mxu0 0.0
    %1675 = vmatpush.xpose.msra.mxu0 0.0
    %1676 = vmatpush.xpose.msra.mxu0 0.0
    %1677 = vmatpush.xpose.msra.mxu0 0.0
    %1678 = vmatpush.xpose.msra.mxu0 0.0
    %1679 = vmatpush.xpose.msra.mxu0 %v1662
    %1680 = vmatmul.f32.gmra.mxu0 %v1660
    %v1681 = vpop.f32.mrf.mxu0
    %v1682 = vadd.f32 %v1411, %v1681
    %1683 = vdwg.mxu0
    %v1684 = vsel %vm133, %v1682, -inf
    %1685 = vmax.xlane.f32.xlu0 %v1684
    %v1686 = vpop.xlane.xlu0 %1685
    %v1687 = vsub.f32 %v1682, %v1686
    %v1688 = vmul.f32 %v1687, 1.442695
    %v1689 = vpow.pop %v1688
    %v1690 = vsel %vm133, %v1689, 0.0
    %1691 = vadd.xlane.f32.xlu0 %v1690
    %v1692 = vpop.xlane.xlu0 %1691
    %v1693 = vrcp.pop %v1692
    %v1694 = vmul.f32 %v1692, %v1693
    %v1695 = vsub.f32 1.0, %v1694
    %v1696 = vmul.f32 %v1693, %v1695
    %v1697 = vadd.f32 %v1693, %v1696
    %vm1698 = vweird.f32 %v1692
    %vm1699 = vweird.f32 %v1693
    %vm1700 = vmor %vm1698, %vm1699
    %v1701 = vsel %vm1700, %v1693, %v1697
    %v1702 = vand.u32 2147483647, %v1692
    %vm1703 = vcmp.eq.f32.partialorder %v1702, 8.507059e+37
    %v1704 = vand.u32 %v1692, 2147483648
    %v1705 = vor.u32 1.1754944e-38, %v1704
    %v1706 = vsel %vm1703, %v1705, %v1701
    %v1707 = vmul.f32 %v1689, %v1706
    %1708 = vrot.lane.b32.xlu0 %v1079, 40
    %v1709 = vpop.permute.xlu0 %1708
    %v1712 = vsel %vm133, %v1707, 0
    %1714 = vmatpush.msra.mxu0 0.0
    %1715 = vmatpush.msra.mxu0 0.0
    %1716 = vmatpush.msra.mxu0 0.0
    %1717 = vmatpush.msra.mxu0 0.0
    %1718 = vmatpush.msra.mxu0 0.0
    %1719 = vmatpush.msra.mxu0 0.0
    %1720 = vmatpush.msra.mxu0 0.0
    %1721 = vmatpush.msra.mxu0 0.0
    %1722 = vmatpush.msra.mxu0 0.0
    %1723 = vmatpush.msra.mxu0 0.0
    %1724 = vmatpush.msra.mxu0 0.0
    %1725 = vmatpush.msra.mxu0 0.0
    %1726 = vmatpush.msra.mxu0 0.0
    %1727 = vmatpush.msra.mxu0 0.0
    %1728 = vmatpush.msra.mxu0 0.0
    %1729 = vmatpush.msra.mxu0 %v1709
    %1730 = vmatmul.f32.gmra.mxu0 %v1712
    %v1731 = vpop.f32.mrf.mxu0
    %v1732 = vadd.f32 0.0, %v1731
    %1733 = vdwg.mxu0
    %1735 = vrot.lane.b32.xlu0 %v1732, 24
    %v1736 = vpop.permute.xlu0 %1735
    %1738 = vst.msk [vmem:[#allocation2 + $0x8] sm:$0xff] %vm459, %v1736
    %v1739 = vld [vmem:[#allocation2] sm:$0xff]
    %v1740 = vld [vmem:[#allocation2 + $0x8] sm:$0xff]
    %v1741 = vpack.c.bf16 %v1740, %v1739
    %v1742 = vld [vmem:[%s1044 + $0x4] sm:$0xf]
    %v1743 = vld [vmem:[%s1044 + $0x10] sm:$0xf]
    %v1744 = vld [vmem:[%s1044 + $0x1c] sm:$0xf]
    %v1745 = vld [vmem:[%s1044 + $0x28] sm:$0xf]
    %v1746 = vld [vmem:[%s1049 + $0x1] sm:$0x1]
    %v1747 = vperm.slane %v1746, 0
    %v1752 = vunpack.c.l.b16 %v1742
    %v1753 = vunpack.c.l.b16 %v1743
    %v1754 = vunpack.c.l.b16 %v1744
    %v1755 = vunpack.c.l.b16 %v1745
    %v1756 = vpack.c.b16 %v1753, %v1752
    %v1757 = vpack.c.b16 %v1755, %v1754
    %v1761 = vsel %vm34, %v1741, 0
    %1763 = vmatpush.bf16.msra.mxu0 0
    %1764 = vmatpush.bf16.msra.mxu0 0
    %1765 = vmatpush.bf16.msra.mxu0 0
    %1766 = vmatpush.bf16.msra.mxu0 0
    %1767 = vmatpush.bf16.msra.mxu0 0
    %1768 = vmatpush.bf16.msra.mxu0 0
    %1769 = vmatpush.bf16.msra.mxu0 %v1757
    %1770 = vmatpush.bf16.msra.mxu0 %v1756
    %1771 = vmatmul.bf16.gmra.mxu0 %v1761
    %v1772 = vpop.f32.mrf.mxu0
    %v1773 = vadd.f32 %v1747, %v1772
    %v1774 = vpop.f32.mrf.mxu0
    %v1775 = vadd.f32 %v1747, %v1774
    %1776 = vdwg.mxu0
    %v1777 = vadd.f32 %v1773, %v1041
    %v1778 = vadd.f32 %v1775, %v1042
    %v1779 = vld [vmem:[%s1049 + $0x4] sm:$0x1]
    %v1780 = vld [vmem:[%s1049 + $0x5] sm:$0x1]
    %v1781 = vsel %vm34, %v1777, 0.0
    %1782 = vadd.xlane.f32.xlu0 %v1781
    %v1783 = vpop.xlane.xlu0 %1782
    %v1784 = vsel %vm34, %v1778, 0.0
    %1785 = vadd.xlane.f32.xlu0 %v1784
    %v1786 = vpop.xlane.xlu0 %1785
    %v1787 = vmul.f32 %v1783, %v47
    %v1788 = vmul.f32 %v1786, %v47
    %v1789 = vsub.f32 %v1777, %v1787
    %v1790 = vsub.f32 %v1778, %v1788
    %v1791 = vmul.f32 %v1789, %v1789
    %v1792 = vmul.f32 %v1790, %v1790
    %v1793 = vsel %vm34, %v1791, 0.0
    %1794 = vadd.xlane.f32.xlu0 %v1793
    %v1795 = vpop.xlane.xlu0 %1794
    %v1796 = vsel %vm34, %v1792, 0.0
    %1797 = vadd.xlane.f32.xlu0 %v1796
    %v1798 = vpop.xlane.xlu0 %1797
    %v1799 = vmul.f32 %v1795, %v47
    %v1800 = vmul.f32 %v1798, %v47
    %v1801 = vadd.f32 %v1799, 1e-12
    %v1802 = vadd.f32 %v1800, 1e-12
    %v1803 = vrsqrt.pop %v1801
    %v1804 = vmul.f32 %v1803, %v1801
    %v1805 = vmul.f32 %v1804, %v1803
    %v1806 = vmul.f32 0.5, %v1805
    %v1807 = vsub.f32 1.5, %v1806
    %v1808 = vmul.f32 %v1803, %v1807
    %vm1809 = vweird.f32 %v1801
    %vm1810 = vweird.f32 %v1803
    %vm1811 = vmor %vm1809, %vm1810
    %v1812 = vsel %vm1811, %v1803, %v1808
    %v1813 = vrsqrt.pop %v1802
    %v1814 = vmul.f32 %v1813, %v1802
    %v1815 = vmul.f32 %v1814, %v1813
    %v1816 = vmul.f32 0.5, %v1815
    %v1817 = vsub.f32 1.5, %v1816
    %v1818 = vmul.f32 %v1813, %v1817
    %vm1819 = vweird.f32 %v1802
    %vm1820 = vweird.f32 %v1813
    %vm1821 = vmor %vm1819, %vm1820
    %v1822 = vsel %vm1821, %v1813, %v1818
    %v1823 = vmul.f32 %v1789, %v1812
    %v1824 = vmul.f32 %v1790, %v1822
    %v1825 = vperm.slane %v1779, 0
    %v1826 = vmul.f32 %v1823, %v1825
    %v1827 = vmul.f32 %v1824, %v1825
    %v1828 = vperm.slane %v1780, 0
    %v1829 = vadd.f32 %v1826, %v1828
    %v1830 = vadd.f32 %v1827, %v1828
    %v1831 = vpack.c.bf16 %v1830, %v1829
    %v1832 = vld [vmem:[%s1044 + $0x8] sm:$0xf]
    %v1833 = vld [vmem:[%s1044 + $0x14] sm:$0xf]
    %v1834 = vld [vmem:[%s1044 + $0x20] sm:$0xf]
    %v1835 = vld [vmem:[%s1044 + $0x2c] sm:$0xf]
    %v1836 = vld [vmem:[%s1049 + $0x2] sm:$0x1]
    %v1837 = vperm.slane %v1836, 0
    %v1842 = vunpack.c.l.b16 %v1832
    %v1843 = vunpack.c.l.b16 %v1833
    %v1844 = vunpack.c.l.b16 %v1834
    %v1845 = vunpack.c.l.b16 %v1835
    %v1846 = vpack.c.b16 %v1843, %v1842
    %v1847 = vpack.c.b16 %v1845, %v1844
    %v1851 = vsel %vm34, %v1831, 0
    %1853 = vmatpush.bf16.msra.mxu0 0
    %1854 = vmatpush.bf16.msra.mxu0 0
    %1855 = vmatpush.bf16.msra.mxu0 0
    %1856 = vmatpush.bf16.msra.mxu0 0
    %1857 = vmatpush.bf16.msra.mxu0 0
    %1858 = vmatpush.bf16.msra.mxu0 0
    %1859 = vmatpush.bf16.msra.mxu0 %v1847
    %1860 = vmatpush.bf16.msra.mxu0 %v1846
    %1861 = vmatmul.bf16.gmra.mxu0 %v1851
    %v1862 = vpop.f32.mrf.mxu0
    %v1863 = vadd.f32 %v1837, %v1862
    %v1864 = vpop.f32.mrf.mxu0
    %v1865 = vadd.f32 %v1837, %v1864
    %1866 = vdwg.mxu0
    %v1867 = vmul.f32 %v1863, 0.5
    %v1868 = vmul.f32 %v1865, 0.5
    %v1869 = vmul.f32 %v1863, 0.044715
    %v1870 = vmul.f32 %v1865, 0.044715
    %v1871 = vmul.f32 %v1869, %v1863
    %v1872 = vmul.f32 %v1870, %v1865
    %v1873 = vmul.f32 %v1871, %v1863
    %v1874 = vmul.f32 %v1872, %v1865
    %v1875 = vadd.f32 %v1863, %v1873
    %v1876 = vadd.f32 %v1865, %v1874
    %v1877 = vmul.f32 %v1875, 0.7978846
    %v1878 = vmul.f32 %v1876, 0.7978846
    %v1879 = vtanh.pop %v1877
    %v1880 = vtanh.pop %v1878
    %v1881 = vadd.f32 %v1879, 1.0
    %v1882 = vadd.f32 %v1880, 1.0
    %v1883 = vmul.f32 %v1867, %v1881
    %v1884 = vmul.f32 %v1868, %v1882
    %v1885 = vpack.c.bf16 %v1884, %v1883
    %s1886 = scalar_lea.vmem %s3, 32
    %v1887 = vld [vmem:[%s1886] sm:$0xf]
    %v1888 = vld [vmem:[%s1886 + $0x4] sm:$0xf]
    %v1889 = vld [vmem:[%s1886 + $0x8] sm:$0xf]
    %v1890 = vld [vmem:[%s1886 + $0xc] sm:$0xf]
    %v1891 = vld [vmem:[%s1886 + $0x10] sm:$0xf]
    %v1892 = vld [vmem:[%s1886 + $0x14] sm:$0xf]
    %v1893 = vld [vmem:[%s1886 + $0x18] sm:$0xf]
    %v1894 = vld [vmem:[%s1886 + $0x1c] sm:$0xf]
    %v1895 = vld [vmem:[%s1049 + $0x3] sm:$0x1]
    %v1896 = vperm.slane %v1895, 0
    %v1905 = vunpack.c.l.b16 %v1887
    %v1906 = vunpack.c.l.b16 %v1888
    %v1907 = vunpack.c.l.b16 %v1889
    %v1908 = vunpack.c.l.b16 %v1890
    %v1909 = vunpack.c.l.b16 %v1891
    %v1910 = vunpack.c.l.b16 %v1892
    %v1911 = vunpack.c.l.b16 %v1893
    %v1912 = vunpack.c.l.b16 %v1894
    %v1913 = vpack.c.b16 %v1906, %v1905
    %v1914 = vpack.c.b16 %v1908, %v1907
    %v1915 = vpack.c.b16 %v1910, %v1909
    %v1916 = vpack.c.b16 %v1912, %v1911
    %v1922 = vsel %vm971, %v1885, 0
    %1924 = vmatpush.bf16.msra.mxu0 0
    %1925 = vmatpush.bf16.msra.mxu0 0
    %1926 = vmatpush.bf16.msra.mxu0 0
    %1927 = vmatpush.bf16.msra.mxu0 0
    %1928 = vmatpush.bf16.msra.mxu0 %v1916
    %1929 = vmatpush.bf16.msra.mxu0 %v1915
    %1930 = vmatpush.bf16.msra.mxu0 %v1914
    %1931 = vmatpush.bf16.msra.mxu0 %v1913
    %1932 = vmatmul.bf16.gmra.mxu0 %v1922
    %v1933 = vpop.f32.mrf.mxu0
    %v1934 = vadd.f32 %v1896, %v1933
    %v1935 = vpop.f32.mrf.mxu0
    %v1936 = vadd.f32 %v1896, %v1935
    %1937 = vdwg.mxu0
    %v1938 = vadd.f32 %v1934, %v1829
    %v1939 = vadd.f32 %v1936, %v1830
    %v1940 = vld [vmem:[%s1049 + $0x6] sm:$0x1]
    %v1941 = vld [vmem:[%s1049 + $0x7] sm:$0x1]
    %v1942 = vsel %vm34, %v1938, 0.0
    %1943 = vadd.xlane.f32.xlu0 %v1942
    %v1944 = vpop.xlane.xlu0 %1943
    %v1945 = vsel %vm34, %v1939, 0.0
    %1946 = vadd.xlane.f32.xlu0 %v1945
    %v1947 = vpop.xlane.xlu0 %1946
    %v1948 = vmul.f32 %v1944, %v47
    %v1949 = vmul.f32 %v1947, %v47
    %v1950 = vsub.f32 %v1938, %v1948
    %v1951 = vsub.f32 %v1939, %v1949
    %v1952 = vmul.f32 %v1950, %v1950
    %v1953 = vmul.f32 %v1951, %v1951
    %v1954 = vsel %vm34, %v1952, 0.0
    %1955 = vadd.xlane.f32.xlu0 %v1954
    %v1956 = vpop.xlane.xlu0 %1955
    %v1957 = vsel %vm34, %v1953, 0.0
    %1958 = vadd.xlane.f32.xlu0 %v1957
    %v1959 = vpop.xlane.xlu0 %1958
    %v1960 = vmul.f32 %v1956, %v47
    %v1961 = vmul.f32 %v1959, %v47
    %v1962 = vadd.f32 %v1960, 1e-12
    %v1963 = vadd.f32 %v1961, 1e-12
    %v1964 = vrsqrt.pop %v1962
    %v1965 = vmul.f32 %v1964, %v1962
    %v1966 = vmul.f32 %v1965, %v1964
    %v1967 = vmul.f32 0.5, %v1966
    %v1968 = vsub.f32 1.5, %v1967
    %v1969 = vmul.f32 %v1964, %v1968
    %vm1970 = vweird.f32 %v1962
    %vm1971 = vweird.f32 %v1964
    %vm1972 = vmor %vm1970, %vm1971
    %v1973 = vsel %vm1972, %v1964, %v1969
    %v1974 = vrsqrt.pop %v1963
    %v1975 = vmul.f32 %v1974, %v1963
    %v1976 = vmul.f32 %v1975, %v1974
    %v1977 = vmul.f32 0.5, %v1976
    %v1978 = vsub.f32 1.5, %v1977
    %v1979 = vmul.f32 %v1974, %v1978
    %vm1980 = vweird.f32 %v1963
    %vm1981 = vweird.f32 %v1974
    %vm1982 = vmor %vm1980, %vm1981
    %v1983 = vsel %vm1982, %v1974, %v1979
    %v1984 = vmul.f32 %v1950, %v1973
    %v1985 = vmul.f32 %v1951, %v1983
    %v1986 = vperm.slane %v1940, 0
    %v1987 = vmul.f32 %v1984, %v1986
    %v1988 = vmul.f32 %v1985, %v1986
    %v1989 = vperm.slane %v1941, 0
    %v1990 = vadd.f32 %v1987, %v1989
    %v1991 = vadd.f32 %v1988, %v1989
    %v1992 = vpack.c.bf16 %v1991, %v1990
    %v1993 = vld [vmem:[%s5] sm:$0xf]
    %v1994 = vld [vmem:[%s5 + $0xc] sm:$0xf]
    %v1995 = vld [vmem:[%s5 + $0x18] sm:$0xf]
    %v1996 = vld [vmem:[%s5 + $0x24] sm:$0xf]
    %v1997 = vld [vmem:[%s6] sm:$0x1]
    %v1998 = vperm.slane %v1997, 0
    %v2003 = vunpack.c.l.b16 %v1993
    %v2004 = vunpack.c.l.b16 %v1994
    %v2005 = vunpack.c.l.b16 %v1995
    %v2006 = vunpack.c.l.b16 %v1996
    %v2007 = vpack.c.b16 %v2004, %v2003
    %v2008 = vpack.c.b16 %v2006, %v2005
    %v2012 = vsel %vm34, %v1992, 0
    %2014 = vmatpush.bf16.msra.mxu0 0
    %2015 = vmatpush.bf16.msra.mxu0 0
    %2016 = vmatpush.bf16.msra.mxu0 0
    %2017 = vmatpush.bf16.msra.mxu0 0
    %2018 = vmatpush.bf16.msra.mxu0 0
    %2019 = vmatpush.bf16.msra.mxu0 0
    %2020 = vmatpush.bf16.msra.mxu0 %v2008
    %2021 = vmatpush.bf16.msra.mxu0 %v2007
    %2022 = vmatmul.bf16.gmra.mxu0 %v2012
    %v2023 = vpop.f32.mrf.mxu0
    %v2024 = vadd.f32 %v1998, %v2023
    %v2025 = vpop.f32.mrf.mxu0
    %v2026 = vadd.f32 %v1998, %v2025
    %2027 = vdwg.mxu0
    %2028 = vst [vmem:[#allocation3] sm:$0xff] %v2024
    %2029 = vst [vmem:[#allocation3 + $0x8] sm:$0xff] %v2026
    %v2031 = vrot.slane %v1991, 7
    %vm2033 = vcmask 1040384
    %v2034 = vsel %vm2033, %v1990, %v2031
    %v2035 = vpack.c.bf16 %v2034, %v2034
    %v2036 = vld [vmem:[%s5 + $0x4] sm:$0xf]
    %v2037 = vld [vmem:[%s5 + $0x10] sm:$0xf]
    %v2038 = vld [vmem:[%s5 + $0x1c] sm:$0xf]
    %v2039 = vld [vmem:[%s5 + $0x28] sm:$0xf]
    %v2040 = vld [vmem:[%s6 + $0x3] sm:$0x1]
    %v2041 = vperm.slane %v2040, 0
    %v2046 = vunpack.c.l.b16 %v2036
    %v2047 = vunpack.c.l.b16 %v2037
    %v2048 = vunpack.c.l.b16 %v2038
    %v2049 = vunpack.c.l.b16 %v2039
    %v2050 = vpack.c.b16 %v2047, %v2046
    %v2051 = vpack.c.b16 %v2049, %v2048
    %v2055 = vsel %vm34, %v2035, 0
    %2057 = vmatpush.bf16.msra.mxu0 0
    %2058 = vmatpush.bf16.msra.mxu0 0
    %2059 = vmatpush.bf16.msra.mxu0 0
    %2060 = vmatpush.bf16.msra.mxu0 0
    %2061 = vmatpush.bf16.msra.mxu0 0
    %2062 = vmatpush.bf16.msra.mxu0 0
    %2063 = vmatpush.bf16.msra.mxu0 %v2051
    %2064 = vmatpush.bf16.msra.mxu0 %v2050
    %2065 = vmatmul.bf16.gmra.mxu0 %v2055
    %v2066 = vpop.f32.mrf.mxu0
    %v2067 = vadd.f32 %v2041, %v2066
    %v2068 = vpop.f32.mrf.mxu0
    %2069 = vdwg.mxu0
    %v2070 = vtanh.pop %v2067
    %v2071 = vpack.c.bf16 %v2070, %v2070
    %v2072 = vld [vmem:[%s5 + $0x8] sm:$0xf]
    %v2073 = vld [vmem:[%s5 + $0x14] sm:$0xf]
    %v2074 = vld [vmem:[%s5 + $0x20] sm:$0xf]
    %v2075 = vld [vmem:[%s5 + $0x2c] sm:$0xf]
    %v2076 = vld [vmem:[%s6 + $0x4] sm:$0x1]
    %v2077 = vperm.slane %v2076, 0
    %v2082 = vunpack.c.l.b16 %v2072
    %v2083 = vunpack.c.l.b16 %v2073
    %v2084 = vunpack.c.l.b16 %v2074
    %v2085 = vunpack.c.l.b16 %v2075
    %v2086 = vpack.c.b16 %v2083, %v2082
    %v2087 = vpack.c.b16 %v2085, %v2084
    %v2091 = vsel %vm34, %v2071, 0
    %2093 = vmatpush.bf16.msra.mxu0 0
    %2094 = vmatpush.bf16.msra.mxu0 0
    %2095 = vmatpush.bf16.msra.mxu0 0
    %2096 = vmatpush.bf16.msra.mxu0 0
    %2097 = vmatpush.bf16.msra.mxu0 0
    %2098 = vmatpush.bf16.msra.mxu0 0
    %2099 = vmatpush.bf16.msra.mxu0 %v2087
    %2100 = vmatpush.bf16.msra.mxu0 %v2086
    %2101 = vmatmul.bf16.gmra.mxu0 %v2091
    %v2102 = vpop.f32.mrf.mxu0
    %v2103 = vadd.f32 %v2077, %v2102
    %v2104 = vpop.f32.mrf.mxu0
    %2105 = vdwg.mxu0
    %2106 = vst [vmem:[%s8] sm:$0x3] %v2103
    // Predicated region
    $region30: #{dyslexia_text_adapter_forward.1} parent=1 // pred_check
      _
    $region31: #{dyslexia_text_adapter_forward.1} parent=1 // pred_check_branch
      %2108 = sbr.rel (0) target = $region33
    $region32: #{dyslexia_text_adapter_forward.1} parent=1 // pred_region
      %2110 = vsyncadd [#allocation4], 0
      %s2111 = sshll.u32 [#allocation3], 4
      %s2112 = int_to_ptr.vmem [resolvable:$true] %s2111
      %s2113 = sshll.u32 %s7, 4
      %s2114 = int_to_ptr.hbm [resolvable:$true] %s2113
      %2119 = dma.vmem_to_hbm [thread:$0]  %s2112, 256, %s2114, [#allocation4], 128, 128, 8
    $region33: #{dyslexia_text_adapter_forward.1} parent=1 // pred_fallthru
      _
    // Predicated region
    $region34: #{dyslexia_text_adapter_forward.1} parent=1 // pred_check
      _
    $region35: #{dyslexia_text_adapter_forward.1} parent=1 // pred_check_branch
      %2121 = sbr.rel (0) target = $region37
    $region36: #{dyslexia_text_adapter_forward.1} parent=1 // pred_region
      _
    $region37: #{dyslexia_text_adapter_forward.1} parent=1 // pred_fallthru
      _
    // Predicated region
    $region38: #{dyslexia_text_adapter_forward.1} parent=1 // pred_check
      _
    $region39: #{dyslexia_text_adapter_forward.1} parent=1 // pred_check_branch
      %2123 = sbr.rel (0) target = $region41
    $region40: #{dyslexia_text_adapter_forward.1} parent=1 // pred_region
      %2125 = dma.done [#allocation4], 256
    $region41: #{dyslexia_text_adapter_forward.1} parent=1 // pred_fallthru
      _
    // Predicated region
    $region42: #{dyslexia_text_adapter_forward.1} parent=1 // pred_check
      _
    $region43: #{dyslexia_text_adapter_forward.1} parent=1 // pred_check_branch
      %2127 = sbr.rel (0) target = $region45
    $region44: #{dyslexia_text_adapter_forward.1} parent=1 // pred_region
      _
    $region45: #{dyslexia_text_adapter_forward.1} parent=1 // pred_fallthru
      _
    %2128 = vsyncpa [#allocation4], 1

</llo_original>
